<compile_context>
chip_gen: v7x
topology: tpu7x:2x2x1
jax: 0.10.0
libtpu: 0.0.40
codegen_flags: <defaults>
</compile_context>

<pallas_src>
import jax
import jax.numpy as jnp
from jax.experimental import pallas as pl
from jax.experimental.pallas import tpu as pltpu

INPUT_SIZE = 3
HIDDEN = 64
FC1_DIM = 32
NUM_LAYERS = 3


def _rnn_kernel(xproj_ref, rnn_ref, fc_ref, out_ref):
    # xproj_ref: (T, B, H) time-major layer-0 input projection (layer-0 bias folded in).
    # rnn_ref:   (5*H + 8, H) rows = [Whh0 | Wih1 | Whh1 | Wih2 | Whh2 | bias block(8)]
    #            bias block: row 0 = b1 (= b_ih1+b_hh1), row 1 = b2, rest zero.
    # fc_ref:    (H + 8, FC1) rows = [Wfc1 (H rows) | tail block(8)]
    #            tail: row 0 = bfc1, row 1 = wfc2[:, 0], row 2 = [bfc2, 0, ...].
    T, B, H = xproj_ref.shape

    # Hoisted bias broadcasts (done once; JAX does not CSE broadcast_in_dim).
    bias_blk = rnn_ref[5 * H:5 * H + 8, :]                 # single aligned (8, H) load
    b1 = jnp.broadcast_to(bias_blk[0:1, :], (B, H))
    b2 = jnp.broadcast_to(bias_blk[1:2, :], (B, H))

    # Hidden states carried as SSA values in vregs (zero init, like nn.RNN).
    h0 = jnp.zeros((B, H), jnp.float32)
    h1 = jnp.zeros((B, H), jnp.float32)
    h2 = jnp.zeros((B, H), jnp.float32)

    def mm(a, w):
        return jnp.dot(a, w, preferred_element_type=jnp.float32)

    # T is tiny & static -> full static unroll; SSA deps let the LLO scheduler overlap
    # h0[t+1] with h1[t]/h2[t].  Weight slabs are re-read from VMEM each step (idle vld
    # slots) rather than kept live for the whole unroll.
    for t in range(T):
        x_t = xproj_ref[t]                                  # (B, H), includes b0
        h0 = jnp.tanh(x_t + mm(h0, rnn_ref[0 * H:1 * H, :]))
        h1 = jnp.tanh(mm(h0, rnn_ref[1 * H:2 * H, :])
                      + mm(h1, rnn_ref[2 * H:3 * H, :]) + b1)
        h2 = jnp.tanh(mm(h1, rnn_ref[3 * H:4 * H, :])
                      + mm(h2, rnn_ref[4 * H:5 * H, :]) + b2)

    # FC head on the last top-layer hidden state: relu(fc1), then fc2 as a VPU multiply +
    # lane reduction (an MXU push with N=1 would waste a full push/drain in the epilogue).
    fc_tail = fc_ref[H:H + 8, :]                            # aligned (8, FC1) load
    z = jnp.maximum(mm(h2, fc_ref[0:H, :]) + fc_tail[0:1, :], 0.0)       # (B, FC1)
    y = jnp.sum(z * fc_tail[1:2, :], axis=-1, keepdims=True)            # (B, 1)
    bfc2 = jnp.sum(fc_tail[2:3, :], axis=-1, keepdims=True)             # (1, 1): lane 0 only
    out_ref[...] = y + bfc2


def make_params(key, input_size=INPUT_SIZE, hidden=HIDDEN, fc1=FC1_DIM):
    """Deterministic synthetic parameters (PyTorch-style uniform init)."""
    keys = jax.random.split(key, 20)
    k = iter(keys)
    s = 1.0 / jnp.sqrt(hidden)

    def u(kk, shape, scale):
        return jax.random.uniform(kk, shape, jnp.float32, -scale, scale)

    params = {}
    in_dims = [input_size, hidden, hidden]
    for l in range(NUM_LAYERS):
        # Stored already transposed to right-multiply form: (in_dim, H) / (H, H).
        params[f"wih{l}"] = u(next(k), (in_dims[l], hidden), s)
        params[f"whh{l}"] = u(next(k), (hidden, hidden), s)
        b_ih = u(next(k), (1, hidden), s)
        b_hh = u(next(k), (1, hidden), s)
        params[f"b{l}"] = b_ih + b_hh                     # pre-summed bias
    s1 = 1.0 / jnp.sqrt(hidden)
    params["wfc1"] = u(next(k), (hidden, fc1), s1)        # (64, 32)
    params["bfc1"] = u(next(k), (1, fc1), s1)
    s2 = 1.0 / jnp.sqrt(fc1)
    params["wfc2"] = u(next(k), (fc1, 1), s2)             # (32, 1)
    params["bfc2"] = u(next(k), (1, 1), s2)
    return params


def pack_params(params):
    """Pack the 13 parameter tensors into 4 arrays. Called ONCE, outside the jitted forward."""
    H, F = HIDDEN, FC1_DIM

    # Recurrent pack: 5 weight matrices (layer-0 Wih is not needed inside the kernel)
    # followed by an 8-row (sublane-aligned) bias block.
    w_rows = jnp.concatenate(
        [params["whh0"], params["wih1"], params["whh1"],
         params["wih2"], params["whh2"]], axis=0)                     # (5H, H)
    bias_blk = jnp.zeros((8, H), jnp.float32)
    bias_blk = bias_blk.at[0].set(params["b1"][0])
    bias_blk = bias_blk.at[1].set(params["b2"][0])
    rnn_pack = jnp.concatenate([w_rows, bias_blk], axis=0)            # (5H + 8, H)

    # FC-head pack: wfc1 rows, then an 8-row tail with bfc1 / wfc2 row / bfc2-at-lane-0.
    fc_tail = jnp.zeros((8, F), jnp.float32)
    fc_tail = fc_tail.at[0].set(params["bfc1"][0])
    fc_tail = fc_tail.at[1].set(params["wfc2"][:, 0])
    fc_tail = fc_tail.at[2, 0].set(params["bfc2"][0, 0])
    fc_pack = jnp.concatenate([params["wfc1"], fc_tail], axis=0)      # (H + 8, F)

    return params["wih0"], params["b0"], rnn_pack, fc_pack


@jax.jit
def rnn_forward(x, wih0, b0, rnn_pack, fc_pack):
    """x: (B, T, input_size) float32 (batch-first, like the PyTorch module)."""
    B, T, _ = x.shape
    # Layer-0 input projection hoisted out of the recurrence: one parallel matmul over all
    # T*B rows, fused with the batch->time transpose; layer-0 bias folded in here.
    xproj = jnp.einsum("bti,ih->tbh", x, wih0) + b0        # (T, B, H)

    vmem = pl.BlockSpec(memory_space=pltpu.MemorySpace.VMEM)
    out = pl.pallas_call(
        _rnn_kernel,
        out_shape=jax.ShapeDtypeStruct((B, 1), jnp.float32),
        in_specs=[vmem, vmem, vmem],
        out_specs=vmem,
    )(xproj, rnn_pack, fc_pack)
    return out[:, 0]                                       # squeeze(1) -> (B,)


def _reference(x, params):
    """Pure-JAX reference of the PyTorch forward pass."""
    B, T, _ = x.shape
    layer_in = x
    for l in range(NUM_LAYERS):
        wih, whh, b = params[f"wih{l}"], params[f"whh{l}"], params[f"b{l}"]

        def step(h, x_t):
            h_new = jnp.tanh(x_t @ wih + h @ whh + b)
            return h_new, h_new

        h0 = jnp.zeros((B, HIDDEN), jnp.float32)
        _, outs = jax.lax.scan(step, h0, jnp.transpose(layer_in, (1, 0, 2)))
        layer_in = jnp.transpose(outs, (1, 0, 2))
    last = layer_in[:, -1, :]
    z = jnp.maximum(last @ params["wfc1"] + params["bfc1"], 0.0)
    y = z @ params["wfc2"] + params["bfc2"]
    return y[:, 0]


if __name__ == "__main__":
    key = jax.random.PRNGKey(0)
    k_x, k_p = jax.random.split(key)
    B, T = 4, 8
    x = jax.random.normal(k_x, (B, T, INPUT_SIZE), jnp.float32)
    params = make_params(k_p)

    packed = pack_params(params)          # packing done once, outside the jitted forward
    out = jax.block_until_ready(rnn_forward(x, *packed))

    ref = _reference(x, params)
    assert out.shape == (B,)
    assert jnp.allclose(out, ref, atol=1e-4, rtol=1e-4), (out, ref)
    print("KERNEL_OK")
</pallas_src>

<mosaic_0001>
module attributes {stable_mosaic.version = 11 : i64} {
  func.func @_rnn_kernel(%arg0: memref<8x4x64xf32, #tpu.memory_space<vmem>>, %arg1: memref<328x64xf32, #tpu.memory_space<vmem>>, %arg2: memref<72x32xf32, #tpu.memory_space<vmem>>, %arg3: memref<4x1xf32, #tpu.memory_space<vmem>>) attributes {dimension_semantics = [], scalar_prefetch = 0 : i64, scratch_operands = 0 : i64, tpu.core_type = #tpu.core_type<tc>} {
    %c320 = arith.constant 320 : index
    %c0 = arith.constant 0 : index
    %0 = vector.load %arg1[%c320, %c0] : memref<328x64xf32, #tpu.memory_space<vmem>>, vector<8x64xf32>
    %1 = vector.extract_strided_slice %0 {offsets = [0, 0], sizes = [1, 64], strides = [1, 1]} : vector<8x64xf32> to vector<1x64xf32>
    %2 = vector.shape_cast %1 : vector<1x64xf32> to vector<1x64xf32>
    %3 = vector.broadcast %2 : vector<1x64xf32> to vector<4x64xf32>
    %4 = vector.extract_strided_slice %0 {offsets = [1, 0], sizes = [1, 64], strides = [1, 1]} : vector<8x64xf32> to vector<1x64xf32>
    %5 = vector.shape_cast %4 : vector<1x64xf32> to vector<1x64xf32>
    %6 = vector.broadcast %5 : vector<1x64xf32> to vector<4x64xf32>
    %cst = arith.constant 0.000000e+00 : f32
    %7 = vector.broadcast %cst : f32 to vector<4x64xf32>
    %cst_0 = arith.constant 0.000000e+00 : f32
    %8 = vector.broadcast %cst_0 : f32 to vector<4x64xf32>
    %cst_1 = arith.constant 0.000000e+00 : f32
    %9 = vector.broadcast %cst_1 : f32 to vector<4x64xf32>
    %c0_2 = arith.constant 0 : index
    %c0_3 = arith.constant 0 : index
    %c0_4 = arith.constant 0 : index
    %10 = vector.load %arg0[%c0_2, %c0_3, %c0_4] : memref<8x4x64xf32, #tpu.memory_space<vmem>>, vector<1x4x64xf32>
    %11 = vector.shape_cast %10 : vector<1x4x64xf32> to vector<4x64xf32>
    %c0_5 = arith.constant 0 : index
    %c0_6 = arith.constant 0 : index
    %12 = vector.load %arg1[%c0_5, %c0_6] : memref<328x64xf32, #tpu.memory_space<vmem>>, vector<64x64xf32>
    %cst_7 = arith.constant dense<0.000000e+00> : vector<4x64xf32>
    %13 = tpu.matmul %7, %12, %cst_7 {dimension_numbers = #tpu.dot_dimension_numbers<[1], [0], [0], [1], [0, 0, 1, 1], [], []>} : vector<4x64xf32>, vector<64x64xf32>, vector<4x64xf32> -> vector<4x64xf32>
    %14 = arith.addf %11, %13 : vector<4x64xf32>
    %15 = math.tanh %14 : vector<4x64xf32>
    %c64 = arith.constant 64 : index
    %c0_8 = arith.constant 0 : index
    %16 = vector.load %arg1[%c64, %c0_8] : memref<328x64xf32, #tpu.memory_space<vmem>>, vector<64x64xf32>
    %cst_9 = arith.constant dense<0.000000e+00> : vector<4x64xf32>
    %17 = tpu.matmul %15, %16, %cst_9 {dimension_numbers = #tpu.dot_dimension_numbers<[1], [0], [0], [1], [0, 0, 1, 1], [], []>} : vector<4x64xf32>, vector<64x64xf32>, vector<4x64xf32> -> vector<4x64xf32>
    %c128 = arith.constant 128 : index
    %c0_10 = arith.constant 0 : index
    %18 = vector.load %arg1[%c128, %c0_10] : memref<328x64xf32, #tpu.memory_space<vmem>>, vector<64x64xf32>
    %cst_11 = arith.constant dense<0.000000e+00> : vector<4x64xf32>
    %19 = tpu.matmul %8, %18, %cst_11 {dimension_numbers = #tpu.dot_dimension_numbers<[1], [0], [0], [1], [0, 0, 1, 1], [], []>} : vector<4x64xf32>, vector<64x64xf32>, vector<4x64xf32> -> vector<4x64xf32>
    %20 = arith.addf %17, %19 : vector<4x64xf32>
    %21 = arith.addf %20, %3 : vector<4x64xf32>
    %22 = math.tanh %21 : vector<4x64xf32>
    %c192 = arith.constant 192 : index
    %c0_12 = arith.constant 0 : index
    %23 = vector.load %arg1[%c192, %c0_12] : memref<328x64xf32, #tpu.memory_space<vmem>>, vector<64x64xf32>
    %cst_13 = arith.constant dense<0.000000e+00> : vector<4x64xf32>
    %24 = tpu.matmul %22, %23, %cst_13 {dimension_numbers = #tpu.dot_dimension_numbers<[1], [0], [0], [1], [0, 0, 1, 1], [], []>} : vector<4x64xf32>, vector<64x64xf32>, vector<4x64xf32> -> vector<4x64xf32>
    %c256 = arith.constant 256 : index
    %c0_14 = arith.constant 0 : index
    %25 = vector.load %arg1[%c256, %c0_14] : memref<328x64xf32, #tpu.memory_space<vmem>>, vector<64x64xf32>
    %cst_15 = arith.constant dense<0.000000e+00> : vector<4x64xf32>
    %26 = tpu.matmul %9, %25, %cst_15 {dimension_numbers = #tpu.dot_dimension_numbers<[1], [0], [0], [1], [0, 0, 1, 1], [], []>} : vector<4x64xf32>, vector<64x64xf32>, vector<4x64xf32> -> vector<4x64xf32>
    %27 = arith.addf %24, %26 : vector<4x64xf32>
    %28 = arith.addf %27, %6 : vector<4x64xf32>
    %29 = math.tanh %28 : vector<4x64xf32>
    %c1 = arith.constant 1 : index
    %c0_16 = arith.constant 0 : index
    %c0_17 = arith.constant 0 : index
    %30 = vector.load %arg0[%c1, %c0_16, %c0_17] : memref<8x4x64xf32, #tpu.memory_space<vmem>>, vector<1x4x64xf32>
    %31 = vector.shape_cast %30 : vector<1x4x64xf32> to vector<4x64xf32>
    %c0_18 = arith.constant 0 : index
    %c0_19 = arith.constant 0 : index
    %32 = vector.load %arg1[%c0_18, %c0_19] : memref<328x64xf32, #tpu.memory_space<vmem>>, vector<64x64xf32>
    %cst_20 = arith.constant dense<0.000000e+00> : vector<4x64xf32>
    %33 = tpu.matmul %15, %32, %cst_20 {dimension_numbers = #tpu.dot_dimension_numbers<[1], [0], [0], [1], [0, 0, 1, 1], [], []>} : vector<4x64xf32>, vector<64x64xf32>, vector<4x64xf32> -> vector<4x64xf32>
    %34 = arith.addf %31, %33 : vector<4x64xf32>
    %35 = math.tanh %34 : vector<4x64xf32>
    %c64_21 = arith.constant 64 : index
    %c0_22 = arith.constant 0 : index
    %36 = vector.load %arg1[%c64_21, %c0_22] : memref<328x64xf32, #tpu.memory_space<vmem>>, vector<64x64xf32>
    %cst_23 = arith.constant dense<0.000000e+00> : vector<4x64xf32>
    %37 = tpu.matmul %35, %36, %cst_23 {dimension_numbers = #tpu.dot_dimension_numbers<[1], [0], [0], [1], [0, 0, 1, 1], [], []>} : vector<4x64xf32>, vector<64x64xf32>, vector<4x64xf32> -> vector<4x64xf32>
    %c128_24 = arith.constant 128 : index
    %c0_25 = arith.constant 0 : index
    %38 = vector.load %arg1[%c128_24, %c0_25] : memref<328x64xf32, #tpu.memory_space<vmem>>, vector<64x64xf32>
    %cst_26 = arith.constant dense<0.000000e+00> : vector<4x64xf32>
    %39 = tpu.matmul %22, %38, %cst_26 {dimension_numbers = #tpu.dot_dimension_numbers<[1], [0], [0], [1], [0, 0, 1, 1], [], []>} : vector<4x64xf32>, vector<64x64xf32>, vector<4x64xf32> -> vector<4x64xf32>
    %40 = arith.addf %37, %39 : vector<4x64xf32>
    %41 = arith.addf %40, %3 : vector<4x64xf32>
    %42 = math.tanh %41 : vector<4x64xf32>
    %c192_27 = arith.constant 192 : index
    %c0_28 = arith.constant 0 : index
    %43 = vector.load %arg1[%c192_27, %c0_28] : memref<328x64xf32, #tpu.memory_space<vmem>>, vector<64x64xf32>
    %cst_29 = arith.constant dense<0.000000e+00> : vector<4x64xf32>
    %44 = tpu.matmul %42, %43, %cst_29 {dimension_numbers = #tpu.dot_dimension_numbers<[1], [0], [0], [1], [0, 0, 1, 1], [], []>} : vector<4x64xf32>, vector<64x64xf32>, vector<4x64xf32> -> vector<4x64xf32>
    %c256_30 = arith.constant 256 : index
    %c0_31 = arith.constant 0 : index
    %45 = vector.load %arg1[%c256_30, %c0_31] : memref<328x64xf32, #tpu.memory_space<vmem>>, vector<64x64xf32>
    %cst_32 = arith.constant dense<0.000000e+00> : vector<4x64xf32>
    %46 = tpu.matmul %29, %45, %cst_32 {dimension_numbers = #tpu.dot_dimension_numbers<[1], [0], [0], [1], [0, 0, 1, 1], [], []>} : vector<4x64xf32>, vector<64x64xf32>, vector<4x64xf32> -> vector<4x64xf32>
    %47 = arith.addf %44, %46 : vector<4x64xf32>
    %48 = arith.addf %47, %6 : vector<4x64xf32>
    %49 = math.tanh %48 : vector<4x64xf32>
    %c2 = arith.constant 2 : index
    %c0_33 = arith.constant 0 : index
    %c0_34 = arith.constant 0 : index
    %50 = vector.load %arg0[%c2, %c0_33, %c0_34] : memref<8x4x64xf32, #tpu.memory_space<vmem>>, vector<1x4x64xf32>
    %51 = vector.shape_cast %50 : vector<1x4x64xf32> to vector<4x64xf32>
    %c0_35 = arith.constant 0 : index
    %c0_36 = arith.constant 0 : index
    %52 = vector.load %arg1[%c0_35, %c0_36] : memref<328x64xf32, #tpu.memory_space<vmem>>, vector<64x64xf32>
    %cst_37 = arith.constant dense<0.000000e+00> : vector<4x64xf32>
    %53 = tpu.matmul %35, %52, %cst_37 {dimension_numbers = #tpu.dot_dimension_numbers<[1], [0], [0], [1], [0, 0, 1, 1], [], []>} : vector<4x64xf32>, vector<64x64xf32>, vector<4x64xf32> -> vector<4x64xf32>
    %54 = arith.addf %51, %53 : vector<4x64xf32>
    %55 = math.tanh %54 : vector<4x64xf32>
    %c64_38 = arith.constant 64 : index
    %c0_39 = arith.constant 0 : index
    %56 = vector.load %arg1[%c64_38, %c0_39] : memref<328x64xf32, #tpu.memory_space<vmem>>, vector<64x64xf32>
    %cst_40 = arith.constant dense<0.000000e+00> : vector<4x64xf32>
    %57 = tpu.matmul %55, %56, %cst_40 {dimension_numbers = #tpu.dot_dimension_numbers<[1], [0], [0], [1], [0, 0, 1, 1], [], []>} : vector<4x64xf32>, vector<64x64xf32>, vector<4x64xf32> -> vector<4x64xf32>
    %c128_41 = arith.constant 128 : index
    %c0_42 = arith.constant 0 : index
    %58 = vector.load %arg1[%c128_41, %c0_42] : memref<328x64xf32, #tpu.memory_space<vmem>>, vector<64x64xf32>
    %cst_43 = arith.constant dense<0.000000e+00> : vector<4x64xf32>
    %59 = tpu.matmul %42, %58, %cst_43 {dimension_numbers = #tpu.dot_dimension_numbers<[1], [0], [0], [1], [0, 0, 1, 1], [], []>} : vector<4x64xf32>, vector<64x64xf32>, vector<4x64xf32> -> vector<4x64xf32>
    %60 = arith.addf %57, %59 : vector<4x64xf32>
    %61 = arith.addf %60, %3 : vector<4x64xf32>
    %62 = math.tanh %61 : vector<4x64xf32>
    %c192_44 = arith.constant 192 : index
    %c0_45 = arith.constant 0 : index
    %63 = vector.load %arg1[%c192_44, %c0_45] : memref<328x64xf32, #tpu.memory_space<vmem>>, vector<64x64xf32>
    %cst_46 = arith.constant dense<0.000000e+00> : vector<4x64xf32>
    %64 = tpu.matmul %62, %63, %cst_46 {dimension_numbers = #tpu.dot_dimension_numbers<[1], [0], [0], [1], [0, 0, 1, 1], [], []>} : vector<4x64xf32>, vector<64x64xf32>, vector<4x64xf32> -> vector<4x64xf32>
    %c256_47 = arith.constant 256 : index
    %c0_48 = arith.constant 0 : index
    %65 = vector.load %arg1[%c256_47, %c0_48] : memref<328x64xf32, #tpu.memory_space<vmem>>, vector<64x64xf32>
    %cst_49 = arith.constant dense<0.000000e+00> : vector<4x64xf32>
    %66 = tpu.matmul %49, %65, %cst_49 {dimension_numbers = #tpu.dot_dimension_numbers<[1], [0], [0], [1], [0, 0, 1, 1], [], []>} : vector<4x64xf32>, vector<64x64xf32>, vector<4x64xf32> -> vector<4x64xf32>
    %67 = arith.addf %64, %66 : vector<4x64xf32>
    %68 = arith.addf %67, %6 : vector<4x64xf32>
    %69 = math.tanh %68 : vector<4x64xf32>
    %c3 = arith.constant 3 : index
    %c0_50 = arith.constant 0 : index
    %c0_51 = arith.constant 0 : index
    %70 = vector.load %arg0[%c3, %c0_50, %c0_51] : memref<8x4x64xf32, #tpu.memory_space<vmem>>, vector<1x4x64xf32>
    %71 = vector.shape_cast %70 : vector<1x4x64xf32> to vector<4x64xf32>
    %c0_52 = arith.constant 0 : index
    %c0_53 = arith.constant 0 : index
    %72 = vector.load %arg1[%c0_52, %c0_53] : memref<328x64xf32, #tpu.memory_space<vmem>>, vector<64x64xf32>
    %cst_54 = arith.constant dense<0.000000e+00> : vector<4x64xf32>
    %73 = tpu.matmul %55, %72, %cst_54 {dimension_numbers = #tpu.dot_dimension_numbers<[1], [0], [0], [1], [0, 0, 1, 1], [], []>} : vector<4x64xf32>, vector<64x64xf32>, vector<4x64xf32> -> vector<4x64xf32>
    %74 = arith.addf %71, %73 : vector<4x64xf32>
    %75 = math.tanh %74 : vector<4x64xf32>
    %c64_55 = arith.constant 64 : index
    %c0_56 = arith.constant 0 : index
    %76 = vector.load %arg1[%c64_55, %c0_56] : memref<328x64xf32, #tpu.memory_space<vmem>>, vector<64x64xf32>
    %cst_57 = arith.constant dense<0.000000e+00> : vector<4x64xf32>
    %77 = tpu.matmul %75, %76, %cst_57 {dimension_numbers = #tpu.dot_dimension_numbers<[1], [0], [0], [1], [0, 0, 1, 1], [], []>} : vector<4x64xf32>, vector<64x64xf32>, vector<4x64xf32> -> vector<4x64xf32>
    %c128_58 = arith.constant 128 : index
    %c0_59 = arith.constant 0 : index
    %78 = vector.load %arg1[%c128_58, %c0_59] : memref<328x64xf32, #tpu.memory_space<vmem>>, vector<64x64xf32>
    %cst_60 = arith.constant dense<0.000000e+00> : vector<4x64xf32>
    %79 = tpu.matmul %62, %78, %cst_60 {dimension_numbers = #tpu.dot_dimension_numbers<[1], [0], [0], [1], [0, 0, 1, 1], [], []>} : vector<4x64xf32>, vector<64x64xf32>, vector<4x64xf32> -> vector<4x64xf32>
    %80 = arith.addf %77, %79 : vector<4x64xf32>
    %81 = arith.addf %80, %3 : vector<4x64xf32>
    %82 = math.tanh %81 : vector<4x64xf32>
    %c192_61 = arith.constant 192 : index
    %c0_62 = arith.constant 0 : index
    %83 = vector.load %arg1[%c192_61, %c0_62] : memref<328x64xf32, #tpu.memory_space<vmem>>, vector<64x64xf32>
    %cst_63 = arith.constant dense<0.000000e+00> : vector<4x64xf32>
    %84 = tpu.matmul %82, %83, %cst_63 {dimension_numbers = #tpu.dot_dimension_numbers<[1], [0], [0], [1], [0, 0, 1, 1], [], []>} : vector<4x64xf32>, vector<64x64xf32>, vector<4x64xf32> -> vector<4x64xf32>
    %c256_64 = arith.constant 256 : index
    %c0_65 = arith.constant 0 : index
    %85 = vector.load %arg1[%c256_64, %c0_65] : memref<328x64xf32, #tpu.memory_space<vmem>>, vector<64x64xf32>
    %cst_66 = arith.constant dense<0.000000e+00> : vector<4x64xf32>
    %86 = tpu.matmul %69, %85, %cst_66 {dimension_numbers = #tpu.dot_dimension_numbers<[1], [0], [0], [1], [0, 0, 1, 1], [], []>} : vector<4x64xf32>, vector<64x64xf32>, vector<4x64xf32> -> vector<4x64xf32>
    %87 = arith.addf %84, %86 : vector<4x64xf32>
    %88 = arith.addf %87, %6 : vector<4x64xf32>
    %89 = math.tanh %88 : vector<4x64xf32>
    %c4 = arith.constant 4 : index
    %c0_67 = arith.constant 0 : index
    %c0_68 = arith.constant 0 : index
    %90 = vector.load %arg0[%c4, %c0_67, %c0_68] : memref<8x4x64xf32, #tpu.memory_space<vmem>>, vector<1x4x64xf32>
    %91 = vector.shape_cast %90 : vector<1x4x64xf32> to vector<4x64xf32>
    %c0_69 = arith.constant 0 : index
    %c0_70 = arith.constant 0 : index
    %92 = vector.load %arg1[%c0_69, %c0_70] : memref<328x64xf32, #tpu.memory_space<vmem>>, vector<64x64xf32>
    %cst_71 = arith.constant dense<0.000000e+00> : vector<4x64xf32>
    %93 = tpu.matmul %75, %92, %cst_71 {dimension_numbers = #tpu.dot_dimension_numbers<[1], [0], [0], [1], [0, 0, 1, 1], [], []>} : vector<4x64xf32>, vector<64x64xf32>, vector<4x64xf32> -> vector<4x64xf32>
    %94 = arith.addf %91, %93 : vector<4x64xf32>
    %95 = math.tanh %94 : vector<4x64xf32>
    %c64_72 = arith.constant 64 : index
    %c0_73 = arith.constant 0 : index
    %96 = vector.load %arg1[%c64_72, %c0_73] : memref<328x64xf32, #tpu.memory_space<vmem>>, vector<64x64xf32>
    %cst_74 = arith.constant dense<0.000000e+00> : vector<4x64xf32>
    %97 = tpu.matmul %95, %96, %cst_74 {dimension_numbers = #tpu.dot_dimension_numbers<[1], [0], [0], [1], [0, 0, 1, 1], [], []>} : vector<4x64xf32>, vector<64x64xf32>, vector<4x64xf32> -> vector<4x64xf32>
    %c128_75 = arith.constant 128 : index
    %c0_76 = arith.constant 0 : index
    %98 = vector.load %arg1[%c128_75, %c0_76] : memref<328x64xf32, #tpu.memory_space<vmem>>, vector<64x64xf32>
    %cst_77 = arith.constant dense<0.000000e+00> : vector<4x64xf32>
    %99 = tpu.matmul %82, %98, %cst_77 {dimension_numbers = #tpu.dot_dimension_numbers<[1], [0], [0], [1], [0, 0, 1, 1], [], []>} : vector<4x64xf32>, vector<64x64xf32>, vector<4x64xf32> -> vector<4x64xf32>
    %100 = arith.addf %97, %99 : vector<4x64xf32>
    %101 = arith.addf %100, %3 : vector<4x64xf32>
    %102 = math.tanh %101 : vector<4x64xf32>
    %c192_78 = arith.constant 192 : index
    %c0_79 = arith.constant 0 : index
    %103 = vector.load %arg1[%c192_78, %c0_79] : memref<328x64xf32, #tpu.memory_space<vmem>>, vector<64x64xf32>
    %cst_80 = arith.constant dense<0.000000e+00> : vector<4x64xf32>
    %104 = tpu.matmul %102, %103, %cst_80 {dimension_numbers = #tpu.dot_dimension_numbers<[1], [0], [0], [1], [0, 0, 1, 1], [], []>} : vector<4x64xf32>, vector<64x64xf32>, vector<4x64xf32> -> vector<4x64xf32>
    %c256_81 = arith.constant 256 : index
    %c0_82 = arith.constant 0 : index
    %105 = vector.load %arg1[%c256_81, %c0_82] : memref<328x64xf32, #tpu.memory_space<vmem>>, vector<64x64xf32>
    %cst_83 = arith.constant dense<0.000000e+00> : vector<4x64xf32>
    %106 = tpu.matmul %89, %105, %cst_83 {dimension_numbers = #tpu.dot_dimension_numbers<[1], [0], [0], [1], [0, 0, 1, 1], [], []>} : vector<4x64xf32>, vector<64x64xf32>, vector<4x64xf32> -> vector<4x64xf32>
    %107 = arith.addf %104, %106 : vector<4x64xf32>
    %108 = arith.addf %107, %6 : vector<4x64xf32>
    %109 = math.tanh %108 : vector<4x64xf32>
    %c5 = arith.constant 5 : index
    %c0_84 = arith.constant 0 : index
    %c0_85 = arith.constant 0 : index
    %110 = vector.load %arg0[%c5, %c0_84, %c0_85] : memref<8x4x64xf32, #tpu.memory_space<vmem>>, vector<1x4x64xf32>
    %111 = vector.shape_cast %110 : vector<1x4x64xf32> to vector<4x64xf32>
    %c0_86 = arith.constant 0 : index
    %c0_87 = arith.constant 0 : index
    %112 = vector.load %arg1[%c0_86, %c0_87] : memref<328x64xf32, #tpu.memory_space<vmem>>, vector<64x64xf32>
    %cst_88 = arith.constant dense<0.000000e+00> : vector<4x64xf32>
    %113 = tpu.matmul %95, %112, %cst_88 {dimension_numbers = #tpu.dot_dimension_numbers<[1], [0], [0], [1], [0, 0, 1, 1], [], []>} : vector<4x64xf32>, vector<64x64xf32>, vector<4x64xf32> -> vector<4x64xf32>
    %114 = arith.addf %111, %113 : vector<4x64xf32>
    %115 = math.tanh %114 : vector<4x64xf32>
    %c64_89 = arith.constant 64 : index
    %c0_90 = arith.constant 0 : index
    %116 = vector.load %arg1[%c64_89, %c0_90] : memref<328x64xf32, #tpu.memory_space<vmem>>, vector<64x64xf32>
    %cst_91 = arith.constant dense<0.000000e+00> : vector<4x64xf32>
    %117 = tpu.matmul %115, %116, %cst_91 {dimension_numbers = #tpu.dot_dimension_numbers<[1], [0], [0], [1], [0, 0, 1, 1], [], []>} : vector<4x64xf32>, vector<64x64xf32>, vector<4x64xf32> -> vector<4x64xf32>
    %c128_92 = arith.constant 128 : index
    %c0_93 = arith.constant 0 : index
    %118 = vector.load %arg1[%c128_92, %c0_93] : memref<328x64xf32, #tpu.memory_space<vmem>>, vector<64x64xf32>
    %cst_94 = arith.constant dense<0.000000e+00> : vector<4x64xf32>
    %119 = tpu.matmul %102, %118, %cst_94 {dimension_numbers = #tpu.dot_dimension_numbers<[1], [0], [0], [1], [0, 0, 1, 1], [], []>} : vector<4x64xf32>, vector<64x64xf32>, vector<4x64xf32> -> vector<4x64xf32>
    %120 = arith.addf %117, %119 : vector<4x64xf32>
    %121 = arith.addf %120, %3 : vector<4x64xf32>
    %122 = math.tanh %121 : vector<4x64xf32>
    %c192_95 = arith.constant 192 : index
    %c0_96 = arith.constant 0 : index
    %123 = vector.load %arg1[%c192_95, %c0_96] : memref<328x64xf32, #tpu.memory_space<vmem>>, vector<64x64xf32>
    %cst_97 = arith.constant dense<0.000000e+00> : vector<4x64xf32>
    %124 = tpu.matmul %122, %123, %cst_97 {dimension_numbers = #tpu.dot_dimension_numbers<[1], [0], [0], [1], [0, 0, 1, 1], [], []>} : vector<4x64xf32>, vector<64x64xf32>, vector<4x64xf32> -> vector<4x64xf32>
    %c256_98 = arith.constant 256 : index
    %c0_99 = arith.constant 0 : index
    %125 = vector.load %arg1[%c256_98, %c0_99] : memref<328x64xf32, #tpu.memory_space<vmem>>, vector<64x64xf32>
    %cst_100 = arith.constant dense<0.000000e+00> : vector<4x64xf32>
    %126 = tpu.matmul %109, %125, %cst_100 {dimension_numbers = #tpu.dot_dimension_numbers<[1], [0], [0], [1], [0, 0, 1, 1], [], []>} : vector<4x64xf32>, vector<64x64xf32>, vector<4x64xf32> -> vector<4x64xf32>
    %127 = arith.addf %124, %126 : vector<4x64xf32>
    %128 = arith.addf %127, %6 : vector<4x64xf32>
    %129 = math.tanh %128 : vector<4x64xf32>
    %c6 = arith.constant 6 : index
    %c0_101 = arith.constant 0 : index
    %c0_102 = arith.constant 0 : index
    %130 = vector.load %arg0[%c6, %c0_101, %c0_102] : memref<8x4x64xf32, #tpu.memory_space<vmem>>, vector<1x4x64xf32>
    %131 = vector.shape_cast %130 : vector<1x4x64xf32> to vector<4x64xf32>
    %c0_103 = arith.constant 0 : index
    %c0_104 = arith.constant 0 : index
    %132 = vector.load %arg1[%c0_103, %c0_104] : memref<328x64xf32, #tpu.memory_space<vmem>>, vector<64x64xf32>
    %cst_105 = arith.constant dense<0.000000e+00> : vector<4x64xf32>
    %133 = tpu.matmul %115, %132, %cst_105 {dimension_numbers = #tpu.dot_dimension_numbers<[1], [0], [0], [1], [0, 0, 1, 1], [], []>} : vector<4x64xf32>, vector<64x64xf32>, vector<4x64xf32> -> vector<4x64xf32>
    %134 = arith.addf %131, %133 : vector<4x64xf32>
    %135 = math.tanh %134 : vector<4x64xf32>
    %c64_106 = arith.constant 64 : index
    %c0_107 = arith.constant 0 : index
    %136 = vector.load %arg1[%c64_106, %c0_107] : memref<328x64xf32, #tpu.memory_space<vmem>>, vector<64x64xf32>
    %cst_108 = arith.constant dense<0.000000e+00> : vector<4x64xf32>
    %137 = tpu.matmul %135, %136, %cst_108 {dimension_numbers = #tpu.dot_dimension_numbers<[1], [0], [0], [1], [0, 0, 1, 1], [], []>} : vector<4x64xf32>, vector<64x64xf32>, vector<4x64xf32> -> vector<4x64xf32>
    %c128_109 = arith.constant 128 : index
    %c0_110 = arith.constant 0 : index
    %138 = vector.load %arg1[%c128_109, %c0_110] : memref<328x64xf32, #tpu.memory_space<vmem>>, vector<64x64xf32>
    %cst_111 = arith.constant dense<0.000000e+00> : vector<4x64xf32>
    %139 = tpu.matmul %122, %138, %cst_111 {dimension_numbers = #tpu.dot_dimension_numbers<[1], [0], [0], [1], [0, 0, 1, 1], [], []>} : vector<4x64xf32>, vector<64x64xf32>, vector<4x64xf32> -> vector<4x64xf32>
    %140 = arith.addf %137, %139 : vector<4x64xf32>
    %141 = arith.addf %140, %3 : vector<4x64xf32>
    %142 = math.tanh %141 : vector<4x64xf32>
    %c192_112 = arith.constant 192 : index
    %c0_113 = arith.constant 0 : index
    %143 = vector.load %arg1[%c192_112, %c0_113] : memref<328x64xf32, #tpu.memory_space<vmem>>, vector<64x64xf32>
    %cst_114 = arith.constant dense<0.000000e+00> : vector<4x64xf32>
    %144 = tpu.matmul %142, %143, %cst_114 {dimension_numbers = #tpu.dot_dimension_numbers<[1], [0], [0], [1], [0, 0, 1, 1], [], []>} : vector<4x64xf32>, vector<64x64xf32>, vector<4x64xf32> -> vector<4x64xf32>
    %c256_115 = arith.constant 256 : index
    %c0_116 = arith.constant 0 : index
    %145 = vector.load %arg1[%c256_115, %c0_116] : memref<328x64xf32, #tpu.memory_space<vmem>>, vector<64x64xf32>
    %cst_117 = arith.constant dense<0.000000e+00> : vector<4x64xf32>
    %146 = tpu.matmul %129, %145, %cst_117 {dimension_numbers = #tpu.dot_dimension_numbers<[1], [0], [0], [1], [0, 0, 1, 1], [], []>} : vector<4x64xf32>, vector<64x64xf32>, vector<4x64xf32> -> vector<4x64xf32>
    %147 = arith.addf %144, %146 : vector<4x64xf32>
    %148 = arith.addf %147, %6 : vector<4x64xf32>
    %149 = math.tanh %148 : vector<4x64xf32>
    %c7 = arith.constant 7 : index
    %c0_118 = arith.constant 0 : index
    %c0_119 = arith.constant 0 : index
    %150 = vector.load %arg0[%c7, %c0_118, %c0_119] : memref<8x4x64xf32, #tpu.memory_space<vmem>>, vector<1x4x64xf32>
    %151 = vector.shape_cast %150 : vector<1x4x64xf32> to vector<4x64xf32>
    %c0_120 = arith.constant 0 : index
    %c0_121 = arith.constant 0 : index
    %152 = vector.load %arg1[%c0_120, %c0_121] : memref<328x64xf32, #tpu.memory_space<vmem>>, vector<64x64xf32>
    %cst_122 = arith.constant dense<0.000000e+00> : vector<4x64xf32>
    %153 = tpu.matmul %135, %152, %cst_122 {dimension_numbers = #tpu.dot_dimension_numbers<[1], [0], [0], [1], [0, 0, 1, 1], [], []>} : vector<4x64xf32>, vector<64x64xf32>, vector<4x64xf32> -> vector<4x64xf32>
    %154 = arith.addf %151, %153 : vector<4x64xf32>
    %155 = math.tanh %154 : vector<4x64xf32>
    %c64_123 = arith.constant 64 : index
    %c0_124 = arith.constant 0 : index
    %156 = vector.load %arg1[%c64_123, %c0_124] : memref<328x64xf32, #tpu.memory_space<vmem>>, vector<64x64xf32>
    %cst_125 = arith.constant dense<0.000000e+00> : vector<4x64xf32>
    %157 = tpu.matmul %155, %156, %cst_125 {dimension_numbers = #tpu.dot_dimension_numbers<[1], [0], [0], [1], [0, 0, 1, 1], [], []>} : vector<4x64xf32>, vector<64x64xf32>, vector<4x64xf32> -> vector<4x64xf32>
    %c128_126 = arith.constant 128 : index
    %c0_127 = arith.constant 0 : index
    %158 = vector.load %arg1[%c128_126, %c0_127] : memref<328x64xf32, #tpu.memory_space<vmem>>, vector<64x64xf32>
    %cst_128 = arith.constant dense<0.000000e+00> : vector<4x64xf32>
    %159 = tpu.matmul %142, %158, %cst_128 {dimension_numbers = #tpu.dot_dimension_numbers<[1], [0], [0], [1], [0, 0, 1, 1], [], []>} : vector<4x64xf32>, vector<64x64xf32>, vector<4x64xf32> -> vector<4x64xf32>
    %160 = arith.addf %157, %159 : vector<4x64xf32>
    %161 = arith.addf %160, %3 : vector<4x64xf32>
    %162 = math.tanh %161 : vector<4x64xf32>
    %c192_129 = arith.constant 192 : index
    %c0_130 = arith.constant 0 : index
    %163 = vector.load %arg1[%c192_129, %c0_130] : memref<328x64xf32, #tpu.memory_space<vmem>>, vector<64x64xf32>
    %cst_131 = arith.constant dense<0.000000e+00> : vector<4x64xf32>
    %164 = tpu.matmul %162, %163, %cst_131 {dimension_numbers = #tpu.dot_dimension_numbers<[1], [0], [0], [1], [0, 0, 1, 1], [], []>} : vector<4x64xf32>, vector<64x64xf32>, vector<4x64xf32> -> vector<4x64xf32>
    %c256_132 = arith.constant 256 : index
    %c0_133 = arith.constant 0 : index
    %165 = vector.load %arg1[%c256_132, %c0_133] : memref<328x64xf32, #tpu.memory_space<vmem>>, vector<64x64xf32>
    %cst_134 = arith.constant dense<0.000000e+00> : vector<4x64xf32>
    %166 = tpu.matmul %149, %165, %cst_134 {dimension_numbers = #tpu.dot_dimension_numbers<[1], [0], [0], [1], [0, 0, 1, 1], [], []>} : vector<4x64xf32>, vector<64x64xf32>, vector<4x64xf32> -> vector<4x64xf32>
    %167 = arith.addf %164, %166 : vector<4x64xf32>
    %168 = arith.addf %167, %6 : vector<4x64xf32>
    %169 = math.tanh %168 : vector<4x64xf32>
    %c64_135 = arith.constant 64 : index
    %c0_136 = arith.constant 0 : index
    %170 = vector.load %arg2[%c64_135, %c0_136] : memref<72x32xf32, #tpu.memory_space<vmem>>, vector<8x32xf32>
    %c0_137 = arith.constant 0 : index
    %c0_138 = arith.constant 0 : index
    %171 = vector.load %arg2[%c0_137, %c0_138] : memref<72x32xf32, #tpu.memory_space<vmem>>, vector<64x32xf32>
    %cst_139 = arith.constant dense<0.000000e+00> : vector<4x32xf32>
    %172 = tpu.matmul %169, %171, %cst_139 {dimension_numbers = #tpu.dot_dimension_numbers<[1], [0], [0], [1], [0, 0, 1, 1], [], []>} : vector<4x64xf32>, vector<64x32xf32>, vector<4x32xf32> -> vector<4x32xf32>
    %173 = vector.extract_strided_slice %170 {offsets = [0, 0], sizes = [1, 32], strides = [1, 1]} : vector<8x32xf32> to vector<1x32xf32>
    %174 = vector.broadcast %173 : vector<1x32xf32> to vector<4x32xf32>
    %175 = arith.addf %172, %174 : vector<4x32xf32>
    %cst_140 = arith.constant 0.000000e+00 : f32
    %176 = vector.broadcast %cst_140 : f32 to vector<4x32xf32>
    %177 = arith.maximumf %175, %176 : vector<4x32xf32>
    %178 = vector.extract_strided_slice %170 {offsets = [1, 0], sizes = [1, 32], strides = [1, 1]} : vector<8x32xf32> to vector<1x32xf32>
    %179 = vector.broadcast %178 : vector<1x32xf32> to vector<4x32xf32>
    %180 = arith.mulf %177, %179 : vector<4x32xf32>
    %cst_141 = arith.constant dense<0.000000e+00> : vector<4xf32>
    %181 = vector.multi_reduction <add>, %180, %cst_141 [1] : vector<4x32xf32> to vector<4xf32>
    %182 = vector.shape_cast %181 : vector<4xf32> to vector<4x1xf32>
    %183 = vector.extract_strided_slice %170 {offsets = [2, 0], sizes = [1, 32], strides = [1, 1]} : vector<8x32xf32> to vector<1x32xf32>
    %cst_142 = arith.constant dense<0.000000e+00> : vector<1xf32>
    %184 = vector.multi_reduction <add>, %183, %cst_142 [1] : vector<1x32xf32> to vector<1xf32>
    %185 = vector.shape_cast %184 : vector<1xf32> to vector<1x1xf32>
    %186 = vector.broadcast %185 : vector<1x1xf32> to vector<4x1xf32>
    %187 = arith.addf %182, %186 : vector<4x1xf32>
    %c0_143 = arith.constant 0 : index
    %c0_144 = arith.constant 0 : index
    %188 = vector.load %arg3[%c0_143, %c0_144] : memref<4x1xf32, #tpu.memory_space<vmem>>, vector<4x1xf32>
    tpu.vector_store %arg3[%c0_143, %c0_144], %187 {strides = array<i32>} : memref<4x1xf32, #tpu.memory_space<vmem>>, vector<4x1xf32>,
    return
  }
}

</mosaic_0001>

<llo_original>
// kernel: rnn_forward.1
$region0: #{rnn_forward.1}
  #allocation0 [shape = 'u32[]', space=smem, size = 0x4, offset = 0x4, fixed_abs, tag = 'smem constant byte address 0x4 - core index']
  #allocation1 [shape = 'u32[144,128]{1,0:T(1,128)}', space=vmem, size = 0x12000, scoped, tag = 'internal scratch']
  %s0 = inlined_call_operand.vmem [shape: f32[8,4,64], index: 0, kind: input, shape index: {}]
  %s1 = inlined_call_operand.vmem [shape: f32[328,64], index: 1, kind: input, shape index: {}]
  %s2 = inlined_call_operand.vmem [shape: f32[72,32], index: 2, kind: input, shape index: {}]
  %s3 = inlined_call_operand.vmem [shape: f32[4,1], index: 3, kind: output, shape index: {}]
  %s4 = sld [smem:[#allocation0]]
  $region22: #{rnn_forward.1} parent=0
    _
  %s6 = ssub.s32 1, %s4
  %s7 = scalar_select 0, %s6, %s4
  // Predicated region
  $region2: #{rnn_forward.1} parent=0 // pred_check
    _
  $region3: #{rnn_forward.1} parent=0 // pred_check_branch
    %9 = sbr.rel (0) target = $region5
  $region4: #{rnn_forward.1} parent=0 // pred_region
    _
  $region5: #{rnn_forward.1} parent=0 // pred_fallthru
    _
  // Predicated region
  $region6: #{rnn_forward.1} parent=0 // pred_check
    _
  $region7: #{rnn_forward.1} parent=0 // pred_check_branch
    %11 = sbr.rel (0) target = $region9
  $region8: #{rnn_forward.1} parent=0 // pred_region
    _
  $region9: #{rnn_forward.1} parent=0 // pred_fallthru
    _
  // Predicated region
  $region10: #{rnn_forward.1} parent=0 // pred_check
    _
  $region11: #{rnn_forward.1} parent=0 // pred_check_branch
    %13 = sbr.rel (0) target = $region13
  $region12: #{rnn_forward.1} parent=0 // pred_region
    _
  $region13: #{rnn_forward.1} parent=0 // pred_fallthru
    _
  %v14 = vld [vmem:[%s1 + $0x140] sm:$0xff]
  %v15 = vlaneseq
  %v16 = vshrl.u32 %v15, 7
  %v17 = vsub.s32 0, %v16
  %v18 = vrot.slane %v14, %v17
  %v19 = vlaneseq
  %v20 = vshrl.u32 %v19, 7
  %v21 = vsub.s32 1, %v20
  %v22 = vrot.slane %v14, %v21
  %v23 = vld [vmem:[%s0] sm:$0xf]
  %v24 = vld [vmem:[%s1] sm:$0xff]
  %v25 = vld [vmem:[%s1 + $0x8] sm:$0xff]
  %v26 = vld [vmem:[%s1 + $0x10] sm:$0xff]
  %v27 = vld [vmem:[%s1 + $0x18] sm:$0xff]
  %v28 = vld [vmem:[%s1 + $0x20] sm:$0xff]
  %v29 = vld [vmem:[%s1 + $0x28] sm:$0xff]
  %v30 = vld [vmem:[%s1 + $0x30] sm:$0xff]
  %v31 = vld [vmem:[%s1 + $0x38] sm:$0xff]
  %vm32 = vcmask 523264
  %v34 = vsel %vm32, 0.0, 0
  %36 = vmatprep.subr.mxu0 0.0
  %37 = vmatpush1.msra.mxu0 %v24
  %38 = vmatprep.subr.mxu0 0.0
  %39 = vmatpush1.msra.mxu0 %v25
  %40 = vmatprep.subr.mxu0 0.0
  %41 = vmatpush1.msra.mxu0 %v26
  %42 = vmatprep.subr.mxu0 0.0
  %43 = vmatpush1.msra.mxu0 %v27
  %44 = vmatprep.subr.mxu0 0.0
  %45 = vmatpush1.msra.mxu0 %v28
  %46 = vmatprep.subr.mxu0 0.0
  %47 = vmatpush1.msra.mxu0 %v29
  %48 = vmatprep.subr.mxu0 0.0
  %49 = vmatpush1.msra.mxu0 %v30
  %50 = vmatprep.subr.mxu0 0.0
  %51 = vmatpush1.msra.mxu0 %v31
  %52 = vmatprep.subr.mxu0 0.0
  %53 = vmatpush1.msra.mxu0 0.0
  %54 = vmatprep.subr.mxu0 0.0
  %55 = vmatpush1.msra.mxu0 0.0
  %56 = vmatprep.subr.mxu0 0.0
  %57 = vmatpush1.msra.mxu0 0.0
  %58 = vmatprep.subr.mxu0 0.0
  %59 = vmatpush1.msra.mxu0 0.0
  %60 = vmatprep.subr.mxu0 0.0
  %61 = vmatpush1.msra.mxu0 0.0
  %62 = vmatprep.subr.mxu0 0.0
  %63 = vmatpush1.msra.mxu0 0.0
  %64 = vmatprep.subr.mxu0 0.0
  %65 = vmatpush1.msra.mxu0 0.0
  %66 = vmatprep.subr.mxu0 0.0
  %67 = vmatpush1.msra.mxu0 0.0
  %68 = vmatprep.subr.mxu0 0.0
  %69 = vmatpush1.msra.mxu0 0.0
  %70 = vmatprep.subr.mxu0 0.0
  %71 = vmatpush1.msra.mxu0 0.0
  %72 = vmatprep.subr.mxu0 0.0
  %73 = vmatpush1.msra.mxu0 0.0
  %74 = vmatprep.subr.mxu0 0.0
  %75 = vmatpush1.msra.mxu0 0.0
  %76 = vmatprep.subr.mxu0 0.0
  %77 = vmatpush1.msra.mxu0 0.0
  %78 = vmatprep.subr.mxu0 0.0
  %79 = vmatpush1.msra.mxu0 0.0
  %80 = vmatprep.subr.mxu0 0.0
  %81 = vmatpush1.msra.mxu0 0.0
  %82 = vmatprep.subr.mxu0 0.0
  %83 = vmatpush1.msra.mxu0 0.0
  %84 = vmatprep.subr.mxu0 0.0
  %85 = vmatpush1.msra.mxu0 0.0
  %86 = vmatprep.subr.mxu0 0.0
  %87 = vmatpush1.msra.mxu0 0.0
  %88 = vmatprep.subr.mxu0 0.0
  %89 = vmatpush1.msra.mxu0 0.0
  %90 = vmatprep.subr.mxu0 0.0
  %91 = vmatpush1.msra.mxu0 0.0
  %92 = vmatprep.subr.mxu0 0.0
  %93 = vmatpush1.msra.mxu0 0.0
  %94 = vmatprep.subr.mxu0 0.0
  %95 = vmatpush1.msra.mxu0 0.0
  %96 = vmatprep.subr.mxu0 0.0
  %97 = vmatpush1.msra.mxu0 0.0
  %98 = vmatprep.subr.mxu0 0.0
  %99 = vmatpush1.msra.mxu0 0.0
  %100 = vmatprep.mubr.f32.mxu0 0.0
  %101 = vmatmul.mubr.f32.gmra.mrb[0].mxu0 %v34
  %v102 = vpop.f32.mrb[0].mxu0
  %v103 = vadd.f32 0.0, %v102
  %v104 = vpop.f32.mrb[0].mxu0
  %105 = vdwg.mxu0
  %v106 = vadd.f32 %v23, %v103
  %v107 = vtanh.pop %v106
  %v108 = vld [vmem:[%s1 + $0x40] sm:$0xff]
  %v109 = vld [vmem:[%s1 + $0x48] sm:$0xff]
  %v110 = vld [vmem:[%s1 + $0x50] sm:$0xff]
  %v111 = vld [vmem:[%s1 + $0x58] sm:$0xff]
  %v112 = vld [vmem:[%s1 + $0x60] sm:$0xff]
  %v113 = vld [vmem:[%s1 + $0x68] sm:$0xff]
  %v114 = vld [vmem:[%s1 + $0x70] sm:$0xff]
  %v115 = vld [vmem:[%s1 + $0x78] sm:$0xff]
  %v116 = vld [vmem:[%s1 + $0x80] sm:$0xff]
  %v117 = vld [vmem:[%s1 + $0x88] sm:$0xff]
  %v118 = vld [vmem:[%s1 + $0x90] sm:$0xff]
  %v119 = vld [vmem:[%s1 + $0x98] sm:$0xff]
  %v120 = vld [vmem:[%s1 + $0xa0] sm:$0xff]
  %v121 = vld [vmem:[%s1 + $0xa8] sm:$0xff]
  %v122 = vld [vmem:[%s1 + $0xb0] sm:$0xff]
  %v123 = vld [vmem:[%s1 + $0xb8] sm:$0xff]
  %124 = vmatprep.subr.mxu0 0.0
  %125 = vmatpush1.msra.mxu0 %v116
  %126 = vmatprep.subr.mxu0 0.0
  %127 = vmatpush1.msra.mxu0 %v117
  %128 = vmatprep.subr.mxu0 0.0
  %129 = vmatpush1.msra.mxu0 %v118
  %130 = vmatprep.subr.mxu0 0.0
  %131 = vmatpush1.msra.mxu0 %v119
  %132 = vmatprep.subr.mxu0 0.0
  %133 = vmatpush1.msra.mxu0 %v120
  %134 = vmatprep.subr.mxu0 0.0
  %135 = vmatpush1.msra.mxu0 %v121
  %136 = vmatprep.subr.mxu0 0.0
  %137 = vmatpush1.msra.mxu0 %v122
  %138 = vmatprep.subr.mxu0 0.0
  %139 = vmatpush1.msra.mxu0 %v123
  %140 = vmatprep.subr.mxu0 0.0
  %141 = vmatpush1.msra.mxu0 0.0
  %142 = vmatprep.subr.mxu0 0.0
  %143 = vmatpush1.msra.mxu0 0.0
  %144 = vmatprep.subr.mxu0 0.0
  %145 = vmatpush1.msra.mxu0 0.0
  %146 = vmatprep.subr.mxu0 0.0
  %147 = vmatpush1.msra.mxu0 0.0
  %148 = vmatprep.subr.mxu0 0.0
  %149 = vmatpush1.msra.mxu0 0.0
  %150 = vmatprep.subr.mxu0 0.0
  %151 = vmatpush1.msra.mxu0 0.0
  %152 = vmatprep.subr.mxu0 0.0
  %153 = vmatpush1.msra.mxu0 0.0
  %154 = vmatprep.subr.mxu0 0.0
  %155 = vmatpush1.msra.mxu0 0.0
  %156 = vmatprep.subr.mxu0 0.0
  %157 = vmatpush1.msra.mxu0 0.0
  %158 = vmatprep.subr.mxu0 0.0
  %159 = vmatpush1.msra.mxu0 0.0
  %160 = vmatprep.subr.mxu0 0.0
  %161 = vmatpush1.msra.mxu0 0.0
  %162 = vmatprep.subr.mxu0 0.0
  %163 = vmatpush1.msra.mxu0 0.0
  %164 = vmatprep.subr.mxu0 0.0
  %165 = vmatpush1.msra.mxu0 0.0
  %166 = vmatprep.subr.mxu0 0.0
  %167 = vmatpush1.msra.mxu0 0.0
  %168 = vmatprep.subr.mxu0 0.0
  %169 = vmatpush1.msra.mxu0 0.0
  %170 = vmatprep.subr.mxu0 0.0
  %171 = vmatpush1.msra.mxu0 0.0
  %172 = vmatprep.subr.mxu0 0.0
  %173 = vmatpush1.msra.mxu0 0.0
  %174 = vmatprep.subr.mxu0 0.0
  %175 = vmatpush1.msra.mxu0 0.0
  %176 = vmatprep.subr.mxu0 0.0
  %177 = vmatpush1.msra.mxu0 0.0
  %178 = vmatprep.subr.mxu0 0.0
  %179 = vmatpush1.msra.mxu0 0.0
  %180 = vmatprep.subr.mxu0 0.0
  %181 = vmatpush1.msra.mxu0 0.0
  %182 = vmatprep.subr.mxu0 0.0
  %183 = vmatpush1.msra.mxu0 0.0
  %184 = vmatprep.subr.mxu0 0.0
  %185 = vmatpush1.msra.mxu0 0.0
  %186 = vmatprep.subr.mxu0 0.0
  %187 = vmatpush1.msra.mxu0 0.0
  %188 = vmatprep.mubr.f32.mxu0 0.0
  %189 = vmatmul.mubr.f32.gmra.mrb[0].mxu0 %v34
  %v190 = vpop.f32.mrb[0].mxu0
  %v191 = vadd.f32 0.0, %v190
  %v192 = vpop.f32.mrb[0].mxu0
  %193 = vdwg.mxu0
  %v195 = vsel %vm32, %v107, 0
  %197 = vmatprep.subr.mxu0 0.0
  %198 = vmatpush1.msra.mxu0 %v108
  %199 = vmatprep.subr.mxu0 0.0
  %200 = vmatpush1.msra.mxu0 %v109
  %201 = vmatprep.subr.mxu0 0.0
  %202 = vmatpush1.msra.mxu0 %v110
  %203 = vmatprep.subr.mxu0 0.0
  %204 = vmatpush1.msra.mxu0 %v111
  %205 = vmatprep.subr.mxu0 0.0
  %206 = vmatpush1.msra.mxu0 %v112
  %207 = vmatprep.subr.mxu0 0.0
  %208 = vmatpush1.msra.mxu0 %v113
  %209 = vmatprep.subr.mxu0 0.0
  %210 = vmatpush1.msra.mxu0 %v114
  %211 = vmatprep.subr.mxu0 0.0
  %212 = vmatpush1.msra.mxu0 %v115
  %213 = vmatprep.subr.mxu0 0.0
  %214 = vmatpush1.msra.mxu0 0.0
  %215 = vmatprep.subr.mxu0 0.0
  %216 = vmatpush1.msra.mxu0 0.0
  %217 = vmatprep.subr.mxu0 0.0
  %218 = vmatpush1.msra.mxu0 0.0
  %219 = vmatprep.subr.mxu0 0.0
  %220 = vmatpush1.msra.mxu0 0.0
  %221 = vmatprep.subr.mxu0 0.0
  %222 = vmatpush1.msra.mxu0 0.0
  %223 = vmatprep.subr.mxu0 0.0
  %224 = vmatpush1.msra.mxu0 0.0
  %225 = vmatprep.subr.mxu0 0.0
  %226 = vmatpush1.msra.mxu0 0.0
  %227 = vmatprep.subr.mxu0 0.0
  %228 = vmatpush1.msra.mxu0 0.0
  %229 = vmatprep.subr.mxu0 0.0
  %230 = vmatpush1.msra.mxu0 0.0
  %231 = vmatprep.subr.mxu0 0.0
  %232 = vmatpush1.msra.mxu0 0.0
  %233 = vmatprep.subr.mxu0 0.0
  %234 = vmatpush1.msra.mxu0 0.0
  %235 = vmatprep.subr.mxu0 0.0
  %236 = vmatpush1.msra.mxu0 0.0
  %237 = vmatprep.subr.mxu0 0.0
  %238 = vmatpush1.msra.mxu0 0.0
  %239 = vmatprep.subr.mxu0 0.0
  %240 = vmatpush1.msra.mxu0 0.0
  %241 = vmatprep.subr.mxu0 0.0
  %242 = vmatpush1.msra.mxu0 0.0
  %243 = vmatprep.subr.mxu0 0.0
  %244 = vmatpush1.msra.mxu0 0.0
  %245 = vmatprep.subr.mxu0 0.0
  %246 = vmatpush1.msra.mxu0 0.0
  %247 = vmatprep.subr.mxu0 0.0
  %248 = vmatpush1.msra.mxu0 0.0
  %249 = vmatprep.subr.mxu0 0.0
  %250 = vmatpush1.msra.mxu0 0.0
  %251 = vmatprep.subr.mxu0 0.0
  %252 = vmatpush1.msra.mxu0 0.0
  %253 = vmatprep.subr.mxu0 0.0
  %254 = vmatpush1.msra.mxu0 0.0
  %255 = vmatprep.subr.mxu0 0.0
  %256 = vmatpush1.msra.mxu0 0.0
  %257 = vmatprep.subr.mxu0 0.0
  %258 = vmatpush1.msra.mxu0 0.0
  %259 = vmatprep.subr.mxu0 0.0
  %260 = vmatpush1.msra.mxu0 0.0
  %261 = vmatprep.mubr.f32.mxu0 0.0
  %262 = vmatmul.mubr.f32.gmra.mrb[0].mxu0 %v195
  %v263 = vpop.f32.mrb[0].mxu0
  %v264 = vadd.f32 %v191, %v263
  %v265 = vpop.f32.mrb[0].mxu0
  %266 = vdwg.mxu0
  %v267 = vadd.f32 %v264, %v18
  %v268 = vtanh.pop %v267
  %v269 = vld [vmem:[%s1 + $0xc0] sm:$0xff]
  %v270 = vld [vmem:[%s1 + $0xc8] sm:$0xff]
  %v271 = vld [vmem:[%s1 + $0xd0] sm:$0xff]
  %v272 = vld [vmem:[%s1 + $0xd8] sm:$0xff]
  %v273 = vld [vmem:[%s1 + $0xe0] sm:$0xff]
  %v274 = vld [vmem:[%s1 + $0xe8] sm:$0xff]
  %v275 = vld [vmem:[%s1 + $0xf0] sm:$0xff]
  %v276 = vld [vmem:[%s1 + $0xf8] sm:$0xff]
  %v277 = vld [vmem:[%s1 + $0x100] sm:$0xff]
  %v278 = vld [vmem:[%s1 + $0x108] sm:$0xff]
  %v279 = vld [vmem:[%s1 + $0x110] sm:$0xff]
  %v280 = vld [vmem:[%s1 + $0x118] sm:$0xff]
  %v281 = vld [vmem:[%s1 + $0x120] sm:$0xff]
  %v282 = vld [vmem:[%s1 + $0x128] sm:$0xff]
  %v283 = vld [vmem:[%s1 + $0x130] sm:$0xff]
  %v284 = vld [vmem:[%s1 + $0x138] sm:$0xff]
  %285 = vmatprep.subr.mxu0 0.0
  %286 = vmatpush1.msra.mxu0 %v277
  %287 = vmatprep.subr.mxu0 0.0
  %288 = vmatpush1.msra.mxu0 %v278
  %289 = vmatprep.subr.mxu0 0.0
  %290 = vmatpush1.msra.mxu0 %v279
  %291 = vmatprep.subr.mxu0 0.0
  %292 = vmatpush1.msra.mxu0 %v280
  %293 = vmatprep.subr.mxu0 0.0
  %294 = vmatpush1.msra.mxu0 %v281
  %295 = vmatprep.subr.mxu0 0.0
  %296 = vmatpush1.msra.mxu0 %v282
  %297 = vmatprep.subr.mxu0 0.0
  %298 = vmatpush1.msra.mxu0 %v283
  %299 = vmatprep.subr.mxu0 0.0
  %300 = vmatpush1.msra.mxu0 %v284
  %301 = vmatprep.subr.mxu0 0.0
  %302 = vmatpush1.msra.mxu0 0.0
  %303 = vmatprep.subr.mxu0 0.0
  %304 = vmatpush1.msra.mxu0 0.0
  %305 = vmatprep.subr.mxu0 0.0
  %306 = vmatpush1.msra.mxu0 0.0
  %307 = vmatprep.subr.mxu0 0.0
  %308 = vmatpush1.msra.mxu0 0.0
  %309 = vmatprep.subr.mxu0 0.0
  %310 = vmatpush1.msra.mxu0 0.0
  %311 = vmatprep.subr.mxu0 0.0
  %312 = vmatpush1.msra.mxu0 0.0
  %313 = vmatprep.subr.mxu0 0.0
  %314 = vmatpush1.msra.mxu0 0.0
  %315 = vmatprep.subr.mxu0 0.0
  %316 = vmatpush1.msra.mxu0 0.0
  %317 = vmatprep.subr.mxu0 0.0
  %318 = vmatpush1.msra.mxu0 0.0
  %319 = vmatprep.subr.mxu0 0.0
  %320 = vmatpush1.msra.mxu0 0.0
  %321 = vmatprep.subr.mxu0 0.0
  %322 = vmatpush1.msra.mxu0 0.0
  %323 = vmatprep.subr.mxu0 0.0
  %324 = vmatpush1.msra.mxu0 0.0
  %325 = vmatprep.subr.mxu0 0.0
  %326 = vmatpush1.msra.mxu0 0.0
  %327 = vmatprep.subr.mxu0 0.0
  %328 = vmatpush1.msra.mxu0 0.0
  %329 = vmatprep.subr.mxu0 0.0
  %330 = vmatpush1.msra.mxu0 0.0
  %331 = vmatprep.subr.mxu0 0.0
  %332 = vmatpush1.msra.mxu0 0.0
  %333 = vmatprep.subr.mxu0 0.0
  %334 = vmatpush1.msra.mxu0 0.0
  %335 = vmatprep.subr.mxu0 0.0
  %336 = vmatpush1.msra.mxu0 0.0
  %337 = vmatprep.subr.mxu0 0.0
  %338 = vmatpush1.msra.mxu0 0.0
  %339 = vmatprep.subr.mxu0 0.0
  %340 = vmatpush1.msra.mxu0 0.0
  %341 = vmatprep.subr.mxu0 0.0
  %342 = vmatpush1.msra.mxu0 0.0
  %343 = vmatprep.subr.mxu0 0.0
  %344 = vmatpush1.msra.mxu0 0.0
  %345 = vmatprep.subr.mxu0 0.0
  %346 = vmatpush1.msra.mxu0 0.0
  %347 = vmatprep.subr.mxu0 0.0
  %348 = vmatpush1.msra.mxu0 0.0
  %349 = vmatprep.mubr.f32.mxu0 0.0
  %350 = vmatmul.mubr.f32.gmra.mrb[0].mxu0 %v34
  %v351 = vpop.f32.mrb[0].mxu0
  %v352 = vadd.f32 0.0, %v351
  %v353 = vpop.f32.mrb[0].mxu0
  %354 = vdwg.mxu0
  %v356 = vsel %vm32, %v268, 0
  %358 = vmatprep.subr.mxu0 0.0
  %359 = vmatpush1.msra.mxu0 %v269
  %360 = vmatprep.subr.mxu0 0.0
  %361 = vmatpush1.msra.mxu0 %v270
  %362 = vmatprep.subr.mxu0 0.0
  %363 = vmatpush1.msra.mxu0 %v271
  %364 = vmatprep.subr.mxu0 0.0
  %365 = vmatpush1.msra.mxu0 %v272
  %366 = vmatprep.subr.mxu0 0.0
  %367 = vmatpush1.msra.mxu0 %v273
  %368 = vmatprep.subr.mxu0 0.0
  %369 = vmatpush1.msra.mxu0 %v274
  %370 = vmatprep.subr.mxu0 0.0
  %371 = vmatpush1.msra.mxu0 %v275
  %372 = vmatprep.subr.mxu0 0.0
  %373 = vmatpush1.msra.mxu0 %v276
  %374 = vmatprep.subr.mxu0 0.0
  %375 = vmatpush1.msra.mxu0 0.0
  %376 = vmatprep.subr.mxu0 0.0
  %377 = vmatpush1.msra.mxu0 0.0
  %378 = vmatprep.subr.mxu0 0.0
  %379 = vmatpush1.msra.mxu0 0.0
  %380 = vmatprep.subr.mxu0 0.0
  %381 = vmatpush1.msra.mxu0 0.0
  %382 = vmatprep.subr.mxu0 0.0
  %383 = vmatpush1.msra.mxu0 0.0
  %384 = vmatprep.subr.mxu0 0.0
  %385 = vmatpush1.msra.mxu0 0.0
  %386 = vmatprep.subr.mxu0 0.0
  %387 = vmatpush1.msra.mxu0 0.0
  %388 = vmatprep.subr.mxu0 0.0
  %389 = vmatpush1.msra.mxu0 0.0
  %390 = vmatprep.subr.mxu0 0.0
  %391 = vmatpush1.msra.mxu0 0.0
  %392 = vmatprep.subr.mxu0 0.0
  %393 = vmatpush1.msra.mxu0 0.0
  %394 = vmatprep.subr.mxu0 0.0
  %395 = vmatpush1.msra.mxu0 0.0
  %396 = vmatprep.subr.mxu0 0.0
  %397 = vmatpush1.msra.mxu0 0.0
  %398 = vmatprep.subr.mxu0 0.0
  %399 = vmatpush1.msra.mxu0 0.0
  %400 = vmatprep.subr.mxu0 0.0
  %401 = vmatpush1.msra.mxu0 0.0
  %402 = vmatprep.subr.mxu0 0.0
  %403 = vmatpush1.msra.mxu0 0.0
  %404 = vmatprep.subr.mxu0 0.0
  %405 = vmatpush1.msra.mxu0 0.0
  %406 = vmatprep.subr.mxu0 0.0
  %407 = vmatpush1.msra.mxu0 0.0
  %408 = vmatprep.subr.mxu0 0.0
  %409 = vmatpush1.msra.mxu0 0.0
  %410 = vmatprep.subr.mxu0 0.0
  %411 = vmatpush1.msra.mxu0 0.0
  %412 = vmatprep.subr.mxu0 0.0
  %413 = vmatpush1.msra.mxu0 0.0
  %414 = vmatprep.subr.mxu0 0.0
  %415 = vmatpush1.msra.mxu0 0.0
  %416 = vmatprep.subr.mxu0 0.0
  %417 = vmatpush1.msra.mxu0 0.0
  %418 = vmatprep.subr.mxu0 0.0
  %419 = vmatpush1.msra.mxu0 0.0
  %420 = vmatprep.subr.mxu0 0.0
  %421 = vmatpush1.msra.mxu0 0.0
  %422 = vmatprep.mubr.f32.mxu0 0.0
  %423 = vmatmul.mubr.f32.gmra.mrb[0].mxu0 %v356
  %v424 = vpop.f32.mrb[0].mxu0
  %v425 = vadd.f32 %v352, %v424
  %v426 = vpop.f32.mrb[0].mxu0
  %427 = vdwg.mxu0
  %v428 = vadd.f32 %v425, %v22
  %v429 = vtanh.pop %v428
  %s430 = scalar_lea.vmem %s0, 4
  %v431 = vld [vmem:[%s430] sm:$0xf]
  %432 = vmatprep.subr.mxu0 0.0
  %433 = vmatpush1.msra.mxu0 %v24
  %434 = vmatprep.subr.mxu0 0.0
  %435 = vmatpush1.msra.mxu0 %v25
  %436 = vmatprep.subr.mxu0 0.0
  %437 = vmatpush1.msra.mxu0 %v26
  %438 = vmatprep.subr.mxu0 0.0
  %439 = vmatpush1.msra.mxu0 %v27
  %440 = vmatprep.subr.mxu0 0.0
  %441 = vmatpush1.msra.mxu0 %v28
  %442 = vmatprep.subr.mxu0 0.0
  %443 = vmatpush1.msra.mxu0 %v29
  %444 = vmatprep.subr.mxu0 0.0
  %445 = vmatpush1.msra.mxu0 %v30
  %446 = vmatprep.subr.mxu0 0.0
  %447 = vmatpush1.msra.mxu0 %v31
  %448 = vmatprep.subr.mxu0 0.0
  %449 = vmatpush1.msra.mxu0 0.0
  %450 = vmatprep.subr.mxu0 0.0
  %451 = vmatpush1.msra.mxu0 0.0
  %452 = vmatprep.subr.mxu0 0.0
  %453 = vmatpush1.msra.mxu0 0.0
  %454 = vmatprep.subr.mxu0 0.0
  %455 = vmatpush1.msra.mxu0 0.0
  %456 = vmatprep.subr.mxu0 0.0
  %457 = vmatpush1.msra.mxu0 0.0
  %458 = vmatprep.subr.mxu0 0.0
  %459 = vmatpush1.msra.mxu0 0.0
  %460 = vmatprep.subr.mxu0 0.0
  %461 = vmatpush1.msra.mxu0 0.0
  %462 = vmatprep.subr.mxu0 0.0
  %463 = vmatpush1.msra.mxu0 0.0
  %464 = vmatprep.subr.mxu0 0.0
  %465 = vmatpush1.msra.mxu0 0.0
  %466 = vmatprep.subr.mxu0 0.0
  %467 = vmatpush1.msra.mxu0 0.0
  %468 = vmatprep.subr.mxu0 0.0
  %469 = vmatpush1.msra.mxu0 0.0
  %470 = vmatprep.subr.mxu0 0.0
  %471 = vmatpush1.msra.mxu0 0.0
  %472 = vmatprep.subr.mxu0 0.0
  %473 = vmatpush1.msra.mxu0 0.0
  %474 = vmatprep.subr.mxu0 0.0
  %475 = vmatpush1.msra.mxu0 0.0
  %476 = vmatprep.subr.mxu0 0.0
  %477 = vmatpush1.msra.mxu0 0.0
  %478 = vmatprep.subr.mxu0 0.0
  %479 = vmatpush1.msra.mxu0 0.0
  %480 = vmatprep.subr.mxu0 0.0
  %481 = vmatpush1.msra.mxu0 0.0
  %482 = vmatprep.subr.mxu0 0.0
  %483 = vmatpush1.msra.mxu0 0.0
  %484 = vmatprep.subr.mxu0 0.0
  %485 = vmatpush1.msra.mxu0 0.0
  %486 = vmatprep.subr.mxu0 0.0
  %487 = vmatpush1.msra.mxu0 0.0
  %488 = vmatprep.subr.mxu0 0.0
  %489 = vmatpush1.msra.mxu0 0.0
  %490 = vmatprep.subr.mxu0 0.0
  %491 = vmatpush1.msra.mxu0 0.0
  %492 = vmatprep.subr.mxu0 0.0
  %493 = vmatpush1.msra.mxu0 0.0
  %494 = vmatprep.subr.mxu0 0.0
  %495 = vmatpush1.msra.mxu0 0.0
  %496 = vmatprep.mubr.f32.mxu0 0.0
  %497 = vmatmul.mubr.f32.gmra.mrb[0].mxu0 %v195
  %v498 = vpop.f32.mrb[0].mxu0
  %v499 = vadd.f32 0.0, %v498
  %v500 = vpop.f32.mrb[0].mxu0
  %501 = vdwg.mxu0
  %v502 = vadd.f32 %v431, %v499
  %v503 = vtanh.pop %v502
  %504 = vmatprep.subr.mxu0 0.0
  %505 = vmatpush1.msra.mxu0 %v116
  %506 = vmatprep.subr.mxu0 0.0
  %507 = vmatpush1.msra.mxu0 %v117
  %508 = vmatprep.subr.mxu0 0.0
  %509 = vmatpush1.msra.mxu0 %v118
  %510 = vmatprep.subr.mxu0 0.0
  %511 = vmatpush1.msra.mxu0 %v119
  %512 = vmatprep.subr.mxu0 0.0
  %513 = vmatpush1.msra.mxu0 %v120
  %514 = vmatprep.subr.mxu0 0.0
  %515 = vmatpush1.msra.mxu0 %v121
  %516 = vmatprep.subr.mxu0 0.0
  %517 = vmatpush1.msra.mxu0 %v122
  %518 = vmatprep.subr.mxu0 0.0
  %519 = vmatpush1.msra.mxu0 %v123
  %520 = vmatprep.subr.mxu0 0.0
  %521 = vmatpush1.msra.mxu0 0.0
  %522 = vmatprep.subr.mxu0 0.0
  %523 = vmatpush1.msra.mxu0 0.0
  %524 = vmatprep.subr.mxu0 0.0
  %525 = vmatpush1.msra.mxu0 0.0
  %526 = vmatprep.subr.mxu0 0.0
  %527 = vmatpush1.msra.mxu0 0.0
  %528 = vmatprep.subr.mxu0 0.0
  %529 = vmatpush1.msra.mxu0 0.0
  %530 = vmatprep.subr.mxu0 0.0
  %531 = vmatpush1.msra.mxu0 0.0
  %532 = vmatprep.subr.mxu0 0.0
  %533 = vmatpush1.msra.mxu0 0.0
  %534 = vmatprep.subr.mxu0 0.0
  %535 = vmatpush1.msra.mxu0 0.0
  %536 = vmatprep.subr.mxu0 0.0
  %537 = vmatpush1.msra.mxu0 0.0
  %538 = vmatprep.subr.mxu0 0.0
  %539 = vmatpush1.msra.mxu0 0.0
  %540 = vmatprep.subr.mxu0 0.0
  %541 = vmatpush1.msra.mxu0 0.0
  %542 = vmatprep.subr.mxu0 0.0
  %543 = vmatpush1.msra.mxu0 0.0
  %544 = vmatprep.subr.mxu0 0.0
  %545 = vmatpush1.msra.mxu0 0.0
  %546 = vmatprep.subr.mxu0 0.0
  %547 = vmatpush1.msra.mxu0 0.0
  %548 = vmatprep.subr.mxu0 0.0
  %549 = vmatpush1.msra.mxu0 0.0
  %550 = vmatprep.subr.mxu0 0.0
  %551 = vmatpush1.msra.mxu0 0.0
  %552 = vmatprep.subr.mxu0 0.0
  %553 = vmatpush1.msra.mxu0 0.0
  %554 = vmatprep.subr.mxu0 0.0
  %555 = vmatpush1.msra.mxu0 0.0
  %556 = vmatprep.subr.mxu0 0.0
  %557 = vmatpush1.msra.mxu0 0.0
  %558 = vmatprep.subr.mxu0 0.0
  %559 = vmatpush1.msra.mxu0 0.0
  %560 = vmatprep.subr.mxu0 0.0
  %561 = vmatpush1.msra.mxu0 0.0
  %562 = vmatprep.subr.mxu0 0.0
  %563 = vmatpush1.msra.mxu0 0.0
  %564 = vmatprep.subr.mxu0 0.0
  %565 = vmatpush1.msra.mxu0 0.0
  %566 = vmatprep.subr.mxu0 0.0
  %567 = vmatpush1.msra.mxu0 0.0
  %568 = vmatprep.mubr.f32.mxu0 0.0
  %569 = vmatmul.mubr.f32.gmra.mrb[0].mxu0 %v356
  %v570 = vpop.f32.mrb[0].mxu0
  %v571 = vadd.f32 0.0, %v570
  %v572 = vpop.f32.mrb[0].mxu0
  %573 = vdwg.mxu0
  %v575 = vsel %vm32, %v503, 0
  %577 = vmatprep.subr.mxu0 0.0
  %578 = vmatpush1.msra.mxu0 %v108
  %579 = vmatprep.subr.mxu0 0.0
  %580 = vmatpush1.msra.mxu0 %v109
  %581 = vmatprep.subr.mxu0 0.0
  %582 = vmatpush1.msra.mxu0 %v110
  %583 = vmatprep.subr.mxu0 0.0
  %584 = vmatpush1.msra.mxu0 %v111
  %585 = vmatprep.subr.mxu0 0.0
  %586 = vmatpush1.msra.mxu0 %v112
  %587 = vmatprep.subr.mxu0 0.0
  %588 = vmatpush1.msra.mxu0 %v113
  %589 = vmatprep.subr.mxu0 0.0
  %590 = vmatpush1.msra.mxu0 %v114
  %591 = vmatprep.subr.mxu0 0.0
  %592 = vmatpush1.msra.mxu0 %v115
  %593 = vmatprep.subr.mxu0 0.0
  %594 = vmatpush1.msra.mxu0 0.0
  %595 = vmatprep.subr.mxu0 0.0
  %596 = vmatpush1.msra.mxu0 0.0
  %597 = vmatprep.subr.mxu0 0.0
  %598 = vmatpush1.msra.mxu0 0.0
  %599 = vmatprep.subr.mxu0 0.0
  %600 = vmatpush1.msra.mxu0 0.0
  %601 = vmatprep.subr.mxu0 0.0
  %602 = vmatpush1.msra.mxu0 0.0
  %603 = vmatprep.subr.mxu0 0.0
  %604 = vmatpush1.msra.mxu0 0.0
  %605 = vmatprep.subr.mxu0 0.0
  %606 = vmatpush1.msra.mxu0 0.0
  %607 = vmatprep.subr.mxu0 0.0
  %608 = vmatpush1.msra.mxu0 0.0
  %609 = vmatprep.subr.mxu0 0.0
  %610 = vmatpush1.msra.mxu0 0.0
  %611 = vmatprep.subr.mxu0 0.0
  %612 = vmatpush1.msra.mxu0 0.0
  %613 = vmatprep.subr.mxu0 0.0
  %614 = vmatpush1.msra.mxu0 0.0
  %615 = vmatprep.subr.mxu0 0.0
  %616 = vmatpush1.msra.mxu0 0.0
  %617 = vmatprep.subr.mxu0 0.0
  %618 = vmatpush1.msra.mxu0 0.0
  %619 = vmatprep.subr.mxu0 0.0
  %620 = vmatpush1.msra.mxu0 0.0
  %621 = vmatprep.subr.mxu0 0.0
  %622 = vmatpush1.msra.mxu0 0.0
  %623 = vmatprep.subr.mxu0 0.0
  %624 = vmatpush1.msra.mxu0 0.0
  %625 = vmatprep.subr.mxu0 0.0
  %626 = vmatpush1.msra.mxu0 0.0
  %627 = vmatprep.subr.mxu0 0.0
  %628 = vmatpush1.msra.mxu0 0.0
  %629 = vmatprep.subr.mxu0 0.0
  %630 = vmatpush1.msra.mxu0 0.0
  %631 = vmatprep.subr.mxu0 0.0
  %632 = vmatpush1.msra.mxu0 0.0
  %633 = vmatprep.subr.mxu0 0.0
  %634 = vmatpush1.msra.mxu0 0.0
  %635 = vmatprep.subr.mxu0 0.0
  %636 = vmatpush1.msra.mxu0 0.0
  %637 = vmatprep.subr.mxu0 0.0
  %638 = vmatpush1.msra.mxu0 0.0
  %639 = vmatprep.subr.mxu0 0.0
  %640 = vmatpush1.msra.mxu0 0.0
  %641 = vmatprep.mubr.f32.mxu0 0.0
  %642 = vmatmul.mubr.f32.gmra.mrb[0].mxu0 %v575
  %v643 = vpop.f32.mrb[0].mxu0
  %v644 = vadd.f32 %v571, %v643
  %v645 = vpop.f32.mrb[0].mxu0
  %646 = vdwg.mxu0
  %v647 = vadd.f32 %v644, %v18
  %v648 = vtanh.pop %v647
  %v650 = vsel %vm32, %v429, 0
  %652 = vmatprep.subr.mxu0 0.0
  %653 = vmatpush1.msra.mxu0 %v277
  %654 = vmatprep.subr.mxu0 0.0
  %655 = vmatpush1.msra.mxu0 %v278
  %656 = vmatprep.subr.mxu0 0.0
  %657 = vmatpush1.msra.mxu0 %v279
  %658 = vmatprep.subr.mxu0 0.0
  %659 = vmatpush1.msra.mxu0 %v280
  %660 = vmatprep.subr.mxu0 0.0
  %661 = vmatpush1.msra.mxu0 %v281
  %662 = vmatprep.subr.mxu0 0.0
  %663 = vmatpush1.msra.mxu0 %v282
  %664 = vmatprep.subr.mxu0 0.0
  %665 = vmatpush1.msra.mxu0 %v283
  %666 = vmatprep.subr.mxu0 0.0
  %667 = vmatpush1.msra.mxu0 %v284
  %668 = vmatprep.subr.mxu0 0.0
  %669 = vmatpush1.msra.mxu0 0.0
  %670 = vmatprep.subr.mxu0 0.0
  %671 = vmatpush1.msra.mxu0 0.0
  %672 = vmatprep.subr.mxu0 0.0
  %673 = vmatpush1.msra.mxu0 0.0
  %674 = vmatprep.subr.mxu0 0.0
  %675 = vmatpush1.msra.mxu0 0.0
  %676 = vmatprep.subr.mxu0 0.0
  %677 = vmatpush1.msra.mxu0 0.0
  %678 = vmatprep.subr.mxu0 0.0
  %679 = vmatpush1.msra.mxu0 0.0
  %680 = vmatprep.subr.mxu0 0.0
  %681 = vmatpush1.msra.mxu0 0.0
  %682 = vmatprep.subr.mxu0 0.0
  %683 = vmatpush1.msra.mxu0 0.0
  %684 = vmatprep.subr.mxu0 0.0
  %685 = vmatpush1.msra.mxu0 0.0
  %686 = vmatprep.subr.mxu0 0.0
  %687 = vmatpush1.msra.mxu0 0.0
  %688 = vmatprep.subr.mxu0 0.0
  %689 = vmatpush1.msra.mxu0 0.0
  %690 = vmatprep.subr.mxu0 0.0
  %691 = vmatpush1.msra.mxu0 0.0
  %692 = vmatprep.subr.mxu0 0.0
  %693 = vmatpush1.msra.mxu0 0.0
  %694 = vmatprep.subr.mxu0 0.0
  %695 = vmatpush1.msra.mxu0 0.0
  %696 = vmatprep.subr.mxu0 0.0
  %697 = vmatpush1.msra.mxu0 0.0
  %698 = vmatprep.subr.mxu0 0.0
  %699 = vmatpush1.msra.mxu0 0.0
  %700 = vmatprep.subr.mxu0 0.0
  %701 = vmatpush1.msra.mxu0 0.0
  %702 = vmatprep.subr.mxu0 0.0
  %703 = vmatpush1.msra.mxu0 0.0
  %704 = vmatprep.subr.mxu0 0.0
  %705 = vmatpush1.msra.mxu0 0.0
  %706 = vmatprep.subr.mxu0 0.0
  %707 = vmatpush1.msra.mxu0 0.0
  %708 = vmatprep.subr.mxu0 0.0
  %709 = vmatpush1.msra.mxu0 0.0
  %710 = vmatprep.subr.mxu0 0.0
  %711 = vmatpush1.msra.mxu0 0.0
  %712 = vmatprep.subr.mxu0 0.0
  %713 = vmatpush1.msra.mxu0 0.0
  %714 = vmatprep.subr.mxu0 0.0
  %715 = vmatpush1.msra.mxu0 0.0
  %716 = vmatprep.mubr.f32.mxu0 0.0
  %717 = vmatmul.mubr.f32.gmra.mrb[0].mxu0 %v650
  %v718 = vpop.f32.mrb[0].mxu0
  %v719 = vadd.f32 0.0, %v718
  %v720 = vpop.f32.mrb[0].mxu0
  %721 = vdwg.mxu0
  %v723 = vsel %vm32, %v648, 0
  %725 = vmatprep.subr.mxu0 0.0
  %726 = vmatpush1.msra.mxu0 %v269
  %727 = vmatprep.subr.mxu0 0.0
  %728 = vmatpush1.msra.mxu0 %v270
  %729 = vmatprep.subr.mxu0 0.0
  %730 = vmatpush1.msra.mxu0 %v271
  %731 = vmatprep.subr.mxu0 0.0
  %732 = vmatpush1.msra.mxu0 %v272
  %733 = vmatprep.subr.mxu0 0.0
  %734 = vmatpush1.msra.mxu0 %v273
  %735 = vmatprep.subr.mxu0 0.0
  %736 = vmatpush1.msra.mxu0 %v274
  %737 = vmatprep.subr.mxu0 0.0
  %738 = vmatpush1.msra.mxu0 %v275
  %739 = vmatprep.subr.mxu0 0.0
  %740 = vmatpush1.msra.mxu0 %v276
  %741 = vmatprep.subr.mxu0 0.0
  %742 = vmatpush1.msra.mxu0 0.0
  %743 = vmatprep.subr.mxu0 0.0
  %744 = vmatpush1.msra.mxu0 0.0
  %745 = vmatprep.subr.mxu0 0.0
  %746 = vmatpush1.msra.mxu0 0.0
  %747 = vmatprep.subr.mxu0 0.0
  %748 = vmatpush1.msra.mxu0 0.0
  %749 = vmatprep.subr.mxu0 0.0
  %750 = vmatpush1.msra.mxu0 0.0
  %751 = vmatprep.subr.mxu0 0.0
  %752 = vmatpush1.msra.mxu0 0.0
  %753 = vmatprep.subr.mxu0 0.0
  %754 = vmatpush1.msra.mxu0 0.0
  %755 = vmatprep.subr.mxu0 0.0
  %756 = vmatpush1.msra.mxu0 0.0
  %757 = vmatprep.subr.mxu0 0.0
  %758 = vmatpush1.msra.mxu0 0.0
  %759 = vmatprep.subr.mxu0 0.0
  %760 = vmatpush1.msra.mxu0 0.0
  %761 = vmatprep.subr.mxu0 0.0
  %762 = vmatpush1.msra.mxu0 0.0
  %763 = vmatprep.subr.mxu0 0.0
  %764 = vmatpush1.msra.mxu0 0.0
  %765 = vmatprep.subr.mxu0 0.0
  %766 = vmatpush1.msra.mxu0 0.0
  %767 = vmatprep.subr.mxu0 0.0
  %768 = vmatpush1.msra.mxu0 0.0
  %769 = vmatprep.subr.mxu0 0.0
  %770 = vmatpush1.msra.mxu0 0.0
  %771 = vmatprep.subr.mxu0 0.0
  %772 = vmatpush1.msra.mxu0 0.0
  %773 = vmatprep.subr.mxu0 0.0
  %774 = vmatpush1.msra.mxu0 0.0
  %775 = vmatprep.subr.mxu0 0.0
  %776 = vmatpush1.msra.mxu0 0.0
  %777 = vmatprep.subr.mxu0 0.0
  %778 = vmatpush1.msra.mxu0 0.0
  %779 = vmatprep.subr.mxu0 0.0
  %780 = vmatpush1.msra.mxu0 0.0
  %781 = vmatprep.subr.mxu0 0.0
  %782 = vmatpush1.msra.mxu0 0.0
  %783 = vmatprep.subr.mxu0 0.0
  %784 = vmatpush1.msra.mxu0 0.0
  %785 = vmatprep.subr.mxu0 0.0
  %786 = vmatpush1.msra.mxu0 0.0
  %787 = vmatprep.subr.mxu0 0.0
  %788 = vmatpush1.msra.mxu0 0.0
  %789 = vmatprep.mubr.f32.mxu0 0.0
  %790 = vmatmul.mubr.f32.gmra.mrb[0].mxu0 %v723
  %v791 = vpop.f32.mrb[0].mxu0
  %v792 = vadd.f32 %v719, %v791
  %v793 = vpop.f32.mrb[0].mxu0
  %794 = vdwg.mxu0
  %v795 = vadd.f32 %v792, %v22
  %v796 = vtanh.pop %v795
  %s797 = scalar_lea.vmem %s0, 8
  %v798 = vld [vmem:[%s797] sm:$0xf]
  %799 = vmatprep.subr.mxu0 0.0
  %800 = vmatpush1.msra.mxu0 %v24
  %801 = vmatprep.subr.mxu0 0.0
  %802 = vmatpush1.msra.mxu0 %v25
  %803 = vmatprep.subr.mxu0 0.0
  %804 = vmatpush1.msra.mxu0 %v26
  %805 = vmatprep.subr.mxu0 0.0
  %806 = vmatpush1.msra.mxu0 %v27
  %807 = vmatprep.subr.mxu0 0.0
  %808 = vmatpush1.msra.mxu0 %v28
  %809 = vmatprep.subr.mxu0 0.0
  %810 = vmatpush1.msra.mxu0 %v29
  %811 = vmatprep.subr.mxu0 0.0
  %812 = vmatpush1.msra.mxu0 %v30
  %813 = vmatprep.subr.mxu0 0.0
  %814 = vmatpush1.msra.mxu0 %v31
  %815 = vmatprep.subr.mxu0 0.0
  %816 = vmatpush1.msra.mxu0 0.0
  %817 = vmatprep.subr.mxu0 0.0
  %818 = vmatpush1.msra.mxu0 0.0
  %819 = vmatprep.subr.mxu0 0.0
  %820 = vmatpush1.msra.mxu0 0.0
  %821 = vmatprep.subr.mxu0 0.0
  %822 = vmatpush1.msra.mxu0 0.0
  %823 = vmatprep.subr.mxu0 0.0
  %824 = vmatpush1.msra.mxu0 0.0
  %825 = vmatprep.subr.mxu0 0.0
  %826 = vmatpush1.msra.mxu0 0.0
  %827 = vmatprep.subr.mxu0 0.0
  %828 = vmatpush1.msra.mxu0 0.0
  %829 = vmatprep.subr.mxu0 0.0
  %830 = vmatpush1.msra.mxu0 0.0
  %831 = vmatprep.subr.mxu0 0.0
  %832 = vmatpush1.msra.mxu0 0.0
  %833 = vmatprep.subr.mxu0 0.0
  %834 = vmatpush1.msra.mxu0 0.0
  %835 = vmatprep.subr.mxu0 0.0
  %836 = vmatpush1.msra.mxu0 0.0
  %837 = vmatprep.subr.mxu0 0.0
  %838 = vmatpush1.msra.mxu0 0.0
  %839 = vmatprep.subr.mxu0 0.0
  %840 = vmatpush1.msra.mxu0 0.0
  %841 = vmatprep.subr.mxu0 0.0
  %842 = vmatpush1.msra.mxu0 0.0
  %843 = vmatprep.subr.mxu0 0.0
  %844 = vmatpush1.msra.mxu0 0.0
  %845 = vmatprep.subr.mxu0 0.0
  %846 = vmatpush1.msra.mxu0 0.0
  %847 = vmatprep.subr.mxu0 0.0
  %848 = vmatpush1.msra.mxu0 0.0
  %849 = vmatprep.subr.mxu0 0.0
  %850 = vmatpush1.msra.mxu0 0.0
  %851 = vmatprep.subr.mxu0 0.0
  %852 = vmatpush1.msra.mxu0 0.0
  %853 = vmatprep.subr.mxu0 0.0
  %854 = vmatpush1.msra.mxu0 0.0
  %855 = vmatprep.subr.mxu0 0.0
  %856 = vmatpush1.msra.mxu0 0.0
  %857 = vmatprep.subr.mxu0 0.0
  %858 = vmatpush1.msra.mxu0 0.0
  %859 = vmatprep.subr.mxu0 0.0
  %860 = vmatpush1.msra.mxu0 0.0
  %861 = vmatprep.subr.mxu0 0.0
  %862 = vmatpush1.msra.mxu0 0.0
  %863 = vmatprep.mubr.f32.mxu0 0.0
  %864 = vmatmul.mubr.f32.gmra.mrb[0].mxu0 %v575
  %v865 = vpop.f32.mrb[0].mxu0
  %v866 = vadd.f32 0.0, %v865
  %v867 = vpop.f32.mrb[0].mxu0
  %868 = vdwg.mxu0
  %v869 = vadd.f32 %v798, %v866
  %v870 = vtanh.pop %v869
  %871 = vmatprep.subr.mxu0 0.0
  %872 = vmatpush1.msra.mxu0 %v116
  %873 = vmatprep.subr.mxu0 0.0
  %874 = vmatpush1.msra.mxu0 %v117
  %875 = vmatprep.subr.mxu0 0.0
  %876 = vmatpush1.msra.mxu0 %v118
  %877 = vmatprep.subr.mxu0 0.0
  %878 = vmatpush1.msra.mxu0 %v119
  %879 = vmatprep.subr.mxu0 0.0
  %880 = vmatpush1.msra.mxu0 %v120
  %881 = vmatprep.subr.mxu0 0.0
  %882 = vmatpush1.msra.mxu0 %v121
  %883 = vmatprep.subr.mxu0 0.0
  %884 = vmatpush1.msra.mxu0 %v122
  %885 = vmatprep.subr.mxu0 0.0
  %886 = vmatpush1.msra.mxu0 %v123
  %887 = vmatprep.subr.mxu0 0.0
  %888 = vmatpush1.msra.mxu0 0.0
  %889 = vmatprep.subr.mxu0 0.0
  %890 = vmatpush1.msra.mxu0 0.0
  %891 = vmatprep.subr.mxu0 0.0
  %892 = vmatpush1.msra.mxu0 0.0
  %893 = vmatprep.subr.mxu0 0.0
  %894 = vmatpush1.msra.mxu0 0.0
  %895 = vmatprep.subr.mxu0 0.0
  %896 = vmatpush1.msra.mxu0 0.0
  %897 = vmatprep.subr.mxu0 0.0
  %898 = vmatpush1.msra.mxu0 0.0
  %899 = vmatprep.subr.mxu0 0.0
  %900 = vmatpush1.msra.mxu0 0.0
  %901 = vmatprep.subr.mxu0 0.0
  %902 = vmatpush1.msra.mxu0 0.0
  %903 = vmatprep.subr.mxu0 0.0
  %904 = vmatpush1.msra.mxu0 0.0
  %905 = vmatprep.subr.mxu0 0.0
  %906 = vmatpush1.msra.mxu0 0.0
  %907 = vmatprep.subr.mxu0 0.0
  %908 = vmatpush1.msra.mxu0 0.0
  %909 = vmatprep.subr.mxu0 0.0
  %910 = vmatpush1.msra.mxu0 0.0
  %911 = vmatprep.subr.mxu0 0.0
  %912 = vmatpush1.msra.mxu0 0.0
  %913 = vmatprep.subr.mxu0 0.0
  %914 = vmatpush1.msra.mxu0 0.0
  %915 = vmatprep.subr.mxu0 0.0
  %916 = vmatpush1.msra.mxu0 0.0
  %917 = vmatprep.subr.mxu0 0.0
  %918 = vmatpush1.msra.mxu0 0.0
  %919 = vmatprep.subr.mxu0 0.0
  %920 = vmatpush1.msra.mxu0 0.0
  %921 = vmatprep.subr.mxu0 0.0
  %922 = vmatpush1.msra.mxu0 0.0
  %923 = vmatprep.subr.mxu0 0.0
  %924 = vmatpush1.msra.mxu0 0.0
  %925 = vmatprep.subr.mxu0 0.0
  %926 = vmatpush1.msra.mxu0 0.0
  %927 = vmatprep.subr.mxu0 0.0
  %928 = vmatpush1.msra.mxu0 0.0
  %929 = vmatprep.subr.mxu0 0.0
  %930 = vmatpush1.msra.mxu0 0.0
  %931 = vmatprep.subr.mxu0 0.0
  %932 = vmatpush1.msra.mxu0 0.0
  %933 = vmatprep.subr.mxu0 0.0
  %934 = vmatpush1.msra.mxu0 0.0
  %935 = vmatprep.mubr.f32.mxu0 0.0
  %936 = vmatmul.mubr.f32.gmra.mrb[0].mxu0 %v723
  %v937 = vpop.f32.mrb[0].mxu0
  %v938 = vadd.f32 0.0, %v937
  %v939 = vpop.f32.mrb[0].mxu0
  %940 = vdwg.mxu0
  %v942 = vsel %vm32, %v870, 0
  %944 = vmatprep.subr.mxu0 0.0
  %945 = vmatpush1.msra.mxu0 %v108
  %946 = vmatprep.subr.mxu0 0.0
  %947 = vmatpush1.msra.mxu0 %v109
  %948 = vmatprep.subr.mxu0 0.0
  %949 = vmatpush1.msra.mxu0 %v110
  %950 = vmatprep.subr.mxu0 0.0
  %951 = vmatpush1.msra.mxu0 %v111
  %952 = vmatprep.subr.mxu0 0.0
  %953 = vmatpush1.msra.mxu0 %v112
  %954 = vmatprep.subr.mxu0 0.0
  %955 = vmatpush1.msra.mxu0 %v113
  %956 = vmatprep.subr.mxu0 0.0
  %957 = vmatpush1.msra.mxu0 %v114
  %958 = vmatprep.subr.mxu0 0.0
  %959 = vmatpush1.msra.mxu0 %v115
  %960 = vmatprep.subr.mxu0 0.0
  %961 = vmatpush1.msra.mxu0 0.0
  %962 = vmatprep.subr.mxu0 0.0
  %963 = vmatpush1.msra.mxu0 0.0
  %964 = vmatprep.subr.mxu0 0.0
  %965 = vmatpush1.msra.mxu0 0.0
  %966 = vmatprep.subr.mxu0 0.0
  %967 = vmatpush1.msra.mxu0 0.0
  %968 = vmatprep.subr.mxu0 0.0
  %969 = vmatpush1.msra.mxu0 0.0
  %970 = vmatprep.subr.mxu0 0.0
  %971 = vmatpush1.msra.mxu0 0.0
  %972 = vmatprep.subr.mxu0 0.0
  %973 = vmatpush1.msra.mxu0 0.0
  %974 = vmatprep.subr.mxu0 0.0
  %975 = vmatpush1.msra.mxu0 0.0
  %976 = vmatprep.subr.mxu0 0.0
  %977 = vmatpush1.msra.mxu0 0.0
  %978 = vmatprep.subr.mxu0 0.0
  %979 = vmatpush1.msra.mxu0 0.0
  %980 = vmatprep.subr.mxu0 0.0
  %981 = vmatpush1.msra.mxu0 0.0
  %982 = vmatprep.subr.mxu0 0.0
  %983 = vmatpush1.msra.mxu0 0.0
  %984 = vmatprep.subr.mxu0 0.0
  %985 = vmatpush1.msra.mxu0 0.0
  %986 = vmatprep.subr.mxu0 0.0
  %987 = vmatpush1.msra.mxu0 0.0
  %988 = vmatprep.subr.mxu0 0.0
  %989 = vmatpush1.msra.mxu0 0.0
  %990 = vmatprep.subr.mxu0 0.0
  %991 = vmatpush1.msra.mxu0 0.0
  %992 = vmatprep.subr.mxu0 0.0
  %993 = vmatpush1.msra.mxu0 0.0
  %994 = vmatprep.subr.mxu0 0.0
  %995 = vmatpush1.msra.mxu0 0.0
  %996 = vmatprep.subr.mxu0 0.0
  %997 = vmatpush1.msra.mxu0 0.0
  %998 = vmatprep.subr.mxu0 0.0
  %999 = vmatpush1.msra.mxu0 0.0
  %1000 = vmatprep.subr.mxu0 0.0
  %1001 = vmatpush1.msra.mxu0 0.0
  %1002 = vmatprep.subr.mxu0 0.0
  %1003 = vmatpush1.msra.mxu0 0.0
  %1004 = vmatprep.subr.mxu0 0.0
  %1005 = vmatpush1.msra.mxu0 0.0
  %1006 = vmatprep.subr.mxu0 0.0
  %1007 = vmatpush1.msra.mxu0 0.0
  %1008 = vmatprep.mubr.f32.mxu0 0.0
  %1009 = vmatmul.mubr.f32.gmra.mrb[0].mxu0 %v942
  %v1010 = vpop.f32.mrb[0].mxu0
  %v1011 = vadd.f32 %v938, %v1010
  %v1012 = vpop.f32.mrb[0].mxu0
  %1013 = vdwg.mxu0
  %v1014 = vadd.f32 %v1011, %v18
  %v1015 = vtanh.pop %v1014
  %v1017 = vsel %vm32, %v796, 0
  %1019 = vmatprep.subr.mxu0 0.0
  %1020 = vmatpush1.msra.mxu0 %v277
  %1021 = vmatprep.subr.mxu0 0.0
  %1022 = vmatpush1.msra.mxu0 %v278
  %1023 = vmatprep.subr.mxu0 0.0
  %1024 = vmatpush1.msra.mxu0 %v279
  %1025 = vmatprep.subr.mxu0 0.0
  %1026 = vmatpush1.msra.mxu0 %v280
  %1027 = vmatprep.subr.mxu0 0.0
  %1028 = vmatpush1.msra.mxu0 %v281
  %1029 = vmatprep.subr.mxu0 0.0
  %1030 = vmatpush1.msra.mxu0 %v282
  %1031 = vmatprep.subr.mxu0 0.0
  %1032 = vmatpush1.msra.mxu0 %v283
  %1033 = vmatprep.subr.mxu0 0.0
  %1034 = vmatpush1.msra.mxu0 %v284
  %1035 = vmatprep.subr.mxu0 0.0
  %1036 = vmatpush1.msra.mxu0 0.0
  %1037 = vmatprep.subr.mxu0 0.0
  %1038 = vmatpush1.msra.mxu0 0.0
  %1039 = vmatprep.subr.mxu0 0.0
  %1040 = vmatpush1.msra.mxu0 0.0
  %1041 = vmatprep.subr.mxu0 0.0
  %1042 = vmatpush1.msra.mxu0 0.0
  %1043 = vmatprep.subr.mxu0 0.0
  %1044 = vmatpush1.msra.mxu0 0.0
  %1045 = vmatprep.subr.mxu0 0.0
  %1046 = vmatpush1.msra.mxu0 0.0
  %1047 = vmatprep.subr.mxu0 0.0
  %1048 = vmatpush1.msra.mxu0 0.0
  %1049 = vmatprep.subr.mxu0 0.0
  %1050 = vmatpush1.msra.mxu0 0.0
  %1051 = vmatprep.subr.mxu0 0.0
  %1052 = vmatpush1.msra.mxu0 0.0
  %1053 = vmatprep.subr.mxu0 0.0
  %1054 = vmatpush1.msra.mxu0 0.0
  %1055 = vmatprep.subr.mxu0 0.0
  %1056 = vmatpush1.msra.mxu0 0.0
  %1057 = vmatprep.subr.mxu0 0.0
  %1058 = vmatpush1.msra.mxu0 0.0
  %1059 = vmatprep.subr.mxu0 0.0
  %1060 = vmatpush1.msra.mxu0 0.0
  %1061 = vmatprep.subr.mxu0 0.0
  %1062 = vmatpush1.msra.mxu0 0.0
  %1063 = vmatprep.subr.mxu0 0.0
  %1064 = vmatpush1.msra.mxu0 0.0
  %1065 = vmatprep.subr.mxu0 0.0
  %1066 = vmatpush1.msra.mxu0 0.0
  %1067 = vmatprep.subr.mxu0 0.0
  %1068 = vmatpush1.msra.mxu0 0.0
  %1069 = vmatprep.subr.mxu0 0.0
  %1070 = vmatpush1.msra.mxu0 0.0
  %1071 = vmatprep.subr.mxu0 0.0
  %1072 = vmatpush1.msra.mxu0 0.0
  %1073 = vmatprep.subr.mxu0 0.0
  %1074 = vmatpush1.msra.mxu0 0.0
  %1075 = vmatprep.subr.mxu0 0.0
  %1076 = vmatpush1.msra.mxu0 0.0
  %1077 = vmatprep.subr.mxu0 0.0
  %1078 = vmatpush1.msra.mxu0 0.0
  %1079 = vmatprep.subr.mxu0 0.0
  %1080 = vmatpush1.msra.mxu0 0.0
  %1081 = vmatprep.subr.mxu0 0.0
  %1082 = vmatpush1.msra.mxu0 0.0
  %1083 = vmatprep.mubr.f32.mxu0 0.0
  %1084 = vmatmul.mubr.f32.gmra.mrb[0].mxu0 %v1017
  %v1085 = vpop.f32.mrb[0].mxu0
  %v1086 = vadd.f32 0.0, %v1085
  %v1087 = vpop.f32.mrb[0].mxu0
  %1088 = vdwg.mxu0
  %v1090 = vsel %vm32, %v1015, 0
  %1092 = vmatprep.subr.mxu0 0.0
  %1093 = vmatpush1.msra.mxu0 %v269
  %1094 = vmatprep.subr.mxu0 0.0
  %1095 = vmatpush1.msra.mxu0 %v270
  %1096 = vmatprep.subr.mxu0 0.0
  %1097 = vmatpush1.msra.mxu0 %v271
  %1098 = vmatprep.subr.mxu0 0.0
  %1099 = vmatpush1.msra.mxu0 %v272
  %1100 = vmatprep.subr.mxu0 0.0
  %1101 = vmatpush1.msra.mxu0 %v273
  %1102 = vmatprep.subr.mxu0 0.0
  %1103 = vmatpush1.msra.mxu0 %v274
  %1104 = vmatprep.subr.mxu0 0.0
  %1105 = vmatpush1.msra.mxu0 %v275
  %1106 = vmatprep.subr.mxu0 0.0
  %1107 = vmatpush1.msra.mxu0 %v276
  %1108 = vmatprep.subr.mxu0 0.0
  %1109 = vmatpush1.msra.mxu0 0.0
  %1110 = vmatprep.subr.mxu0 0.0
  %1111 = vmatpush1.msra.mxu0 0.0
  %1112 = vmatprep.subr.mxu0 0.0
  %1113 = vmatpush1.msra.mxu0 0.0
  %1114 = vmatprep.subr.mxu0 0.0
  %1115 = vmatpush1.msra.mxu0 0.0
  %1116 = vmatprep.subr.mxu0 0.0
  %1117 = vmatpush1.msra.mxu0 0.0
  %1118 = vmatprep.subr.mxu0 0.0
  %1119 = vmatpush1.msra.mxu0 0.0
  %1120 = vmatprep.subr.mxu0 0.0
  %1121 = vmatpush1.msra.mxu0 0.0
  %1122 = vmatprep.subr.mxu0 0.0
  %1123 = vmatpush1.msra.mxu0 0.0
  %1124 = vmatprep.subr.mxu0 0.0
  %1125 = vmatpush1.msra.mxu0 0.0
  %1126 = vmatprep.subr.mxu0 0.0
  %1127 = vmatpush1.msra.mxu0 0.0
  %1128 = vmatprep.subr.mxu0 0.0
  %1129 = vmatpush1.msra.mxu0 0.0
  %1130 = vmatprep.subr.mxu0 0.0
  %1131 = vmatpush1.msra.mxu0 0.0
  %1132 = vmatprep.subr.mxu0 0.0
  %1133 = vmatpush1.msra.mxu0 0.0
  %1134 = vmatprep.subr.mxu0 0.0
  %1135 = vmatpush1.msra.mxu0 0.0
  %1136 = vmatprep.subr.mxu0 0.0
  %1137 = vmatpush1.msra.mxu0 0.0
  %1138 = vmatprep.subr.mxu0 0.0
  %1139 = vmatpush1.msra.mxu0 0.0
  %1140 = vmatprep.subr.mxu0 0.0
  %1141 = vmatpush1.msra.mxu0 0.0
  %1142 = vmatprep.subr.mxu0 0.0
  %1143 = vmatpush1.msra.mxu0 0.0
  %1144 = vmatprep.subr.mxu0 0.0
  %1145 = vmatpush1.msra.mxu0 0.0
  %1146 = vmatprep.subr.mxu0 0.0
  %1147 = vmatpush1.msra.mxu0 0.0
  %1148 = vmatprep.subr.mxu0 0.0
  %1149 = vmatpush1.msra.mxu0 0.0
  %1150 = vmatprep.subr.mxu0 0.0
  %1151 = vmatpush1.msra.mxu0 0.0
  %1152 = vmatprep.subr.mxu0 0.0
  %1153 = vmatpush1.msra.mxu0 0.0
  %1154 = vmatprep.subr.mxu0 0.0
  %1155 = vmatpush1.msra.mxu0 0.0
  %1156 = vmatprep.mubr.f32.mxu0 0.0
  %1157 = vmatmul.mubr.f32.gmra.mrb[0].mxu0 %v1090
  %v1158 = vpop.f32.mrb[0].mxu0
  %v1159 = vadd.f32 %v1086, %v1158
  %v1160 = vpop.f32.mrb[0].mxu0
  %1161 = vdwg.mxu0
  %v1162 = vadd.f32 %v1159, %v22
  %v1163 = vtanh.pop %v1162
  %s1164 = scalar_lea.vmem %s0, 12
  %v1165 = vld [vmem:[%s1164] sm:$0xf]
  %1166 = vmatprep.subr.mxu0 0.0
  %1167 = vmatpush1.msra.mxu0 %v24
  %1168 = vmatprep.subr.mxu0 0.0
  %1169 = vmatpush1.msra.mxu0 %v25
  %1170 = vmatprep.subr.mxu0 0.0
  %1171 = vmatpush1.msra.mxu0 %v26
  %1172 = vmatprep.subr.mxu0 0.0
  %1173 = vmatpush1.msra.mxu0 %v27
  %1174 = vmatprep.subr.mxu0 0.0
  %1175 = vmatpush1.msra.mxu0 %v28
  %1176 = vmatprep.subr.mxu0 0.0
  %1177 = vmatpush1.msra.mxu0 %v29
  %1178 = vmatprep.subr.mxu0 0.0
  %1179 = vmatpush1.msra.mxu0 %v30
  %1180 = vmatprep.subr.mxu0 0.0
  %1181 = vmatpush1.msra.mxu0 %v31
  %1182 = vmatprep.subr.mxu0 0.0
  %1183 = vmatpush1.msra.mxu0 0.0
  %1184 = vmatprep.subr.mxu0 0.0
  %1185 = vmatpush1.msra.mxu0 0.0
  %1186 = vmatprep.subr.mxu0 0.0
  %1187 = vmatpush1.msra.mxu0 0.0
  %1188 = vmatprep.subr.mxu0 0.0
  %1189 = vmatpush1.msra.mxu0 0.0
  %1190 = vmatprep.subr.mxu0 0.0
  %1191 = vmatpush1.msra.mxu0 0.0
  %1192 = vmatprep.subr.mxu0 0.0
  %1193 = vmatpush1.msra.mxu0 0.0
  %1194 = vmatprep.subr.mxu0 0.0
  %1195 = vmatpush1.msra.mxu0 0.0
  %1196 = vmatprep.subr.mxu0 0.0
  %1197 = vmatpush1.msra.mxu0 0.0
  %1198 = vmatprep.subr.mxu0 0.0
  %1199 = vmatpush1.msra.mxu0 0.0
  %1200 = vmatprep.subr.mxu0 0.0
  %1201 = vmatpush1.msra.mxu0 0.0
  %1202 = vmatprep.subr.mxu0 0.0
  %1203 = vmatpush1.msra.mxu0 0.0
  %1204 = vmatprep.subr.mxu0 0.0
  %1205 = vmatpush1.msra.mxu0 0.0
  %1206 = vmatprep.subr.mxu0 0.0
  %1207 = vmatpush1.msra.mxu0 0.0
  %1208 = vmatprep.subr.mxu0 0.0
  %1209 = vmatpush1.msra.mxu0 0.0
  %1210 = vmatprep.subr.mxu0 0.0
  %1211 = vmatpush1.msra.mxu0 0.0
  %1212 = vmatprep.subr.mxu0 0.0
  %1213 = vmatpush1.msra.mxu0 0.0
  %1214 = vmatprep.subr.mxu0 0.0
  %1215 = vmatpush1.msra.mxu0 0.0
  %1216 = vmatprep.subr.mxu0 0.0
  %1217 = vmatpush1.msra.mxu0 0.0
  %1218 = vmatprep.subr.mxu0 0.0
  %1219 = vmatpush1.msra.mxu0 0.0
  %1220 = vmatprep.subr.mxu0 0.0
  %1221 = vmatpush1.msra.mxu0 0.0
  %1222 = vmatprep.subr.mxu0 0.0
  %1223 = vmatpush1.msra.mxu0 0.0
  %1224 = vmatprep.subr.mxu0 0.0
  %1225 = vmatpush1.msra.mxu0 0.0
  %1226 = vmatprep.subr.mxu0 0.0
  %1227 = vmatpush1.msra.mxu0 0.0
  %1228 = vmatprep.subr.mxu0 0.0
  %1229 = vmatpush1.msra.mxu0 0.0
  %1230 = vmatprep.mubr.f32.mxu0 0.0
  %1231 = vmatmul.mubr.f32.gmra.mrb[0].mxu0 %v942
  %v1232 = vpop.f32.mrb[0].mxu0
  %v1233 = vadd.f32 0.0, %v1232
  %v1234 = vpop.f32.mrb[0].mxu0
  %1235 = vdwg.mxu0
  %v1236 = vadd.f32 %v1165, %v1233
  %v1237 = vtanh.pop %v1236
  %1238 = vmatprep.subr.mxu0 0.0
  %1239 = vmatpush1.msra.mxu0 %v116
  %1240 = vmatprep.subr.mxu0 0.0
  %1241 = vmatpush1.msra.mxu0 %v117
  %1242 = vmatprep.subr.mxu0 0.0
  %1243 = vmatpush1.msra.mxu0 %v118
  %1244 = vmatprep.subr.mxu0 0.0
  %1245 = vmatpush1.msra.mxu0 %v119
  %1246 = vmatprep.subr.mxu0 0.0
  %1247 = vmatpush1.msra.mxu0 %v120
  %1248 = vmatprep.subr.mxu0 0.0
  %1249 = vmatpush1.msra.mxu0 %v121
  %1250 = vmatprep.subr.mxu0 0.0
  %1251 = vmatpush1.msra.mxu0 %v122
  %1252 = vmatprep.subr.mxu0 0.0
  %1253 = vmatpush1.msra.mxu0 %v123
  %1254 = vmatprep.subr.mxu0 0.0
  %1255 = vmatpush1.msra.mxu0 0.0
  %1256 = vmatprep.subr.mxu0 0.0
  %1257 = vmatpush1.msra.mxu0 0.0
  %1258 = vmatprep.subr.mxu0 0.0
  %1259 = vmatpush1.msra.mxu0 0.0
  %1260 = vmatprep.subr.mxu0 0.0
  %1261 = vmatpush1.msra.mxu0 0.0
  %1262 = vmatprep.subr.mxu0 0.0
  %1263 = vmatpush1.msra.mxu0 0.0
  %1264 = vmatprep.subr.mxu0 0.0
  %1265 = vmatpush1.msra.mxu0 0.0
  %1266 = vmatprep.subr.mxu0 0.0
  %1267 = vmatpush1.msra.mxu0 0.0
  %1268 = vmatprep.subr.mxu0 0.0
  %1269 = vmatpush1.msra.mxu0 0.0
  %1270 = vmatprep.subr.mxu0 0.0
  %1271 = vmatpush1.msra.mxu0 0.0
  %1272 = vmatprep.subr.mxu0 0.0
  %1273 = vmatpush1.msra.mxu0 0.0
  %1274 = vmatprep.subr.mxu0 0.0
  %1275 = vmatpush1.msra.mxu0 0.0
  %1276 = vmatprep.subr.mxu0 0.0
  %1277 = vmatpush1.msra.mxu0 0.0
  %1278 = vmatprep.subr.mxu0 0.0
  %1279 = vmatpush1.msra.mxu0 0.0
  %1280 = vmatprep.subr.mxu0 0.0
  %1281 = vmatpush1.msra.mxu0 0.0
  %1282 = vmatprep.subr.mxu0 0.0
  %1283 = vmatpush1.msra.mxu0 0.0
  %1284 = vmatprep.subr.mxu0 0.0
  %1285 = vmatpush1.msra.mxu0 0.0
  %1286 = vmatprep.subr.mxu0 0.0
  %1287 = vmatpush1.msra.mxu0 0.0
  %1288 = vmatprep.subr.mxu0 0.0
  %1289 = vmatpush1.msra.mxu0 0.0
  %1290 = vmatprep.subr.mxu0 0.0
  %1291 = vmatpush1.msra.mxu0 0.0
  %1292 = vmatprep.subr.mxu0 0.0
  %1293 = vmatpush1.msra.mxu0 0.0
  %1294 = vmatprep.subr.mxu0 0.0
  %1295 = vmatpush1.msra.mxu0 0.0
  %1296 = vmatprep.subr.mxu0 0.0
  %1297 = vmatpush1.msra.mxu0 0.0
  %1298 = vmatprep.subr.mxu0 0.0
  %1299 = vmatpush1.msra.mxu0 0.0
  %1300 = vmatprep.subr.mxu0 0.0
  %1301 = vmatpush1.msra.mxu0 0.0
  %1302 = vmatprep.mubr.f32.mxu0 0.0
  %1303 = vmatmul.mubr.f32.gmra.mrb[0].mxu0 %v1090
  %v1304 = vpop.f32.mrb[0].mxu0
  %v1305 = vadd.f32 0.0, %v1304
  %v1306 = vpop.f32.mrb[0].mxu0
  %1307 = vdwg.mxu0
  %v1309 = vsel %vm32, %v1237, 0
  %1311 = vmatprep.subr.mxu0 0.0
  %1312 = vmatpush1.msra.mxu0 %v108
  %1313 = vmatprep.subr.mxu0 0.0
  %1314 = vmatpush1.msra.mxu0 %v109
  %1315 = vmatprep.subr.mxu0 0.0
  %1316 = vmatpush1.msra.mxu0 %v110
  %1317 = vmatprep.subr.mxu0 0.0
  %1318 = vmatpush1.msra.mxu0 %v111
  %1319 = vmatprep.subr.mxu0 0.0
  %1320 = vmatpush1.msra.mxu0 %v112
  %1321 = vmatprep.subr.mxu0 0.0
  %1322 = vmatpush1.msra.mxu0 %v113
  %1323 = vmatprep.subr.mxu0 0.0
  %1324 = vmatpush1.msra.mxu0 %v114
  %1325 = vmatprep.subr.mxu0 0.0
  %1326 = vmatpush1.msra.mxu0 %v115
  %1327 = vmatprep.subr.mxu0 0.0
  %1328 = vmatpush1.msra.mxu0 0.0
  %1329 = vmatprep.subr.mxu0 0.0
  %1330 = vmatpush1.msra.mxu0 0.0
  %1331 = vmatprep.subr.mxu0 0.0
  %1332 = vmatpush1.msra.mxu0 0.0
  %1333 = vmatprep.subr.mxu0 0.0
  %1334 = vmatpush1.msra.mxu0 0.0
  %1335 = vmatprep.subr.mxu0 0.0
  %1336 = vmatpush1.msra.mxu0 0.0
  %1337 = vmatprep.subr.mxu0 0.0
  %1338 = vmatpush1.msra.mxu0 0.0
  %1339 = vmatprep.subr.mxu0 0.0
  %1340 = vmatpush1.msra.mxu0 0.0
  %1341 = vmatprep.subr.mxu0 0.0
  %1342 = vmatpush1.msra.mxu0 0.0
  %1343 = vmatprep.subr.mxu0 0.0
  %1344 = vmatpush1.msra.mxu0 0.0
  %1345 = vmatprep.subr.mxu0 0.0
  %1346 = vmatpush1.msra.mxu0 0.0
  %1347 = vmatprep.subr.mxu0 0.0
  %1348 = vmatpush1.msra.mxu0 0.0
  %1349 = vmatprep.subr.mxu0 0.0
  %1350 = vmatpush1.msra.mxu0 0.0
  %1351 = vmatprep.subr.mxu0 0.0
  %1352 = vmatpush1.msra.mxu0 0.0
  %1353 = vmatprep.subr.mxu0 0.0
  %1354 = vmatpush1.msra.mxu0 0.0
  %1355 = vmatprep.subr.mxu0 0.0
  %1356 = vmatpush1.msra.mxu0 0.0
  %1357 = vmatprep.subr.mxu0 0.0
  %1358 = vmatpush1.msra.mxu0 0.0
  %1359 = vmatprep.subr.mxu0 0.0
  %1360 = vmatpush1.msra.mxu0 0.0
  %1361 = vmatprep.subr.mxu0 0.0
  %1362 = vmatpush1.msra.mxu0 0.0
  %1363 = vmatprep.subr.mxu0 0.0
  %1364 = vmatpush1.msra.mxu0 0.0
  %1365 = vmatprep.subr.mxu0 0.0
  %1366 = vmatpush1.msra.mxu0 0.0
  %1367 = vmatprep.subr.mxu0 0.0
  %1368 = vmatpush1.msra.mxu0 0.0
  %1369 = vmatprep.subr.mxu0 0.0
  %1370 = vmatpush1.msra.mxu0 0.0
  %1371 = vmatprep.subr.mxu0 0.0
  %1372 = vmatpush1.msra.mxu0 0.0
  %1373 = vmatprep.subr.mxu0 0.0
  %1374 = vmatpush1.msra.mxu0 0.0
  %1375 = vmatprep.mubr.f32.mxu0 0.0
  %1376 = vmatmul.mubr.f32.gmra.mrb[0].mxu0 %v1309
  %v1377 = vpop.f32.mrb[0].mxu0
  %v1378 = vadd.f32 %v1305, %v1377
  %v1379 = vpop.f32.mrb[0].mxu0
  %1380 = vdwg.mxu0
  %v1381 = vadd.f32 %v1378, %v18
  %v1382 = vtanh.pop %v1381
  %v1384 = vsel %vm32, %v1163, 0
  %1386 = vmatprep.subr.mxu0 0.0
  %1387 = vmatpush1.msra.mxu0 %v277
  %1388 = vmatprep.subr.mxu0 0.0
  %1389 = vmatpush1.msra.mxu0 %v278
  %1390 = vmatprep.subr.mxu0 0.0
  %1391 = vmatpush1.msra.mxu0 %v279
  %1392 = vmatprep.subr.mxu0 0.0
  %1393 = vmatpush1.msra.mxu0 %v280
  %1394 = vmatprep.subr.mxu0 0.0
  %1395 = vmatpush1.msra.mxu0 %v281
  %1396 = vmatprep.subr.mxu0 0.0
  %1397 = vmatpush1.msra.mxu0 %v282
  %1398 = vmatprep.subr.mxu0 0.0
  %1399 = vmatpush1.msra.mxu0 %v283
  %1400 = vmatprep.subr.mxu0 0.0
  %1401 = vmatpush1.msra.mxu0 %v284
  %1402 = vmatprep.subr.mxu0 0.0
  %1403 = vmatpush1.msra.mxu0 0.0
  %1404 = vmatprep.subr.mxu0 0.0
  %1405 = vmatpush1.msra.mxu0 0.0
  %1406 = vmatprep.subr.mxu0 0.0
  %1407 = vmatpush1.msra.mxu0 0.0
  %1408 = vmatprep.subr.mxu0 0.0
  %1409 = vmatpush1.msra.mxu0 0.0
  %1410 = vmatprep.subr.mxu0 0.0
  %1411 = vmatpush1.msra.mxu0 0.0
  %1412 = vmatprep.subr.mxu0 0.0
  %1413 = vmatpush1.msra.mxu0 0.0
  %1414 = vmatprep.subr.mxu0 0.0
  %1415 = vmatpush1.msra.mxu0 0.0
  %1416 = vmatprep.subr.mxu0 0.0
  %1417 = vmatpush1.msra.mxu0 0.0
  %1418 = vmatprep.subr.mxu0 0.0
  %1419 = vmatpush1.msra.mxu0 0.0
  %1420 = vmatprep.subr.mxu0 0.0
  %1421 = vmatpush1.msra.mxu0 0.0
  %1422 = vmatprep.subr.mxu0 0.0
  %1423 = vmatpush1.msra.mxu0 0.0
  %1424 = vmatprep.subr.mxu0 0.0
  %1425 = vmatpush1.msra.mxu0 0.0
  %1426 = vmatprep.subr.mxu0 0.0
  %1427 = vmatpush1.msra.mxu0 0.0
  %1428 = vmatprep.subr.mxu0 0.0
  %1429 = vmatpush1.msra.mxu0 0.0
  %1430 = vmatprep.subr.mxu0 0.0
  %1431 = vmatpush1.msra.mxu0 0.0
  %1432 = vmatprep.subr.mxu0 0.0
  %1433 = vmatpush1.msra.mxu0 0.0
  %1434 = vmatprep.subr.mxu0 0.0
  %1435 = vmatpush1.msra.mxu0 0.0
  %1436 = vmatprep.subr.mxu0 0.0
  %1437 = vmatpush1.msra.mxu0 0.0
  %1438 = vmatprep.subr.mxu0 0.0
  %1439 = vmatpush1.msra.mxu0 0.0
  %1440 = vmatprep.subr.mxu0 0.0
  %1441 = vmatpush1.msra.mxu0 0.0
  %1442 = vmatprep.subr.mxu0 0.0
  %1443 = vmatpush1.msra.mxu0 0.0
  %1444 = vmatprep.subr.mxu0 0.0
  %1445 = vmatpush1.msra.mxu0 0.0
  %1446 = vmatprep.subr.mxu0 0.0
  %1447 = vmatpush1.msra.mxu0 0.0
  %1448 = vmatprep.subr.mxu0 0.0
  %1449 = vmatpush1.msra.mxu0 0.0
  %1450 = vmatprep.mubr.f32.mxu0 0.0
  %1451 = vmatmul.mubr.f32.gmra.mrb[0].mxu0 %v1384
  %v1452 = vpop.f32.mrb[0].mxu0
  %v1453 = vadd.f32 0.0, %v1452
  %v1454 = vpop.f32.mrb[0].mxu0
  %1455 = vdwg.mxu0
  %v1457 = vsel %vm32, %v1382, 0
  %1459 = vmatprep.subr.mxu0 0.0
  %1460 = vmatpush1.msra.mxu0 %v269
  %1461 = vmatprep.subr.mxu0 0.0
  %1462 = vmatpush1.msra.mxu0 %v270
  %1463 = vmatprep.subr.mxu0 0.0
  %1464 = vmatpush1.msra.mxu0 %v271
  %1465 = vmatprep.subr.mxu0 0.0
  %1466 = vmatpush1.msra.mxu0 %v272
  %1467 = vmatprep.subr.mxu0 0.0
  %1468 = vmatpush1.msra.mxu0 %v273
  %1469 = vmatprep.subr.mxu0 0.0
  %1470 = vmatpush1.msra.mxu0 %v274
  %1471 = vmatprep.subr.mxu0 0.0
  %1472 = vmatpush1.msra.mxu0 %v275
  %1473 = vmatprep.subr.mxu0 0.0
  %1474 = vmatpush1.msra.mxu0 %v276
  %1475 = vmatprep.subr.mxu0 0.0
  %1476 = vmatpush1.msra.mxu0 0.0
  %1477 = vmatprep.subr.mxu0 0.0
  %1478 = vmatpush1.msra.mxu0 0.0
  %1479 = vmatprep.subr.mxu0 0.0
  %1480 = vmatpush1.msra.mxu0 0.0
  %1481 = vmatprep.subr.mxu0 0.0
  %1482 = vmatpush1.msra.mxu0 0.0
  %1483 = vmatprep.subr.mxu0 0.0
  %1484 = vmatpush1.msra.mxu0 0.0
  %1485 = vmatprep.subr.mxu0 0.0
  %1486 = vmatpush1.msra.mxu0 0.0
  %1487 = vmatprep.subr.mxu0 0.0
  %1488 = vmatpush1.msra.mxu0 0.0
  %1489 = vmatprep.subr.mxu0 0.0
  %1490 = vmatpush1.msra.mxu0 0.0
  %1491 = vmatprep.subr.mxu0 0.0
  %1492 = vmatpush1.msra.mxu0 0.0
  %1493 = vmatprep.subr.mxu0 0.0
  %1494 = vmatpush1.msra.mxu0 0.0
  %1495 = vmatprep.subr.mxu0 0.0
  %1496 = vmatpush1.msra.mxu0 0.0
  %1497 = vmatprep.subr.mxu0 0.0
  %1498 = vmatpush1.msra.mxu0 0.0
  %1499 = vmatprep.subr.mxu0 0.0
  %1500 = vmatpush1.msra.mxu0 0.0
  %1501 = vmatprep.subr.mxu0 0.0
  %1502 = vmatpush1.msra.mxu0 0.0
  %1503 = vmatprep.subr.mxu0 0.0
  %1504 = vmatpush1.msra.mxu0 0.0
  %1505 = vmatprep.subr.mxu0 0.0
  %1506 = vmatpush1.msra.mxu0 0.0
  %1507 = vmatprep.subr.mxu0 0.0
  %1508 = vmatpush1.msra.mxu0 0.0
  %1509 = vmatprep.subr.mxu0 0.0
  %1510 = vmatpush1.msra.mxu0 0.0
  %1511 = vmatprep.subr.mxu0 0.0
  %1512 = vmatpush1.msra.mxu0 0.0
  %1513 = vmatprep.subr.mxu0 0.0
  %1514 = vmatpush1.msra.mxu0 0.0
  %1515 = vmatprep.subr.mxu0 0.0
  %1516 = vmatpush1.msra.mxu0 0.0
  %1517 = vmatprep.subr.mxu0 0.0
  %1518 = vmatpush1.msra.mxu0 0.0
  %1519 = vmatprep.subr.mxu0 0.0
  %1520 = vmatpush1.msra.mxu0 0.0
  %1521 = vmatprep.subr.mxu0 0.0
  %1522 = vmatpush1.msra.mxu0 0.0
  %1523 = vmatprep.mubr.f32.mxu0 0.0
  %1524 = vmatmul.mubr.f32.gmra.mrb[0].mxu0 %v1457
  %v1525 = vpop.f32.mrb[0].mxu0
  %v1526 = vadd.f32 %v1453, %v1525
  %v1527 = vpop.f32.mrb[0].mxu0
  %1528 = vdwg.mxu0
  %v1529 = vadd.f32 %v1526, %v22
  %v1530 = vtanh.pop %v1529
  %s1531 = scalar_lea.vmem %s0, 16
  %v1532 = vld [vmem:[%s1531] sm:$0xf]
  %1533 = vmatprep.subr.mxu0 0.0
  %1534 = vmatpush1.msra.mxu0 %v24
  %1535 = vmatprep.subr.mxu0 0.0
  %1536 = vmatpush1.msra.mxu0 %v25
  %1537 = vmatprep.subr.mxu0 0.0
  %1538 = vmatpush1.msra.mxu0 %v26
  %1539 = vmatprep.subr.mxu0 0.0
  %1540 = vmatpush1.msra.mxu0 %v27
  %1541 = vmatprep.subr.mxu0 0.0
  %1542 = vmatpush1.msra.mxu0 %v28
  %1543 = vmatprep.subr.mxu0 0.0
  %1544 = vmatpush1.msra.mxu0 %v29
  %1545 = vmatprep.subr.mxu0 0.0
  %1546 = vmatpush1.msra.mxu0 %v30
  %1547 = vmatprep.subr.mxu0 0.0
  %1548 = vmatpush1.msra.mxu0 %v31
  %1549 = vmatprep.subr.mxu0 0.0
  %1550 = vmatpush1.msra.mxu0 0.0
  %1551 = vmatprep.subr.mxu0 0.0
  %1552 = vmatpush1.msra.mxu0 0.0
  %1553 = vmatprep.subr.mxu0 0.0
  %1554 = vmatpush1.msra.mxu0 0.0
  %1555 = vmatprep.subr.mxu0 0.0
  %1556 = vmatpush1.msra.mxu0 0.0
  %1557 = vmatprep.subr.mxu0 0.0
  %1558 = vmatpush1.msra.mxu0 0.0
  %1559 = vmatprep.subr.mxu0 0.0
  %1560 = vmatpush1.msra.mxu0 0.0
  %1561 = vmatprep.subr.mxu0 0.0
  %1562 = vmatpush1.msra.mxu0 0.0
  %1563 = vmatprep.subr.mxu0 0.0
  %1564 = vmatpush1.msra.mxu0 0.0
  %1565 = vmatprep.subr.mxu0 0.0
  %1566 = vmatpush1.msra.mxu0 0.0
  %1567 = vmatprep.subr.mxu0 0.0
  %1568 = vmatpush1.msra.mxu0 0.0
  %1569 = vmatprep.subr.mxu0 0.0
  %1570 = vmatpush1.msra.mxu0 0.0
  %1571 = vmatprep.subr.mxu0 0.0
  %1572 = vmatpush1.msra.mxu0 0.0
  %1573 = vmatprep.subr.mxu0 0.0
  %1574 = vmatpush1.msra.mxu0 0.0
  %1575 = vmatprep.subr.mxu0 0.0
  %1576 = vmatpush1.msra.mxu0 0.0
  %1577 = vmatprep.subr.mxu0 0.0
  %1578 = vmatpush1.msra.mxu0 0.0
  %1579 = vmatprep.subr.mxu0 0.0
  %1580 = vmatpush1.msra.mxu0 0.0
  %1581 = vmatprep.subr.mxu0 0.0
  %1582 = vmatpush1.msra.mxu0 0.0
  %1583 = vmatprep.subr.mxu0 0.0
  %1584 = vmatpush1.msra.mxu0 0.0
  %1585 = vmatprep.subr.mxu0 0.0
  %1586 = vmatpush1.msra.mxu0 0.0
  %1587 = vmatprep.subr.mxu0 0.0
  %1588 = vmatpush1.msra.mxu0 0.0
  %1589 = vmatprep.subr.mxu0 0.0
  %1590 = vmatpush1.msra.mxu0 0.0
  %1591 = vmatprep.subr.mxu0 0.0
  %1592 = vmatpush1.msra.mxu0 0.0
  %1593 = vmatprep.subr.mxu0 0.0
  %1594 = vmatpush1.msra.mxu0 0.0
  %1595 = vmatprep.subr.mxu0 0.0
  %1596 = vmatpush1.msra.mxu0 0.0
  %1597 = vmatprep.mubr.f32.mxu0 0.0
  %1598 = vmatmul.mubr.f32.gmra.mrb[0].mxu0 %v1309
  %v1599 = vpop.f32.mrb[0].mxu0
  %v1600 = vadd.f32 0.0, %v1599
  %v1601 = vpop.f32.mrb[0].mxu0
  %1602 = vdwg.mxu0
  %v1603 = vadd.f32 %v1532, %v1600
  %v1604 = vtanh.pop %v1603
  %1605 = vmatprep.subr.mxu0 0.0
  %1606 = vmatpush1.msra.mxu0 %v116
  %1607 = vmatprep.subr.mxu0 0.0
  %1608 = vmatpush1.msra.mxu0 %v117
  %1609 = vmatprep.subr.mxu0 0.0
  %1610 = vmatpush1.msra.mxu0 %v118
  %1611 = vmatprep.subr.mxu0 0.0
  %1612 = vmatpush1.msra.mxu0 %v119
  %1613 = vmatprep.subr.mxu0 0.0
  %1614 = vmatpush1.msra.mxu0 %v120
  %1615 = vmatprep.subr.mxu0 0.0
  %1616 = vmatpush1.msra.mxu0 %v121
  %1617 = vmatprep.subr.mxu0 0.0
  %1618 = vmatpush1.msra.mxu0 %v122
  %1619 = vmatprep.subr.mxu0 0.0
  %1620 = vmatpush1.msra.mxu0 %v123
  %1621 = vmatprep.subr.mxu0 0.0
  %1622 = vmatpush1.msra.mxu0 0.0
  %1623 = vmatprep.subr.mxu0 0.0
  %1624 = vmatpush1.msra.mxu0 0.0
  %1625 = vmatprep.subr.mxu0 0.0
  %1626 = vmatpush1.msra.mxu0 0.0
  %1627 = vmatprep.subr.mxu0 0.0
  %1628 = vmatpush1.msra.mxu0 0.0
  %1629 = vmatprep.subr.mxu0 0.0
  %1630 = vmatpush1.msra.mxu0 0.0
  %1631 = vmatprep.subr.mxu0 0.0
  %1632 = vmatpush1.msra.mxu0 0.0
  %1633 = vmatprep.subr.mxu0 0.0
  %1634 = vmatpush1.msra.mxu0 0.0
  %1635 = vmatprep.subr.mxu0 0.0
  %1636 = vmatpush1.msra.mxu0 0.0
  %1637 = vmatprep.subr.mxu0 0.0
  %1638 = vmatpush1.msra.mxu0 0.0
  %1639 = vmatprep.subr.mxu0 0.0
  %1640 = vmatpush1.msra.mxu0 0.0
  %1641 = vmatprep.subr.mxu0 0.0
  %1642 = vmatpush1.msra.mxu0 0.0
  %1643 = vmatprep.subr.mxu0 0.0
  %1644 = vmatpush1.msra.mxu0 0.0
  %1645 = vmatprep.subr.mxu0 0.0
  %1646 = vmatpush1.msra.mxu0 0.0
  %1647 = vmatprep.subr.mxu0 0.0
  %1648 = vmatpush1.msra.mxu0 0.0
  %1649 = vmatprep.subr.mxu0 0.0
  %1650 = vmatpush1.msra.mxu0 0.0
  %1651 = vmatprep.subr.mxu0 0.0
  %1652 = vmatpush1.msra.mxu0 0.0
  %1653 = vmatprep.subr.mxu0 0.0
  %1654 = vmatpush1.msra.mxu0 0.0
  %1655 = vmatprep.subr.mxu0 0.0
  %1656 = vmatpush1.msra.mxu0 0.0
  %1657 = vmatprep.subr.mxu0 0.0
  %1658 = vmatpush1.msra.mxu0 0.0
  %1659 = vmatprep.subr.mxu0 0.0
  %1660 = vmatpush1.msra.mxu0 0.0
  %1661 = vmatprep.subr.mxu0 0.0
  %1662 = vmatpush1.msra.mxu0 0.0
  %1663 = vmatprep.subr.mxu0 0.0
  %1664 = vmatpush1.msra.mxu0 0.0
  %1665 = vmatprep.subr.mxu0 0.0
  %1666 = vmatpush1.msra.mxu0 0.0
  %1667 = vmatprep.subr.mxu0 0.0
  %1668 = vmatpush1.msra.mxu0 0.0
  %1669 = vmatprep.mubr.f32.mxu0 0.0
  %1670 = vmatmul.mubr.f32.gmra.mrb[0].mxu0 %v1457
  %v1671 = vpop.f32.mrb[0].mxu0
  %v1672 = vadd.f32 0.0, %v1671
  %v1673 = vpop.f32.mrb[0].mxu0
  %1674 = vdwg.mxu0
  %v1676 = vsel %vm32, %v1604, 0
  %1678 = vmatprep.subr.mxu0 0.0
  %1679 = vmatpush1.msra.mxu0 %v108
  %1680 = vmatprep.subr.mxu0 0.0
  %1681 = vmatpush1.msra.mxu0 %v109
  %1682 = vmatprep.subr.mxu0 0.0
  %1683 = vmatpush1.msra.mxu0 %v110
  %1684 = vmatprep.subr.mxu0 0.0
  %1685 = vmatpush1.msra.mxu0 %v111
  %1686 = vmatprep.subr.mxu0 0.0
  %1687 = vmatpush1.msra.mxu0 %v112
  %1688 = vmatprep.subr.mxu0 0.0
  %1689 = vmatpush1.msra.mxu0 %v113
  %1690 = vmatprep.subr.mxu0 0.0
  %1691 = vmatpush1.msra.mxu0 %v114
  %1692 = vmatprep.subr.mxu0 0.0
  %1693 = vmatpush1.msra.mxu0 %v115
  %1694 = vmatprep.subr.mxu0 0.0
  %1695 = vmatpush1.msra.mxu0 0.0
  %1696 = vmatprep.subr.mxu0 0.0
  %1697 = vmatpush1.msra.mxu0 0.0
  %1698 = vmatprep.subr.mxu0 0.0
  %1699 = vmatpush1.msra.mxu0 0.0
  %1700 = vmatprep.subr.mxu0 0.0
  %1701 = vmatpush1.msra.mxu0 0.0
  %1702 = vmatprep.subr.mxu0 0.0
  %1703 = vmatpush1.msra.mxu0 0.0
  %1704 = vmatprep.subr.mxu0 0.0
  %1705 = vmatpush1.msra.mxu0 0.0
  %1706 = vmatprep.subr.mxu0 0.0
  %1707 = vmatpush1.msra.mxu0 0.0
  %1708 = vmatprep.subr.mxu0 0.0
  %1709 = vmatpush1.msra.mxu0 0.0
  %1710 = vmatprep.subr.mxu0 0.0
  %1711 = vmatpush1.msra.mxu0 0.0
  %1712 = vmatprep.subr.mxu0 0.0
  %1713 = vmatpush1.msra.mxu0 0.0
  %1714 = vmatprep.subr.mxu0 0.0
  %1715 = vmatpush1.msra.mxu0 0.0
  %1716 = vmatprep.subr.mxu0 0.0
  %1717 = vmatpush1.msra.mxu0 0.0
  %1718 = vmatprep.subr.mxu0 0.0
  %1719 = vmatpush1.msra.mxu0 0.0
  %1720 = vmatprep.subr.mxu0 0.0
  %1721 = vmatpush1.msra.mxu0 0.0
  %1722 = vmatprep.subr.mxu0 0.0
  %1723 = vmatpush1.msra.mxu0 0.0
  %1724 = vmatprep.subr.mxu0 0.0
  %1725 = vmatpush1.msra.mxu0 0.0
  %1726 = vmatprep.subr.mxu0 0.0
  %1727 = vmatpush1.msra.mxu0 0.0
  %1728 = vmatprep.subr.mxu0 0.0
  %1729 = vmatpush1.msra.mxu0 0.0
  %1730 = vmatprep.subr.mxu0 0.0
  %1731 = vmatpush1.msra.mxu0 0.0
  %1732 = vmatprep.subr.mxu0 0.0
  %1733 = vmatpush1.msra.mxu0 0.0
  %1734 = vmatprep.subr.mxu0 0.0
  %1735 = vmatpush1.msra.mxu0 0.0
  %1736 = vmatprep.subr.mxu0 0.0
  %1737 = vmatpush1.msra.mxu0 0.0
  %1738 = vmatprep.subr.mxu0 0.0
  %1739 = vmatpush1.msra.mxu0 0.0
  %1740 = vmatprep.subr.mxu0 0.0
  %1741 = vmatpush1.msra.mxu0 0.0
  %1742 = vmatprep.mubr.f32.mxu0 0.0
  %1743 = vmatmul.mubr.f32.gmra.mrb[0].mxu0 %v1676
  %v1744 = vpop.f32.mrb[0].mxu0
  %v1745 = vadd.f32 %v1672, %v1744
  %v1746 = vpop.f32.mrb[0].mxu0
  %1747 = vdwg.mxu0
  %v1748 = vadd.f32 %v1745, %v18
  %v1749 = vtanh.pop %v1748
  %v1751 = vsel %vm32, %v1530, 0
  %1753 = vmatprep.subr.mxu0 0.0
  %1754 = vmatpush1.msra.mxu0 %v277
  %1755 = vmatprep.subr.mxu0 0.0
  %1756 = vmatpush1.msra.mxu0 %v278
  %1757 = vmatprep.subr.mxu0 0.0
  %1758 = vmatpush1.msra.mxu0 %v279
  %1759 = vmatprep.subr.mxu0 0.0
  %1760 = vmatpush1.msra.mxu0 %v280
  %1761 = vmatprep.subr.mxu0 0.0
  %1762 = vmatpush1.msra.mxu0 %v281
  %1763 = vmatprep.subr.mxu0 0.0
  %1764 = vmatpush1.msra.mxu0 %v282
  %1765 = vmatprep.subr.mxu0 0.0
  %1766 = vmatpush1.msra.mxu0 %v283
  %1767 = vmatprep.subr.mxu0 0.0
  %1768 = vmatpush1.msra.mxu0 %v284
  %1769 = vmatprep.subr.mxu0 0.0
  %1770 = vmatpush1.msra.mxu0 0.0
  %1771 = vmatprep.subr.mxu0 0.0
  %1772 = vmatpush1.msra.mxu0 0.0
  %1773 = vmatprep.subr.mxu0 0.0
  %1774 = vmatpush1.msra.mxu0 0.0
  %1775 = vmatprep.subr.mxu0 0.0
  %1776 = vmatpush1.msra.mxu0 0.0
  %1777 = vmatprep.subr.mxu0 0.0
  %1778 = vmatpush1.msra.mxu0 0.0
  %1779 = vmatprep.subr.mxu0 0.0
  %1780 = vmatpush1.msra.mxu0 0.0
  %1781 = vmatprep.subr.mxu0 0.0
  %1782 = vmatpush1.msra.mxu0 0.0
  %1783 = vmatprep.subr.mxu0 0.0
  %1784 = vmatpush1.msra.mxu0 0.0
  %1785 = vmatprep.subr.mxu0 0.0
  %1786 = vmatpush1.msra.mxu0 0.0
  %1787 = vmatprep.subr.mxu0 0.0
  %1788 = vmatpush1.msra.mxu0 0.0
  %1789 = vmatprep.subr.mxu0 0.0
  %1790 = vmatpush1.msra.mxu0 0.0
  %1791 = vmatprep.subr.mxu0 0.0
  %1792 = vmatpush1.msra.mxu0 0.0
  %1793 = vmatprep.subr.mxu0 0.0
  %1794 = vmatpush1.msra.mxu0 0.0
  %1795 = vmatprep.subr.mxu0 0.0
  %1796 = vmatpush1.msra.mxu0 0.0
  %1797 = vmatprep.subr.mxu0 0.0
  %1798 = vmatpush1.msra.mxu0 0.0
  %1799 = vmatprep.subr.mxu0 0.0
  %1800 = vmatpush1.msra.mxu0 0.0
  %1801 = vmatprep.subr.mxu0 0.0
  %1802 = vmatpush1.msra.mxu0 0.0
  %1803 = vmatprep.subr.mxu0 0.0
  %1804 = vmatpush1.msra.mxu0 0.0
  %1805 = vmatprep.subr.mxu0 0.0
  %1806 = vmatpush1.msra.mxu0 0.0
  %1807 = vmatprep.subr.mxu0 0.0
  %1808 = vmatpush1.msra.mxu0 0.0
  %1809 = vmatprep.subr.mxu0 0.0
  %1810 = vmatpush1.msra.mxu0 0.0
  %1811 = vmatprep.subr.mxu0 0.0
  %1812 = vmatpush1.msra.mxu0 0.0
  %1813 = vmatprep.subr.mxu0 0.0
  %1814 = vmatpush1.msra.mxu0 0.0
  %1815 = vmatprep.subr.mxu0 0.0
  %1816 = vmatpush1.msra.mxu0 0.0
  %1817 = vmatprep.mubr.f32.mxu0 0.0
  %1818 = vmatmul.mubr.f32.gmra.mrb[0].mxu0 %v1751
  %v1819 = vpop.f32.mrb[0].mxu0
  %v1820 = vadd.f32 0.0, %v1819
  %v1821 = vpop.f32.mrb[0].mxu0
  %1822 = vdwg.mxu0
  %v1824 = vsel %vm32, %v1749, 0
  %1826 = vmatprep.subr.mxu0 0.0
  %1827 = vmatpush1.msra.mxu0 %v269
  %1828 = vmatprep.subr.mxu0 0.0
  %1829 = vmatpush1.msra.mxu0 %v270
  %1830 = vmatprep.subr.mxu0 0.0
  %1831 = vmatpush1.msra.mxu0 %v271
  %1832 = vmatprep.subr.mxu0 0.0
  %1833 = vmatpush1.msra.mxu0 %v272
  %1834 = vmatprep.subr.mxu0 0.0
  %1835 = vmatpush1.msra.mxu0 %v273
  %1836 = vmatprep.subr.mxu0 0.0
  %1837 = vmatpush1.msra.mxu0 %v274
  %1838 = vmatprep.subr.mxu0 0.0
  %1839 = vmatpush1.msra.mxu0 %v275
  %1840 = vmatprep.subr.mxu0 0.0
  %1841 = vmatpush1.msra.mxu0 %v276
  %1842 = vmatprep.subr.mxu0 0.0
  %1843 = vmatpush1.msra.mxu0 0.0
  %1844 = vmatprep.subr.mxu0 0.0
  %1845 = vmatpush1.msra.mxu0 0.0
  %1846 = vmatprep.subr.mxu0 0.0
  %1847 = vmatpush1.msra.mxu0 0.0
  %1848 = vmatprep.subr.mxu0 0.0
  %1849 = vmatpush1.msra.mxu0 0.0
  %1850 = vmatprep.subr.mxu0 0.0
  %1851 = vmatpush1.msra.mxu0 0.0
  %1852 = vmatprep.subr.mxu0 0.0
  %1853 = vmatpush1.msra.mxu0 0.0
  %1854 = vmatprep.subr.mxu0 0.0
  %1855 = vmatpush1.msra.mxu0 0.0
  %1856 = vmatprep.subr.mxu0 0.0
  %1857 = vmatpush1.msra.mxu0 0.0
  %1858 = vmatprep.subr.mxu0 0.0
  %1859 = vmatpush1.msra.mxu0 0.0
  %1860 = vmatprep.subr.mxu0 0.0
  %1861 = vmatpush1.msra.mxu0 0.0
  %1862 = vmatprep.subr.mxu0 0.0
  %1863 = vmatpush1.msra.mxu0 0.0
  %1864 = vmatprep.subr.mxu0 0.0
  %1865 = vmatpush1.msra.mxu0 0.0
  %1866 = vmatprep.subr.mxu0 0.0
  %1867 = vmatpush1.msra.mxu0 0.0
  %1868 = vmatprep.subr.mxu0 0.0
  %1869 = vmatpush1.msra.mxu0 0.0
  %1870 = vmatprep.subr.mxu0 0.0
  %1871 = vmatpush1.msra.mxu0 0.0
  %1872 = vmatprep.subr.mxu0 0.0
  %1873 = vmatpush1.msra.mxu0 0.0
  %1874 = vmatprep.subr.mxu0 0.0
  %1875 = vmatpush1.msra.mxu0 0.0
  %1876 = vmatprep.subr.mxu0 0.0
  %1877 = vmatpush1.msra.mxu0 0.0
  %1878 = vmatprep.subr.mxu0 0.0
  %1879 = vmatpush1.msra.mxu0 0.0
  %1880 = vmatprep.subr.mxu0 0.0
  %1881 = vmatpush1.msra.mxu0 0.0
  %1882 = vmatprep.subr.mxu0 0.0
  %1883 = vmatpush1.msra.mxu0 0.0
  %1884 = vmatprep.subr.mxu0 0.0
  %1885 = vmatpush1.msra.mxu0 0.0
  %1886 = vmatprep.subr.mxu0 0.0
  %1887 = vmatpush1.msra.mxu0 0.0
  %1888 = vmatprep.subr.mxu0 0.0
  %1889 = vmatpush1.msra.mxu0 0.0
  %1890 = vmatprep.mubr.f32.mxu0 0.0
  %1891 = vmatmul.mubr.f32.gmra.mrb[0].mxu0 %v1824
  %v1892 = vpop.f32.mrb[0].mxu0
  %v1893 = vadd.f32 %v1820, %v1892
  %v1894 = vpop.f32.mrb[0].mxu0
  %1895 = vdwg.mxu0
  %v1896 = vadd.f32 %v1893, %v22
  %v1897 = vtanh.pop %v1896
  %s1898 = scalar_lea.vmem %s0, 20
  %v1899 = vld [vmem:[%s1898] sm:$0xf]
  %1900 = vmatprep.subr.mxu0 0.0
  %1901 = vmatpush1.msra.mxu0 %v24
  %1902 = vmatprep.subr.mxu0 0.0
  %1903 = vmatpush1.msra.mxu0 %v25
  %1904 = vmatprep.subr.mxu0 0.0
  %1905 = vmatpush1.msra.mxu0 %v26
  %1906 = vmatprep.subr.mxu0 0.0
  %1907 = vmatpush1.msra.mxu0 %v27
  %1908 = vmatprep.subr.mxu0 0.0
  %1909 = vmatpush1.msra.mxu0 %v28
  %1910 = vmatprep.subr.mxu0 0.0
  %1911 = vmatpush1.msra.mxu0 %v29
  %1912 = vmatprep.subr.mxu0 0.0
  %1913 = vmatpush1.msra.mxu0 %v30
  %1914 = vmatprep.subr.mxu0 0.0
  %1915 = vmatpush1.msra.mxu0 %v31
  %1916 = vmatprep.subr.mxu0 0.0
  %1917 = vmatpush1.msra.mxu0 0.0
  %1918 = vmatprep.subr.mxu0 0.0
  %1919 = vmatpush1.msra.mxu0 0.0
  %1920 = vmatprep.subr.mxu0 0.0
  %1921 = vmatpush1.msra.mxu0 0.0
  %1922 = vmatprep.subr.mxu0 0.0
  %1923 = vmatpush1.msra.mxu0 0.0
  %1924 = vmatprep.subr.mxu0 0.0
  %1925 = vmatpush1.msra.mxu0 0.0
  %1926 = vmatprep.subr.mxu0 0.0
  %1927 = vmatpush1.msra.mxu0 0.0
  %1928 = vmatprep.subr.mxu0 0.0
  %1929 = vmatpush1.msra.mxu0 0.0
  %1930 = vmatprep.subr.mxu0 0.0
  %1931 = vmatpush1.msra.mxu0 0.0
  %1932 = vmatprep.subr.mxu0 0.0
  %1933 = vmatpush1.msra.mxu0 0.0
  %1934 = vmatprep.subr.mxu0 0.0
  %1935 = vmatpush1.msra.mxu0 0.0
  %1936 = vmatprep.subr.mxu0 0.0
  %1937 = vmatpush1.msra.mxu0 0.0
  %1938 = vmatprep.subr.mxu0 0.0
  %1939 = vmatpush1.msra.mxu0 0.0
  %1940 = vmatprep.subr.mxu0 0.0
  %1941 = vmatpush1.msra.mxu0 0.0
  %1942 = vmatprep.subr.mxu0 0.0
  %1943 = vmatpush1.msra.mxu0 0.0
  %1944 = vmatprep.subr.mxu0 0.0
  %1945 = vmatpush1.msra.mxu0 0.0
  %1946 = vmatprep.subr.mxu0 0.0
  %1947 = vmatpush1.msra.mxu0 0.0
  %1948 = vmatprep.subr.mxu0 0.0
  %1949 = vmatpush1.msra.mxu0 0.0
  %1950 = vmatprep.subr.mxu0 0.0
  %1951 = vmatpush1.msra.mxu0 0.0
  %1952 = vmatprep.subr.mxu0 0.0
  %1953 = vmatpush1.msra.mxu0 0.0
  %1954 = vmatprep.subr.mxu0 0.0
  %1955 = vmatpush1.msra.mxu0 0.0
  %1956 = vmatprep.subr.mxu0 0.0
  %1957 = vmatpush1.msra.mxu0 0.0
  %1958 = vmatprep.subr.mxu0 0.0
  %1959 = vmatpush1.msra.mxu0 0.0
  %1960 = vmatprep.subr.mxu0 0.0
  %1961 = vmatpush1.msra.mxu0 0.0
  %1962 = vmatprep.subr.mxu0 0.0
  %1963 = vmatpush1.msra.mxu0 0.0
  %1964 = vmatprep.mubr.f32.mxu0 0.0
  %1965 = vmatmul.mubr.f32.gmra.mrb[0].mxu0 %v1676
  %v1966 = vpop.f32.mrb[0].mxu0
  %v1967 = vadd.f32 0.0, %v1966
  %v1968 = vpop.f32.mrb[0].mxu0
  %1969 = vdwg.mxu0
  %v1970 = vadd.f32 %v1899, %v1967
  %v1971 = vtanh.pop %v1970
  %1972 = vmatprep.subr.mxu0 0.0
  %1973 = vmatpush1.msra.mxu0 %v116
  %1974 = vmatprep.subr.mxu0 0.0
  %1975 = vmatpush1.msra.mxu0 %v117
  %1976 = vmatprep.subr.mxu0 0.0
  %1977 = vmatpush1.msra.mxu0 %v118
  %1978 = vmatprep.subr.mxu0 0.0
  %1979 = vmatpush1.msra.mxu0 %v119
  %1980 = vmatprep.subr.mxu0 0.0
  %1981 = vmatpush1.msra.mxu0 %v120
  %1982 = vmatprep.subr.mxu0 0.0
  %1983 = vmatpush1.msra.mxu0 %v121
  %1984 = vmatprep.subr.mxu0 0.0
  %1985 = vmatpush1.msra.mxu0 %v122
  %1986 = vmatprep.subr.mxu0 0.0
  %1987 = vmatpush1.msra.mxu0 %v123
  %1988 = vmatprep.subr.mxu0 0.0
  %1989 = vmatpush1.msra.mxu0 0.0
  %1990 = vmatprep.subr.mxu0 0.0
  %1991 = vmatpush1.msra.mxu0 0.0
  %1992 = vmatprep.subr.mxu0 0.0
  %1993 = vmatpush1.msra.mxu0 0.0
  %1994 = vmatprep.subr.mxu0 0.0
  %1995 = vmatpush1.msra.mxu0 0.0
  %1996 = vmatprep.subr.mxu0 0.0
  %1997 = vmatpush1.msra.mxu0 0.0
  %1998 = vmatprep.subr.mxu0 0.0
  %1999 = vmatpush1.msra.mxu0 0.0
  %2000 = vmatprep.subr.mxu0 0.0
  %2001 = vmatpush1.msra.mxu0 0.0
  %2002 = vmatprep.subr.mxu0 0.0
  %2003 = vmatpush1.msra.mxu0 0.0
  %2004 = vmatprep.subr.mxu0 0.0
  %2005 = vmatpush1.msra.mxu0 0.0
  %2006 = vmatprep.subr.mxu0 0.0
  %2007 = vmatpush1.msra.mxu0 0.0
  %2008 = vmatprep.subr.mxu0 0.0
  %2009 = vmatpush1.msra.mxu0 0.0
  %2010 = vmatprep.subr.mxu0 0.0
  %2011 = vmatpush1.msra.mxu0 0.0
  %2012 = vmatprep.subr.mxu0 0.0
  %2013 = vmatpush1.msra.mxu0 0.0
  %2014 = vmatprep.subr.mxu0 0.0
  %2015 = vmatpush1.msra.mxu0 0.0
  %2016 = vmatprep.subr.mxu0 0.0
  %2017 = vmatpush1.msra.mxu0 0.0
  %2018 = vmatprep.subr.mxu0 0.0
  %2019 = vmatpush1.msra.mxu0 0.0
  %2020 = vmatprep.subr.mxu0 0.0
  %2021 = vmatpush1.msra.mxu0 0.0
  %2022 = vmatprep.subr.mxu0 0.0
  %2023 = vmatpush1.msra.mxu0 0.0
  %2024 = vmatprep.subr.mxu0 0.0
  %2025 = vmatpush1.msra.mxu0 0.0
  %2026 = vmatprep.subr.mxu0 0.0
  %2027 = vmatpush1.msra.mxu0 0.0
  %2028 = vmatprep.subr.mxu0 0.0
  %2029 = vmatpush1.msra.mxu0 0.0
  %2030 = vmatprep.subr.mxu0 0.0
  %2031 = vmatpush1.msra.mxu0 0.0
  %2032 = vmatprep.subr.mxu0 0.0
  %2033 = vmatpush1.msra.mxu0 0.0
  %2034 = vmatprep.subr.mxu0 0.0
  %2035 = vmatpush1.msra.mxu0 0.0
  %2036 = vmatprep.mubr.f32.mxu0 0.0
  %2037 = vmatmul.mubr.f32.gmra.mrb[0].mxu0 %v1824
  %v2038 = vpop.f32.mrb[0].mxu0
  %v2039 = vadd.f32 0.0, %v2038
  %v2040 = vpop.f32.mrb[0].mxu0
  %2041 = vdwg.mxu0
  %v2043 = vsel %vm32, %v1971, 0
  %2045 = vmatprep.subr.mxu0 0.0
  %2046 = vmatpush1.msra.mxu0 %v108
  %2047 = vmatprep.subr.mxu0 0.0
  %2048 = vmatpush1.msra.mxu0 %v109
  %2049 = vmatprep.subr.mxu0 0.0
  %2050 = vmatpush1.msra.mxu0 %v110
  %2051 = vmatprep.subr.mxu0 0.0
  %2052 = vmatpush1.msra.mxu0 %v111
  %2053 = vmatprep.subr.mxu0 0.0
  %2054 = vmatpush1.msra.mxu0 %v112
  %2055 = vmatprep.subr.mxu0 0.0
  %2056 = vmatpush1.msra.mxu0 %v113
  %2057 = vmatprep.subr.mxu0 0.0
  %2058 = vmatpush1.msra.mxu0 %v114
  %2059 = vmatprep.subr.mxu0 0.0
  %2060 = vmatpush1.msra.mxu0 %v115
  %2061 = vmatprep.subr.mxu0 0.0
  %2062 = vmatpush1.msra.mxu0 0.0
  %2063 = vmatprep.subr.mxu0 0.0
  %2064 = vmatpush1.msra.mxu0 0.0
  %2065 = vmatprep.subr.mxu0 0.0
  %2066 = vmatpush1.msra.mxu0 0.0
  %2067 = vmatprep.subr.mxu0 0.0
  %2068 = vmatpush1.msra.mxu0 0.0
  %2069 = vmatprep.subr.mxu0 0.0
  %2070 = vmatpush1.msra.mxu0 0.0
  %2071 = vmatprep.subr.mxu0 0.0
  %2072 = vmatpush1.msra.mxu0 0.0
  %2073 = vmatprep.subr.mxu0 0.0
  %2074 = vmatpush1.msra.mxu0 0.0
  %2075 = vmatprep.subr.mxu0 0.0
  %2076 = vmatpush1.msra.mxu0 0.0
  %2077 = vmatprep.subr.mxu0 0.0
  %2078 = vmatpush1.msra.mxu0 0.0
  %2079 = vmatprep.subr.mxu0 0.0
  %2080 = vmatpush1.msra.mxu0 0.0
  %2081 = vmatprep.subr.mxu0 0.0
  %2082 = vmatpush1.msra.mxu0 0.0
  %2083 = vmatprep.subr.mxu0 0.0
  %2084 = vmatpush1.msra.mxu0 0.0
  %2085 = vmatprep.subr.mxu0 0.0
  %2086 = vmatpush1.msra.mxu0 0.0
  %2087 = vmatprep.subr.mxu0 0.0
  %2088 = vmatpush1.msra.mxu0 0.0
  %2089 = vmatprep.subr.mxu0 0.0
  %2090 = vmatpush1.msra.mxu0 0.0
  %2091 = vmatprep.subr.mxu0 0.0
  %2092 = vmatpush1.msra.mxu0 0.0
  %2093 = vmatprep.subr.mxu0 0.0
  %2094 = vmatpush1.msra.mxu0 0.0
  %2095 = vmatprep.subr.mxu0 0.0
  %2096 = vmatpush1.msra.mxu0 0.0
  %2097 = vmatprep.subr.mxu0 0.0
  %2098 = vmatpush1.msra.mxu0 0.0
  %2099 = vmatprep.subr.mxu0 0.0
  %2100 = vmatpush1.msra.mxu0 0.0
  %2101 = vmatprep.subr.mxu0 0.0
  %2102 = vmatpush1.msra.mxu0 0.0
  %2103 = vmatprep.subr.mxu0 0.0
  %2104 = vmatpush1.msra.mxu0 0.0
  %2105 = vmatprep.subr.mxu0 0.0
  %2106 = vmatpush1.msra.mxu0 0.0
  %2107 = vmatprep.subr.mxu0 0.0
  %2108 = vmatpush1.msra.mxu0 0.0
  %2109 = vmatprep.mubr.f32.mxu0 0.0
  %2110 = vmatmul.mubr.f32.gmra.mrb[0].mxu0 %v2043
  %v2111 = vpop.f32.mrb[0].mxu0
  %v2112 = vadd.f32 %v2039, %v2111
  %v2113 = vpop.f32.mrb[0].mxu0
  %2114 = vdwg.mxu0
  %v2115 = vadd.f32 %v2112, %v18
  %v2116 = vtanh.pop %v2115
  %v2118 = vsel %vm32, %v1897, 0
  %2120 = vmatprep.subr.mxu0 0.0
  %2121 = vmatpush1.msra.mxu0 %v277
  %2122 = vmatprep.subr.mxu0 0.0
  %2123 = vmatpush1.msra.mxu0 %v278
  %2124 = vmatprep.subr.mxu0 0.0
  %2125 = vmatpush1.msra.mxu0 %v279
  %2126 = vmatprep.subr.mxu0 0.0
  %2127 = vmatpush1.msra.mxu0 %v280
  %2128 = vmatprep.subr.mxu0 0.0
  %2129 = vmatpush1.msra.mxu0 %v281
  %2130 = vmatprep.subr.mxu0 0.0
  %2131 = vmatpush1.msra.mxu0 %v282
  %2132 = vmatprep.subr.mxu0 0.0
  %2133 = vmatpush1.msra.mxu0 %v283
  %2134 = vmatprep.subr.mxu0 0.0
  %2135 = vmatpush1.msra.mxu0 %v284
  %2136 = vmatprep.subr.mxu0 0.0
  %2137 = vmatpush1.msra.mxu0 0.0
  %2138 = vmatprep.subr.mxu0 0.0
  %2139 = vmatpush1.msra.mxu0 0.0
  %2140 = vmatprep.subr.mxu0 0.0
  %2141 = vmatpush1.msra.mxu0 0.0
  %2142 = vmatprep.subr.mxu0 0.0
  %2143 = vmatpush1.msra.mxu0 0.0
  %2144 = vmatprep.subr.mxu0 0.0
  %2145 = vmatpush1.msra.mxu0 0.0
  %2146 = vmatprep.subr.mxu0 0.0
  %2147 = vmatpush1.msra.mxu0 0.0
  %2148 = vmatprep.subr.mxu0 0.0
  %2149 = vmatpush1.msra.mxu0 0.0
  %2150 = vmatprep.subr.mxu0 0.0
  %2151 = vmatpush1.msra.mxu0 0.0
  %2152 = vmatprep.subr.mxu0 0.0
  %2153 = vmatpush1.msra.mxu0 0.0
  %2154 = vmatprep.subr.mxu0 0.0
  %2155 = vmatpush1.msra.mxu0 0.0
  %2156 = vmatprep.subr.mxu0 0.0
  %2157 = vmatpush1.msra.mxu0 0.0
  %2158 = vmatprep.subr.mxu0 0.0
  %2159 = vmatpush1.msra.mxu0 0.0
  %2160 = vmatprep.subr.mxu0 0.0
  %2161 = vmatpush1.msra.mxu0 0.0
  %2162 = vmatprep.subr.mxu0 0.0
  %2163 = vmatpush1.msra.mxu0 0.0
  %2164 = vmatprep.subr.mxu0 0.0
  %2165 = vmatpush1.msra.mxu0 0.0
  %2166 = vmatprep.subr.mxu0 0.0
  %2167 = vmatpush1.msra.mxu0 0.0
  %2168 = vmatprep.subr.mxu0 0.0
  %2169 = vmatpush1.msra.mxu0 0.0
  %2170 = vmatprep.subr.mxu0 0.0
  %2171 = vmatpush1.msra.mxu0 0.0
  %2172 = vmatprep.subr.mxu0 0.0
  %2173 = vmatpush1.msra.mxu0 0.0
  %2174 = vmatprep.subr.mxu0 0.0
  %2175 = vmatpush1.msra.mxu0 0.0
  %2176 = vmatprep.subr.mxu0 0.0
  %2177 = vmatpush1.msra.mxu0 0.0
  %2178 = vmatprep.subr.mxu0 0.0
  %2179 = vmatpush1.msra.mxu0 0.0
  %2180 = vmatprep.subr.mxu0 0.0
  %2181 = vmatpush1.msra.mxu0 0.0
  %2182 = vmatprep.subr.mxu0 0.0
  %2183 = vmatpush1.msra.mxu0 0.0
  %2184 = vmatprep.mubr.f32.mxu0 0.0
  %2185 = vmatmul.mubr.f32.gmra.mrb[0].mxu0 %v2118
  %v2186 = vpop.f32.mrb[0].mxu0
  %v2187 = vadd.f32 0.0, %v2186
  %v2188 = vpop.f32.mrb[0].mxu0
  %2189 = vdwg.mxu0
  %v2191 = vsel %vm32, %v2116, 0
  %2193 = vmatprep.subr.mxu0 0.0
  %2194 = vmatpush1.msra.mxu0 %v269
  %2195 = vmatprep.subr.mxu0 0.0
  %2196 = vmatpush1.msra.mxu0 %v270
  %2197 = vmatprep.subr.mxu0 0.0
  %2198 = vmatpush1.msra.mxu0 %v271
  %2199 = vmatprep.subr.mxu0 0.0
  %2200 = vmatpush1.msra.mxu0 %v272
  %2201 = vmatprep.subr.mxu0 0.0
  %2202 = vmatpush1.msra.mxu0 %v273
  %2203 = vmatprep.subr.mxu0 0.0
  %2204 = vmatpush1.msra.mxu0 %v274
  %2205 = vmatprep.subr.mxu0 0.0
  %2206 = vmatpush1.msra.mxu0 %v275
  %2207 = vmatprep.subr.mxu0 0.0
  %2208 = vmatpush1.msra.mxu0 %v276
  %2209 = vmatprep.subr.mxu0 0.0
  %2210 = vmatpush1.msra.mxu0 0.0
  %2211 = vmatprep.subr.mxu0 0.0
  %2212 = vmatpush1.msra.mxu0 0.0
  %2213 = vmatprep.subr.mxu0 0.0
  %2214 = vmatpush1.msra.mxu0 0.0
  %2215 = vmatprep.subr.mxu0 0.0
  %2216 = vmatpush1.msra.mxu0 0.0
  %2217 = vmatprep.subr.mxu0 0.0
  %2218 = vmatpush1.msra.mxu0 0.0
  %2219 = vmatprep.subr.mxu0 0.0
  %2220 = vmatpush1.msra.mxu0 0.0
  %2221 = vmatprep.subr.mxu0 0.0
  %2222 = vmatpush1.msra.mxu0 0.0
  %2223 = vmatprep.subr.mxu0 0.0
  %2224 = vmatpush1.msra.mxu0 0.0
  %2225 = vmatprep.subr.mxu0 0.0
  %2226 = vmatpush1.msra.mxu0 0.0
  %2227 = vmatprep.subr.mxu0 0.0
  %2228 = vmatpush1.msra.mxu0 0.0
  %2229 = vmatprep.subr.mxu0 0.0
  %2230 = vmatpush1.msra.mxu0 0.0
  %2231 = vmatprep.subr.mxu0 0.0
  %2232 = vmatpush1.msra.mxu0 0.0
  %2233 = vmatprep.subr.mxu0 0.0
  %2234 = vmatpush1.msra.mxu0 0.0
  %2235 = vmatprep.subr.mxu0 0.0
  %2236 = vmatpush1.msra.mxu0 0.0
  %2237 = vmatprep.subr.mxu0 0.0
  %2238 = vmatpush1.msra.mxu0 0.0
  %2239 = vmatprep.subr.mxu0 0.0
  %2240 = vmatpush1.msra.mxu0 0.0
  %2241 = vmatprep.subr.mxu0 0.0
  %2242 = vmatpush1.msra.mxu0 0.0
  %2243 = vmatprep.subr.mxu0 0.0
  %2244 = vmatpush1.msra.mxu0 0.0
  %2245 = vmatprep.subr.mxu0 0.0
  %2246 = vmatpush1.msra.mxu0 0.0
  %2247 = vmatprep.subr.mxu0 0.0
  %2248 = vmatpush1.msra.mxu0 0.0
  %2249 = vmatprep.subr.mxu0 0.0
  %2250 = vmatpush1.msra.mxu0 0.0
  %2251 = vmatprep.subr.mxu0 0.0
  %2252 = vmatpush1.msra.mxu0 0.0
  %2253 = vmatprep.subr.mxu0 0.0
  %2254 = vmatpush1.msra.mxu0 0.0
  %2255 = vmatprep.subr.mxu0 0.0
  %2256 = vmatpush1.msra.mxu0 0.0
  %2257 = vmatprep.mubr.f32.mxu0 0.0
  %2258 = vmatmul.mubr.f32.gmra.mrb[0].mxu0 %v2191
  %v2259 = vpop.f32.mrb[0].mxu0
  %v2260 = vadd.f32 %v2187, %v2259
  %v2261 = vpop.f32.mrb[0].mxu0
  %2262 = vdwg.mxu0
  %v2263 = vadd.f32 %v2260, %v22
  %v2264 = vtanh.pop %v2263
  %s2265 = scalar_lea.vmem %s0, 24
  %v2266 = vld [vmem:[%s2265] sm:$0xf]
  %2267 = vmatprep.subr.mxu0 0.0
  %2268 = vmatpush1.msra.mxu0 %v24
  %2269 = vmatprep.subr.mxu0 0.0
  %2270 = vmatpush1.msra.mxu0 %v25
  %2271 = vmatprep.subr.mxu0 0.0
  %2272 = vmatpush1.msra.mxu0 %v26
  %2273 = vmatprep.subr.mxu0 0.0
  %2274 = vmatpush1.msra.mxu0 %v27
  %2275 = vmatprep.subr.mxu0 0.0
  %2276 = vmatpush1.msra.mxu0 %v28
  %2277 = vmatprep.subr.mxu0 0.0
  %2278 = vmatpush1.msra.mxu0 %v29
  %2279 = vmatprep.subr.mxu0 0.0
  %2280 = vmatpush1.msra.mxu0 %v30
  %2281 = vmatprep.subr.mxu0 0.0
  %2282 = vmatpush1.msra.mxu0 %v31
  %2283 = vmatprep.subr.mxu0 0.0
  %2284 = vmatpush1.msra.mxu0 0.0
  %2285 = vmatprep.subr.mxu0 0.0
  %2286 = vmatpush1.msra.mxu0 0.0
  %2287 = vmatprep.subr.mxu0 0.0
  %2288 = vmatpush1.msra.mxu0 0.0
  %2289 = vmatprep.subr.mxu0 0.0
  %2290 = vmatpush1.msra.mxu0 0.0
  %2291 = vmatprep.subr.mxu0 0.0
  %2292 = vmatpush1.msra.mxu0 0.0
  %2293 = vmatprep.subr.mxu0 0.0
  %2294 = vmatpush1.msra.mxu0 0.0
  %2295 = vmatprep.subr.mxu0 0.0
  %2296 = vmatpush1.msra.mxu0 0.0
  %2297 = vmatprep.subr.mxu0 0.0
  %2298 = vmatpush1.msra.mxu0 0.0
  %2299 = vmatprep.subr.mxu0 0.0
  %2300 = vmatpush1.msra.mxu0 0.0
  %2301 = vmatprep.subr.mxu0 0.0
  %2302 = vmatpush1.msra.mxu0 0.0
  %2303 = vmatprep.subr.mxu0 0.0
  %2304 = vmatpush1.msra.mxu0 0.0
  %2305 = vmatprep.subr.mxu0 0.0
  %2306 = vmatpush1.msra.mxu0 0.0
  %2307 = vmatprep.subr.mxu0 0.0
  %2308 = vmatpush1.msra.mxu0 0.0
  %2309 = vmatprep.subr.mxu0 0.0
  %2310 = vmatpush1.msra.mxu0 0.0
  %2311 = vmatprep.subr.mxu0 0.0
  %2312 = vmatpush1.msra.mxu0 0.0
  %2313 = vmatprep.subr.mxu0 0.0
  %2314 = vmatpush1.msra.mxu0 0.0
  %2315 = vmatprep.subr.mxu0 0.0
  %2316 = vmatpush1.msra.mxu0 0.0
  %2317 = vmatprep.subr.mxu0 0.0
  %2318 = vmatpush1.msra.mxu0 0.0
  %2319 = vmatprep.subr.mxu0 0.0
  %2320 = vmatpush1.msra.mxu0 0.0
  %2321 = vmatprep.subr.mxu0 0.0
  %2322 = vmatpush1.msra.mxu0 0.0
  %2323 = vmatprep.subr.mxu0 0.0
  %2324 = vmatpush1.msra.mxu0 0.0
  %2325 = vmatprep.subr.mxu0 0.0
  %2326 = vmatpush1.msra.mxu0 0.0
  %2327 = vmatprep.subr.mxu0 0.0
  %2328 = vmatpush1.msra.mxu0 0.0
  %2329 = vmatprep.subr.mxu0 0.0
  %2330 = vmatpush1.msra.mxu0 0.0
  %2331 = vmatprep.mubr.f32.mxu0 0.0
  %2332 = vmatmul.mubr.f32.gmra.mrb[0].mxu0 %v2043
  %v2333 = vpop.f32.mrb[0].mxu0
  %v2334 = vadd.f32 0.0, %v2333
  %v2335 = vpop.f32.mrb[0].mxu0
  %2336 = vdwg.mxu0
  %v2337 = vadd.f32 %v2266, %v2334
  %v2338 = vtanh.pop %v2337
  %2339 = vmatprep.subr.mxu0 0.0
  %2340 = vmatpush1.msra.mxu0 %v116
  %2341 = vmatprep.subr.mxu0 0.0
  %2342 = vmatpush1.msra.mxu0 %v117
  %2343 = vmatprep.subr.mxu0 0.0
  %2344 = vmatpush1.msra.mxu0 %v118
  %2345 = vmatprep.subr.mxu0 0.0
  %2346 = vmatpush1.msra.mxu0 %v119
  %2347 = vmatprep.subr.mxu0 0.0
  %2348 = vmatpush1.msra.mxu0 %v120
  %2349 = vmatprep.subr.mxu0 0.0
  %2350 = vmatpush1.msra.mxu0 %v121
  %2351 = vmatprep.subr.mxu0 0.0
  %2352 = vmatpush1.msra.mxu0 %v122
  %2353 = vmatprep.subr.mxu0 0.0
  %2354 = vmatpush1.msra.mxu0 %v123
  %2355 = vmatprep.subr.mxu0 0.0
  %2356 = vmatpush1.msra.mxu0 0.0
  %2357 = vmatprep.subr.mxu0 0.0
  %2358 = vmatpush1.msra.mxu0 0.0
  %2359 = vmatprep.subr.mxu0 0.0
  %2360 = vmatpush1.msra.mxu0 0.0
  %2361 = vmatprep.subr.mxu0 0.0
  %2362 = vmatpush1.msra.mxu0 0.0
  %2363 = vmatprep.subr.mxu0 0.0
  %2364 = vmatpush1.msra.mxu0 0.0
  %2365 = vmatprep.subr.mxu0 0.0
  %2366 = vmatpush1.msra.mxu0 0.0
  %2367 = vmatprep.subr.mxu0 0.0
  %2368 = vmatpush1.msra.mxu0 0.0
  %2369 = vmatprep.subr.mxu0 0.0
  %2370 = vmatpush1.msra.mxu0 0.0
  %2371 = vmatprep.subr.mxu0 0.0
  %2372 = vmatpush1.msra.mxu0 0.0
  %2373 = vmatprep.subr.mxu0 0.0
  %2374 = vmatpush1.msra.mxu0 0.0
  %2375 = vmatprep.subr.mxu0 0.0
  %2376 = vmatpush1.msra.mxu0 0.0
  %2377 = vmatprep.subr.mxu0 0.0
  %2378 = vmatpush1.msra.mxu0 0.0
  %2379 = vmatprep.subr.mxu0 0.0
  %2380 = vmatpush1.msra.mxu0 0.0
  %2381 = vmatprep.subr.mxu0 0.0
  %2382 = vmatpush1.msra.mxu0 0.0
  %2383 = vmatprep.subr.mxu0 0.0
  %2384 = vmatpush1.msra.mxu0 0.0
  %2385 = vmatprep.subr.mxu0 0.0
  %2386 = vmatpush1.msra.mxu0 0.0
  %2387 = vmatprep.subr.mxu0 0.0
  %2388 = vmatpush1.msra.mxu0 0.0
  %2389 = vmatprep.subr.mxu0 0.0
  %2390 = vmatpush1.msra.mxu0 0.0
  %2391 = vmatprep.subr.mxu0 0.0
  %2392 = vmatpush1.msra.mxu0 0.0
  %2393 = vmatprep.subr.mxu0 0.0
  %2394 = vmatpush1.msra.mxu0 0.0
  %2395 = vmatprep.subr.mxu0 0.0
  %2396 = vmatpush1.msra.mxu0 0.0
  %2397 = vmatprep.subr.mxu0 0.0
  %2398 = vmatpush1.msra.mxu0 0.0
  %2399 = vmatprep.subr.mxu0 0.0
  %2400 = vmatpush1.msra.mxu0 0.0
  %2401 = vmatprep.subr.mxu0 0.0
  %2402 = vmatpush1.msra.mxu0 0.0
  %2403 = vmatprep.mubr.f32.mxu0 0.0
  %2404 = vmatmul.mubr.f32.gmra.mrb[0].mxu0 %v2191
  %v2405 = vpop.f32.mrb[0].mxu0
  %v2406 = vadd.f32 0.0, %v2405
  %v2407 = vpop.f32.mrb[0].mxu0
  %2408 = vdwg.mxu0
  %v2410 = vsel %vm32, %v2338, 0
  %2412 = vmatprep.subr.mxu0 0.0
  %2413 = vmatpush1.msra.mxu0 %v108
  %2414 = vmatprep.subr.mxu0 0.0
  %2415 = vmatpush1.msra.mxu0 %v109
  %2416 = vmatprep.subr.mxu0 0.0
  %2417 = vmatpush1.msra.mxu0 %v110
  %2418 = vmatprep.subr.mxu0 0.0
  %2419 = vmatpush1.msra.mxu0 %v111
  %2420 = vmatprep.subr.mxu0 0.0
  %2421 = vmatpush1.msra.mxu0 %v112
  %2422 = vmatprep.subr.mxu0 0.0
  %2423 = vmatpush1.msra.mxu0 %v113
  %2424 = vmatprep.subr.mxu0 0.0
  %2425 = vmatpush1.msra.mxu0 %v114
  %2426 = vmatprep.subr.mxu0 0.0
  %2427 = vmatpush1.msra.mxu0 %v115
  %2428 = vmatprep.subr.mxu0 0.0
  %2429 = vmatpush1.msra.mxu0 0.0
  %2430 = vmatprep.subr.mxu0 0.0
  %2431 = vmatpush1.msra.mxu0 0.0
  %2432 = vmatprep.subr.mxu0 0.0
  %2433 = vmatpush1.msra.mxu0 0.0
  %2434 = vmatprep.subr.mxu0 0.0
  %2435 = vmatpush1.msra.mxu0 0.0
  %2436 = vmatprep.subr.mxu0 0.0
  %2437 = vmatpush1.msra.mxu0 0.0
  %2438 = vmatprep.subr.mxu0 0.0
  %2439 = vmatpush1.msra.mxu0 0.0
  %2440 = vmatprep.subr.mxu0 0.0
  %2441 = vmatpush1.msra.mxu0 0.0
  %2442 = vmatprep.subr.mxu0 0.0
  %2443 = vmatpush1.msra.mxu0 0.0
  %2444 = vmatprep.subr.mxu0 0.0
  %2445 = vmatpush1.msra.mxu0 0.0
  %2446 = vmatprep.subr.mxu0 0.0
  %2447 = vmatpush1.msra.mxu0 0.0
  %2448 = vmatprep.subr.mxu0 0.0
  %2449 = vmatpush1.msra.mxu0 0.0
  %2450 = vmatprep.subr.mxu0 0.0
  %2451 = vmatpush1.msra.mxu0 0.0
  %2452 = vmatprep.subr.mxu0 0.0
  %2453 = vmatpush1.msra.mxu0 0.0
  %2454 = vmatprep.subr.mxu0 0.0
  %2455 = vmatpush1.msra.mxu0 0.0
  %2456 = vmatprep.subr.mxu0 0.0
  %2457 = vmatpush1.msra.mxu0 0.0
  %2458 = vmatprep.subr.mxu0 0.0
  %2459 = vmatpush1.msra.mxu0 0.0
  %2460 = vmatprep.subr.mxu0 0.0
  %2461 = vmatpush1.msra.mxu0 0.0
  %2462 = vmatprep.subr.mxu0 0.0
  %2463 = vmatpush1.msra.mxu0 0.0
  %2464 = vmatprep.subr.mxu0 0.0
  %2465 = vmatpush1.msra.mxu0 0.0
  %2466 = vmatprep.subr.mxu0 0.0
  %2467 = vmatpush1.msra.mxu0 0.0
  %2468 = vmatprep.subr.mxu0 0.0
  %2469 = vmatpush1.msra.mxu0 0.0
  %2470 = vmatprep.subr.mxu0 0.0
  %2471 = vmatpush1.msra.mxu0 0.0
  %2472 = vmatprep.subr.mxu0 0.0
  %2473 = vmatpush1.msra.mxu0 0.0
  %2474 = vmatprep.subr.mxu0 0.0
  %2475 = vmatpush1.msra.mxu0 0.0
  %2476 = vmatprep.mubr.f32.mxu0 0.0
  %2477 = vmatmul.mubr.f32.gmra.mrb[0].mxu0 %v2410
  %v2478 = vpop.f32.mrb[0].mxu0
  %v2479 = vadd.f32 %v2406, %v2478
  %v2480 = vpop.f32.mrb[0].mxu0
  %2481 = vdwg.mxu0
  %v2482 = vadd.f32 %v2479, %v18
  %v2483 = vtanh.pop %v2482
  %v2485 = vsel %vm32, %v2264, 0
  %2487 = vmatprep.subr.mxu0 0.0
  %2488 = vmatpush1.msra.mxu0 %v277
  %2489 = vmatprep.subr.mxu0 0.0
  %2490 = vmatpush1.msra.mxu0 %v278
  %2491 = vmatprep.subr.mxu0 0.0
  %2492 = vmatpush1.msra.mxu0 %v279
  %2493 = vmatprep.subr.mxu0 0.0
  %2494 = vmatpush1.msra.mxu0 %v280
  %2495 = vmatprep.subr.mxu0 0.0
  %2496 = vmatpush1.msra.mxu0 %v281
  %2497 = vmatprep.subr.mxu0 0.0
  %2498 = vmatpush1.msra.mxu0 %v282
  %2499 = vmatprep.subr.mxu0 0.0
  %2500 = vmatpush1.msra.mxu0 %v283
  %2501 = vmatprep.subr.mxu0 0.0
  %2502 = vmatpush1.msra.mxu0 %v284
  %2503 = vmatprep.subr.mxu0 0.0
  %2504 = vmatpush1.msra.mxu0 0.0
  %2505 = vmatprep.subr.mxu0 0.0
  %2506 = vmatpush1.msra.mxu0 0.0
  %2507 = vmatprep.subr.mxu0 0.0
  %2508 = vmatpush1.msra.mxu0 0.0
  %2509 = vmatprep.subr.mxu0 0.0
  %2510 = vmatpush1.msra.mxu0 0.0
  %2511 = vmatprep.subr.mxu0 0.0
  %2512 = vmatpush1.msra.mxu0 0.0
  %2513 = vmatprep.subr.mxu0 0.0
  %2514 = vmatpush1.msra.mxu0 0.0
  %2515 = vmatprep.subr.mxu0 0.0
  %2516 = vmatpush1.msra.mxu0 0.0
  %2517 = vmatprep.subr.mxu0 0.0
  %2518 = vmatpush1.msra.mxu0 0.0
  %2519 = vmatprep.subr.mxu0 0.0
  %2520 = vmatpush1.msra.mxu0 0.0
  %2521 = vmatprep.subr.mxu0 0.0
  %2522 = vmatpush1.msra.mxu0 0.0
  %2523 = vmatprep.subr.mxu0 0.0
  %2524 = vmatpush1.msra.mxu0 0.0
  %2525 = vmatprep.subr.mxu0 0.0
  %2526 = vmatpush1.msra.mxu0 0.0
  %2527 = vmatprep.subr.mxu0 0.0
  %2528 = vmatpush1.msra.mxu0 0.0
  %2529 = vmatprep.subr.mxu0 0.0
  %2530 = vmatpush1.msra.mxu0 0.0
  %2531 = vmatprep.subr.mxu0 0.0
  %2532 = vmatpush1.msra.mxu0 0.0
  %2533 = vmatprep.subr.mxu0 0.0
  %2534 = vmatpush1.msra.mxu0 0.0
  %2535 = vmatprep.subr.mxu0 0.0
  %2536 = vmatpush1.msra.mxu0 0.0
  %2537 = vmatprep.subr.mxu0 0.0
  %2538 = vmatpush1.msra.mxu0 0.0
  %2539 = vmatprep.subr.mxu0 0.0
  %2540 = vmatpush1.msra.mxu0 0.0
  %2541 = vmatprep.subr.mxu0 0.0
  %2542 = vmatpush1.msra.mxu0 0.0
  %2543 = vmatprep.subr.mxu0 0.0
  %2544 = vmatpush1.msra.mxu0 0.0
  %2545 = vmatprep.subr.mxu0 0.0
  %2546 = vmatpush1.msra.mxu0 0.0
  %2547 = vmatprep.subr.mxu0 0.0
  %2548 = vmatpush1.msra.mxu0 0.0
  %2549 = vmatprep.subr.mxu0 0.0
  %2550 = vmatpush1.msra.mxu0 0.0
  %2551 = vmatprep.mubr.f32.mxu0 0.0
  %2552 = vmatmul.mubr.f32.gmra.mrb[0].mxu0 %v2485
  %v2553 = vpop.f32.mrb[0].mxu0
  %v2554 = vadd.f32 0.0, %v2553
  %v2555 = vpop.f32.mrb[0].mxu0
  %2556 = vdwg.mxu0
  %v2558 = vsel %vm32, %v2483, 0
  %2560 = vmatprep.subr.mxu0 0.0
  %2561 = vmatpush1.msra.mxu0 %v269
  %2562 = vmatprep.subr.mxu0 0.0
  %2563 = vmatpush1.msra.mxu0 %v270
  %2564 = vmatprep.subr.mxu0 0.0
  %2565 = vmatpush1.msra.mxu0 %v271
  %2566 = vmatprep.subr.mxu0 0.0
  %2567 = vmatpush1.msra.mxu0 %v272
  %2568 = vmatprep.subr.mxu0 0.0
  %2569 = vmatpush1.msra.mxu0 %v273
  %2570 = vmatprep.subr.mxu0 0.0
  %2571 = vmatpush1.msra.mxu0 %v274
  %2572 = vmatprep.subr.mxu0 0.0
  %2573 = vmatpush1.msra.mxu0 %v275
  %2574 = vmatprep.subr.mxu0 0.0
  %2575 = vmatpush1.msra.mxu0 %v276
  %2576 = vmatprep.subr.mxu0 0.0
  %2577 = vmatpush1.msra.mxu0 0.0
  %2578 = vmatprep.subr.mxu0 0.0
  %2579 = vmatpush1.msra.mxu0 0.0
  %2580 = vmatprep.subr.mxu0 0.0
  %2581 = vmatpush1.msra.mxu0 0.0
  %2582 = vmatprep.subr.mxu0 0.0
  %2583 = vmatpush1.msra.mxu0 0.0
  %2584 = vmatprep.subr.mxu0 0.0
  %2585 = vmatpush1.msra.mxu0 0.0
  %2586 = vmatprep.subr.mxu0 0.0
  %2587 = vmatpush1.msra.mxu0 0.0
  %2588 = vmatprep.subr.mxu0 0.0
  %2589 = vmatpush1.msra.mxu0 0.0
  %2590 = vmatprep.subr.mxu0 0.0
  %2591 = vmatpush1.msra.mxu0 0.0
  %2592 = vmatprep.subr.mxu0 0.0
  %2593 = vmatpush1.msra.mxu0 0.0
  %2594 = vmatprep.subr.mxu0 0.0
  %2595 = vmatpush1.msra.mxu0 0.0
  %2596 = vmatprep.subr.mxu0 0.0
  %2597 = vmatpush1.msra.mxu0 0.0
  %2598 = vmatprep.subr.mxu0 0.0
  %2599 = vmatpush1.msra.mxu0 0.0
  %2600 = vmatprep.subr.mxu0 0.0
  %2601 = vmatpush1.msra.mxu0 0.0
  %2602 = vmatprep.subr.mxu0 0.0
  %2603 = vmatpush1.msra.mxu0 0.0
  %2604 = vmatprep.subr.mxu0 0.0
  %2605 = vmatpush1.msra.mxu0 0.0
  %2606 = vmatprep.subr.mxu0 0.0
  %2607 = vmatpush1.msra.mxu0 0.0
  %2608 = vmatprep.subr.mxu0 0.0
  %2609 = vmatpush1.msra.mxu0 0.0
  %2610 = vmatprep.subr.mxu0 0.0
  %2611 = vmatpush1.msra.mxu0 0.0
  %2612 = vmatprep.subr.mxu0 0.0
  %2613 = vmatpush1.msra.mxu0 0.0
  %2614 = vmatprep.subr.mxu0 0.0
  %2615 = vmatpush1.msra.mxu0 0.0
  %2616 = vmatprep.subr.mxu0 0.0
  %2617 = vmatpush1.msra.mxu0 0.0
  %2618 = vmatprep.subr.mxu0 0.0
  %2619 = vmatpush1.msra.mxu0 0.0
  %2620 = vmatprep.subr.mxu0 0.0
  %2621 = vmatpush1.msra.mxu0 0.0
  %2622 = vmatprep.subr.mxu0 0.0
  %2623 = vmatpush1.msra.mxu0 0.0
  %2624 = vmatprep.mubr.f32.mxu0 0.0
  %2625 = vmatmul.mubr.f32.gmra.mrb[0].mxu0 %v2558
  %v2626 = vpop.f32.mrb[0].mxu0
  %v2627 = vadd.f32 %v2554, %v2626
  %v2628 = vpop.f32.mrb[0].mxu0
  %2629 = vdwg.mxu0
  %v2630 = vadd.f32 %v2627, %v22
  %v2631 = vtanh.pop %v2630
  %s2632 = scalar_lea.vmem %s0, 28
  %v2633 = vld [vmem:[%s2632] sm:$0xf]
  %2634 = vmatprep.subr.mxu0 0.0
  %2635 = vmatpush1.msra.mxu0 %v24
  %2636 = vmatprep.subr.mxu0 0.0
  %2637 = vmatpush1.msra.mxu0 %v25
  %2638 = vmatprep.subr.mxu0 0.0
  %2639 = vmatpush1.msra.mxu0 %v26
  %2640 = vmatprep.subr.mxu0 0.0
  %2641 = vmatpush1.msra.mxu0 %v27
  %2642 = vmatprep.subr.mxu0 0.0
  %2643 = vmatpush1.msra.mxu0 %v28
  %2644 = vmatprep.subr.mxu0 0.0
  %2645 = vmatpush1.msra.mxu0 %v29
  %2646 = vmatprep.subr.mxu0 0.0
  %2647 = vmatpush1.msra.mxu0 %v30
  %2648 = vmatprep.subr.mxu0 0.0
  %2649 = vmatpush1.msra.mxu0 %v31
  %2650 = vmatprep.subr.mxu0 0.0
  %2651 = vmatpush1.msra.mxu0 0.0
  %2652 = vmatprep.subr.mxu0 0.0
  %2653 = vmatpush1.msra.mxu0 0.0
  %2654 = vmatprep.subr.mxu0 0.0
  %2655 = vmatpush1.msra.mxu0 0.0
  %2656 = vmatprep.subr.mxu0 0.0
  %2657 = vmatpush1.msra.mxu0 0.0
  %2658 = vmatprep.subr.mxu0 0.0
  %2659 = vmatpush1.msra.mxu0 0.0
  %2660 = vmatprep.subr.mxu0 0.0
  %2661 = vmatpush1.msra.mxu0 0.0
  %2662 = vmatprep.subr.mxu0 0.0
  %2663 = vmatpush1.msra.mxu0 0.0
  %2664 = vmatprep.subr.mxu0 0.0
  %2665 = vmatpush1.msra.mxu0 0.0
  %2666 = vmatprep.subr.mxu0 0.0
  %2667 = vmatpush1.msra.mxu0 0.0
  %2668 = vmatprep.subr.mxu0 0.0
  %2669 = vmatpush1.msra.mxu0 0.0
  %2670 = vmatprep.subr.mxu0 0.0
  %2671 = vmatpush1.msra.mxu0 0.0
  %2672 = vmatprep.subr.mxu0 0.0
  %2673 = vmatpush1.msra.mxu0 0.0
  %2674 = vmatprep.subr.mxu0 0.0
  %2675 = vmatpush1.msra.mxu0 0.0
  %2676 = vmatprep.subr.mxu0 0.0
  %2677 = vmatpush1.msra.mxu0 0.0
  %2678 = vmatprep.subr.mxu0 0.0
  %2679 = vmatpush1.msra.mxu0 0.0
  %2680 = vmatprep.subr.mxu0 0.0
  %2681 = vmatpush1.msra.mxu0 0.0
  %2682 = vmatprep.subr.mxu0 0.0
  %2683 = vmatpush1.msra.mxu0 0.0
  %2684 = vmatprep.subr.mxu0 0.0
  %2685 = vmatpush1.msra.mxu0 0.0
  %2686 = vmatprep.subr.mxu0 0.0
  %2687 = vmatpush1.msra.mxu0 0.0
  %2688 = vmatprep.subr.mxu0 0.0
  %2689 = vmatpush1.msra.mxu0 0.0
  %2690 = vmatprep.subr.mxu0 0.0
  %2691 = vmatpush1.msra.mxu0 0.0
  %2692 = vmatprep.subr.mxu0 0.0
  %2693 = vmatpush1.msra.mxu0 0.0
  %2694 = vmatprep.subr.mxu0 0.0
  %2695 = vmatpush1.msra.mxu0 0.0
  %2696 = vmatprep.subr.mxu0 0.0
  %2697 = vmatpush1.msra.mxu0 0.0
  %2698 = vmatprep.mubr.f32.mxu0 0.0
  %2699 = vmatmul.mubr.f32.gmra.mrb[0].mxu0 %v2410
  %v2700 = vpop.f32.mrb[0].mxu0
  %v2701 = vadd.f32 0.0, %v2700
  %v2702 = vpop.f32.mrb[0].mxu0
  %2703 = vdwg.mxu0
  %v2704 = vadd.f32 %v2633, %v2701
  %v2705 = vtanh.pop %v2704
  %2706 = vmatprep.subr.mxu0 0.0
  %2707 = vmatpush1.msra.mxu0 %v116
  %2708 = vmatprep.subr.mxu0 0.0
  %2709 = vmatpush1.msra.mxu0 %v117
  %2710 = vmatprep.subr.mxu0 0.0
  %2711 = vmatpush1.msra.mxu0 %v118
  %2712 = vmatprep.subr.mxu0 0.0
  %2713 = vmatpush1.msra.mxu0 %v119
  %2714 = vmatprep.subr.mxu0 0.0
  %2715 = vmatpush1.msra.mxu0 %v120
  %2716 = vmatprep.subr.mxu0 0.0
  %2717 = vmatpush1.msra.mxu0 %v121
  %2718 = vmatprep.subr.mxu0 0.0
  %2719 = vmatpush1.msra.mxu0 %v122
  %2720 = vmatprep.subr.mxu0 0.0
  %2721 = vmatpush1.msra.mxu0 %v123
  %2722 = vmatprep.subr.mxu0 0.0
  %2723 = vmatpush1.msra.mxu0 0.0
  %2724 = vmatprep.subr.mxu0 0.0
  %2725 = vmatpush1.msra.mxu0 0.0
  %2726 = vmatprep.subr.mxu0 0.0
  %2727 = vmatpush1.msra.mxu0 0.0
  %2728 = vmatprep.subr.mxu0 0.0
  %2729 = vmatpush1.msra.mxu0 0.0
  %2730 = vmatprep.subr.mxu0 0.0
  %2731 = vmatpush1.msra.mxu0 0.0
  %2732 = vmatprep.subr.mxu0 0.0
  %2733 = vmatpush1.msra.mxu0 0.0
  %2734 = vmatprep.subr.mxu0 0.0
  %2735 = vmatpush1.msra.mxu0 0.0
  %2736 = vmatprep.subr.mxu0 0.0
  %2737 = vmatpush1.msra.mxu0 0.0
  %2738 = vmatprep.subr.mxu0 0.0
  %2739 = vmatpush1.msra.mxu0 0.0
  %2740 = vmatprep.subr.mxu0 0.0
  %2741 = vmatpush1.msra.mxu0 0.0
  %2742 = vmatprep.subr.mxu0 0.0
  %2743 = vmatpush1.msra.mxu0 0.0
  %2744 = vmatprep.subr.mxu0 0.0
  %2745 = vmatpush1.msra.mxu0 0.0
  %2746 = vmatprep.subr.mxu0 0.0
  %2747 = vmatpush1.msra.mxu0 0.0
  %2748 = vmatprep.subr.mxu0 0.0
  %2749 = vmatpush1.msra.mxu0 0.0
  %2750 = vmatprep.subr.mxu0 0.0
  %2751 = vmatpush1.msra.mxu0 0.0
  %2752 = vmatprep.subr.mxu0 0.0
  %2753 = vmatpush1.msra.mxu0 0.0
  %2754 = vmatprep.subr.mxu0 0.0
  %2755 = vmatpush1.msra.mxu0 0.0
  %2756 = vmatprep.subr.mxu0 0.0
  %2757 = vmatpush1.msra.mxu0 0.0
  %2758 = vmatprep.subr.mxu0 0.0
  %2759 = vmatpush1.msra.mxu0 0.0
  %2760 = vmatprep.subr.mxu0 0.0
  %2761 = vmatpush1.msra.mxu0 0.0
  %2762 = vmatprep.subr.mxu0 0.0
  %2763 = vmatpush1.msra.mxu0 0.0
  %2764 = vmatprep.subr.mxu0 0.0
  %2765 = vmatpush1.msra.mxu0 0.0
  %2766 = vmatprep.subr.mxu0 0.0
  %2767 = vmatpush1.msra.mxu0 0.0
  %2768 = vmatprep.subr.mxu0 0.0
  %2769 = vmatpush1.msra.mxu0 0.0
  %2770 = vmatprep.mubr.f32.mxu0 0.0
  %2771 = vmatmul.mubr.f32.gmra.mrb[0].mxu0 %v2558
  %v2772 = vpop.f32.mrb[0].mxu0
  %v2773 = vadd.f32 0.0, %v2772
  %v2774 = vpop.f32.mrb[0].mxu0
  %2775 = vdwg.mxu0
  %v2777 = vsel %vm32, %v2705, 0
  %2779 = vmatprep.subr.mxu0 0.0
  %2780 = vmatpush1.msra.mxu0 %v108
  %2781 = vmatprep.subr.mxu0 0.0
  %2782 = vmatpush1.msra.mxu0 %v109
  %2783 = vmatprep.subr.mxu0 0.0
  %2784 = vmatpush1.msra.mxu0 %v110
  %2785 = vmatprep.subr.mxu0 0.0
  %2786 = vmatpush1.msra.mxu0 %v111
  %2787 = vmatprep.subr.mxu0 0.0
  %2788 = vmatpush1.msra.mxu0 %v112
  %2789 = vmatprep.subr.mxu0 0.0
  %2790 = vmatpush1.msra.mxu0 %v113
  %2791 = vmatprep.subr.mxu0 0.0
  %2792 = vmatpush1.msra.mxu0 %v114
  %2793 = vmatprep.subr.mxu0 0.0
  %2794 = vmatpush1.msra.mxu0 %v115
  %2795 = vmatprep.subr.mxu0 0.0
  %2796 = vmatpush1.msra.mxu0 0.0
  %2797 = vmatprep.subr.mxu0 0.0
  %2798 = vmatpush1.msra.mxu0 0.0
  %2799 = vmatprep.subr.mxu0 0.0
  %2800 = vmatpush1.msra.mxu0 0.0
  %2801 = vmatprep.subr.mxu0 0.0
  %2802 = vmatpush1.msra.mxu0 0.0
  %2803 = vmatprep.subr.mxu0 0.0
  %2804 = vmatpush1.msra.mxu0 0.0
  %2805 = vmatprep.subr.mxu0 0.0
  %2806 = vmatpush1.msra.mxu0 0.0
  %2807 = vmatprep.subr.mxu0 0.0
  %2808 = vmatpush1.msra.mxu0 0.0
  %2809 = vmatprep.subr.mxu0 0.0
  %2810 = vmatpush1.msra.mxu0 0.0
  %2811 = vmatprep.subr.mxu0 0.0
  %2812 = vmatpush1.msra.mxu0 0.0
  %2813 = vmatprep.subr.mxu0 0.0
  %2814 = vmatpush1.msra.mxu0 0.0
  %2815 = vmatprep.subr.mxu0 0.0
  %2816 = vmatpush1.msra.mxu0 0.0
  %2817 = vmatprep.subr.mxu0 0.0
  %2818 = vmatpush1.msra.mxu0 0.0
  %2819 = vmatprep.subr.mxu0 0.0
  %2820 = vmatpush1.msra.mxu0 0.0
  %2821 = vmatprep.subr.mxu0 0.0
  %2822 = vmatpush1.msra.mxu0 0.0
  %2823 = vmatprep.subr.mxu0 0.0
  %2824 = vmatpush1.msra.mxu0 0.0
  %2825 = vmatprep.subr.mxu0 0.0
  %2826 = vmatpush1.msra.mxu0 0.0
  %2827 = vmatprep.subr.mxu0 0.0
  %2828 = vmatpush1.msra.mxu0 0.0
  %2829 = vmatprep.subr.mxu0 0.0
  %2830 = vmatpush1.msra.mxu0 0.0
  %2831 = vmatprep.subr.mxu0 0.0
  %2832 = vmatpush1.msra.mxu0 0.0
  %2833 = vmatprep.subr.mxu0 0.0
  %2834 = vmatpush1.msra.mxu0 0.0
  %2835 = vmatprep.subr.mxu0 0.0
  %2836 = vmatpush1.msra.mxu0 0.0
  %2837 = vmatprep.subr.mxu0 0.0
  %2838 = vmatpush1.msra.mxu0 0.0
  %2839 = vmatprep.subr.mxu0 0.0
  %2840 = vmatpush1.msra.mxu0 0.0
  %2841 = vmatprep.subr.mxu0 0.0
  %2842 = vmatpush1.msra.mxu0 0.0
  %2843 = vmatprep.mubr.f32.mxu0 0.0
  %2844 = vmatmul.mubr.f32.gmra.mrb[0].mxu0 %v2777
  %v2845 = vpop.f32.mrb[0].mxu0
  %v2846 = vadd.f32 %v2773, %v2845
  %v2847 = vpop.f32.mrb[0].mxu0
  %2848 = vdwg.mxu0
  %v2849 = vadd.f32 %v2846, %v18
  %v2850 = vtanh.pop %v2849
  %v2852 = vsel %vm32, %v2631, 0
  %2854 = vmatprep.subr.mxu0 0.0
  %2855 = vmatpush1.msra.mxu0 %v277
  %2856 = vmatprep.subr.mxu0 0.0
  %2857 = vmatpush1.msra.mxu0 %v278
  %2858 = vmatprep.subr.mxu0 0.0
  %2859 = vmatpush1.msra.mxu0 %v279
  %2860 = vmatprep.subr.mxu0 0.0
  %2861 = vmatpush1.msra.mxu0 %v280
  %2862 = vmatprep.subr.mxu0 0.0
  %2863 = vmatpush1.msra.mxu0 %v281
  %2864 = vmatprep.subr.mxu0 0.0
  %2865 = vmatpush1.msra.mxu0 %v282
  %2866 = vmatprep.subr.mxu0 0.0
  %2867 = vmatpush1.msra.mxu0 %v283
  %2868 = vmatprep.subr.mxu0 0.0
  %2869 = vmatpush1.msra.mxu0 %v284
  %2870 = vmatprep.subr.mxu0 0.0
  %2871 = vmatpush1.msra.mxu0 0.0
  %2872 = vmatprep.subr.mxu0 0.0
  %2873 = vmatpush1.msra.mxu0 0.0
  %2874 = vmatprep.subr.mxu0 0.0
  %2875 = vmatpush1.msra.mxu0 0.0
  %2876 = vmatprep.subr.mxu0 0.0
  %2877 = vmatpush1.msra.mxu0 0.0
  %2878 = vmatprep.subr.mxu0 0.0
  %2879 = vmatpush1.msra.mxu0 0.0
  %2880 = vmatprep.subr.mxu0 0.0
  %2881 = vmatpush1.msra.mxu0 0.0
  %2882 = vmatprep.subr.mxu0 0.0
  %2883 = vmatpush1.msra.mxu0 0.0
  %2884 = vmatprep.subr.mxu0 0.0
  %2885 = vmatpush1.msra.mxu0 0.0
  %2886 = vmatprep.subr.mxu0 0.0
  %2887 = vmatpush1.msra.mxu0 0.0
  %2888 = vmatprep.subr.mxu0 0.0
  %2889 = vmatpush1.msra.mxu0 0.0
  %2890 = vmatprep.subr.mxu0 0.0
  %2891 = vmatpush1.msra.mxu0 0.0
  %2892 = vmatprep.subr.mxu0 0.0
  %2893 = vmatpush1.msra.mxu0 0.0
  %2894 = vmatprep.subr.mxu0 0.0
  %2895 = vmatpush1.msra.mxu0 0.0
  %2896 = vmatprep.subr.mxu0 0.0
  %2897 = vmatpush1.msra.mxu0 0.0
  %2898 = vmatprep.subr.mxu0 0.0
  %2899 = vmatpush1.msra.mxu0 0.0
  %2900 = vmatprep.subr.mxu0 0.0
  %2901 = vmatpush1.msra.mxu0 0.0
  %2902 = vmatprep.subr.mxu0 0.0
  %2903 = vmatpush1.msra.mxu0 0.0
  %2904 = vmatprep.subr.mxu0 0.0
  %2905 = vmatpush1.msra.mxu0 0.0
  %2906 = vmatprep.subr.mxu0 0.0
  %2907 = vmatpush1.msra.mxu0 0.0
  %2908 = vmatprep.subr.mxu0 0.0
  %2909 = vmatpush1.msra.mxu0 0.0
  %2910 = vmatprep.subr.mxu0 0.0
  %2911 = vmatpush1.msra.mxu0 0.0
  %2912 = vmatprep.subr.mxu0 0.0
  %2913 = vmatpush1.msra.mxu0 0.0
  %2914 = vmatprep.subr.mxu0 0.0
  %2915 = vmatpush1.msra.mxu0 0.0
  %2916 = vmatprep.subr.mxu0 0.0
  %2917 = vmatpush1.msra.mxu0 0.0
  %2918 = vmatprep.mubr.f32.mxu0 0.0
  %2919 = vmatmul.mubr.f32.gmra.mrb[0].mxu0 %v2852
  %v2920 = vpop.f32.mrb[0].mxu0
  %v2921 = vadd.f32 0.0, %v2920
  %v2922 = vpop.f32.mrb[0].mxu0
  %2923 = vdwg.mxu0
  %v2925 = vsel %vm32, %v2850, 0
  %2927 = vmatprep.subr.mxu0 0.0
  %2928 = vmatpush1.msra.mxu0 %v269
  %2929 = vmatprep.subr.mxu0 0.0
  %2930 = vmatpush1.msra.mxu0 %v270
  %2931 = vmatprep.subr.mxu0 0.0
  %2932 = vmatpush1.msra.mxu0 %v271
  %2933 = vmatprep.subr.mxu0 0.0
  %2934 = vmatpush1.msra.mxu0 %v272
  %2935 = vmatprep.subr.mxu0 0.0
  %2936 = vmatpush1.msra.mxu0 %v273
  %2937 = vmatprep.subr.mxu0 0.0
  %2938 = vmatpush1.msra.mxu0 %v274
  %2939 = vmatprep.subr.mxu0 0.0
  %2940 = vmatpush1.msra.mxu0 %v275
  %2941 = vmatprep.subr.mxu0 0.0
  %2942 = vmatpush1.msra.mxu0 %v276
  %2943 = vmatprep.subr.mxu0 0.0
  %2944 = vmatpush1.msra.mxu0 0.0
  %2945 = vmatprep.subr.mxu0 0.0
  %2946 = vmatpush1.msra.mxu0 0.0
  %2947 = vmatprep.subr.mxu0 0.0
  %2948 = vmatpush1.msra.mxu0 0.0
  %2949 = vmatprep.subr.mxu0 0.0
  %2950 = vmatpush1.msra.mxu0 0.0
  %2951 = vmatprep.subr.mxu0 0.0
  %2952 = vmatpush1.msra.mxu0 0.0
  %2953 = vmatprep.subr.mxu0 0.0
  %2954 = vmatpush1.msra.mxu0 0.0
  %2955 = vmatprep.subr.mxu0 0.0
  %2956 = vmatpush1.msra.mxu0 0.0
  %2957 = vmatprep.subr.mxu0 0.0
  %2958 = vmatpush1.msra.mxu0 0.0
  %2959 = vmatprep.subr.mxu0 0.0
  %2960 = vmatpush1.msra.mxu0 0.0
  %2961 = vmatprep.subr.mxu0 0.0
  %2962 = vmatpush1.msra.mxu0 0.0
  %2963 = vmatprep.subr.mxu0 0.0
  %2964 = vmatpush1.msra.mxu0 0.0
  %2965 = vmatprep.subr.mxu0 0.0
  %2966 = vmatpush1.msra.mxu0 0.0
  %2967 = vmatprep.subr.mxu0 0.0
  %2968 = vmatpush1.msra.mxu0 0.0
  %2969 = vmatprep.subr.mxu0 0.0
  %2970 = vmatpush1.msra.mxu0 0.0
  %2971 = vmatprep.subr.mxu0 0.0
  %2972 = vmatpush1.msra.mxu0 0.0
  %2973 = vmatprep.subr.mxu0 0.0
  %2974 = vmatpush1.msra.mxu0 0.0
  %2975 = vmatprep.subr.mxu0 0.0
  %2976 = vmatpush1.msra.mxu0 0.0
  %2977 = vmatprep.subr.mxu0 0.0
  %2978 = vmatpush1.msra.mxu0 0.0
  %2979 = vmatprep.subr.mxu0 0.0
  %2980 = vmatpush1.msra.mxu0 0.0
  %2981 = vmatprep.subr.mxu0 0.0
  %2982 = vmatpush1.msra.mxu0 0.0
  %2983 = vmatprep.subr.mxu0 0.0
  %2984 = vmatpush1.msra.mxu0 0.0
  %2985 = vmatprep.subr.mxu0 0.0
  %2986 = vmatpush1.msra.mxu0 0.0
  %2987 = vmatprep.subr.mxu0 0.0
  %2988 = vmatpush1.msra.mxu0 0.0
  %2989 = vmatprep.subr.mxu0 0.0
  %2990 = vmatpush1.msra.mxu0 0.0
  %2991 = vmatprep.mubr.f32.mxu0 0.0
  %2992 = vmatmul.mubr.f32.gmra.mrb[0].mxu0 %v2925
  %v2993 = vpop.f32.mrb[0].mxu0
  %v2994 = vadd.f32 %v2921, %v2993
  %v2995 = vpop.f32.mrb[0].mxu0
  %2996 = vdwg.mxu0
  %v2997 = vadd.f32 %v2994, %v22
  %v2998 = vtanh.pop %v2997
  %v2999 = vld [vmem:[%s2 + $0x40] sm:$0xff]
  %v3000 = vld [vmem:[%s2] sm:$0xff]
  %v3001 = vld [vmem:[%s2 + $0x8] sm:$0xff]
  %v3002 = vld [vmem:[%s2 + $0x10] sm:$0xff]
  %v3003 = vld [vmem:[%s2 + $0x18] sm:$0xff]
  %v3004 = vld [vmem:[%s2 + $0x20] sm:$0xff]
  %v3005 = vld [vmem:[%s2 + $0x28] sm:$0xff]
  %v3006 = vld [vmem:[%s2 + $0x30] sm:$0xff]
  %v3007 = vld [vmem:[%s2 + $0x38] sm:$0xff]
  %v3008 = vlaneseq
  %v3009 = vshrl.u32 %v3008, 7
  %v3010 = vsub.s32 0, %v3009
  %v3011 = vrot.slane %v2999, %v3010
  %v3013 = vsel %vm32, %v2998, 0
  %3015 = vmatprep.subr.mxu0 0.0
  %3016 = vmatpush1.msra.mxu0 %v3000
  %3017 = vmatprep.subr.mxu0 0.0
  %3018 = vmatpush1.msra.mxu0 %v3001
  %3019 = vmatprep.subr.mxu0 0.0
  %3020 = vmatpush1.msra.mxu0 %v3002
  %3021 = vmatprep.subr.mxu0 0.0
  %3022 = vmatpush1.msra.mxu0 %v3003
  %3023 = vmatprep.subr.mxu0 0.0
  %3024 = vmatpush1.msra.mxu0 %v3004
  %3025 = vmatprep.subr.mxu0 0.0
  %3026 = vmatpush1.msra.mxu0 %v3005
  %3027 = vmatprep.subr.mxu0 0.0
  %3028 = vmatpush1.msra.mxu0 %v3006
  %3029 = vmatprep.subr.mxu0 0.0
  %3030 = vmatpush1.msra.mxu0 %v3007
  %3031 = vmatprep.subr.mxu0 0.0
  %3032 = vmatpush1.msra.mxu0 0.0
  %3033 = vmatprep.subr.mxu0 0.0
  %3034 = vmatpush1.msra.mxu0 0.0
  %3035 = vmatprep.subr.mxu0 0.0
  %3036 = vmatpush1.msra.mxu0 0.0
  %3037 = vmatprep.subr.mxu0 0.0
  %3038 = vmatpush1.msra.mxu0 0.0
  %3039 = vmatprep.subr.mxu0 0.0
  %3040 = vmatpush1.msra.mxu0 0.0
  %3041 = vmatprep.subr.mxu0 0.0
  %3042 = vmatpush1.msra.mxu0 0.0
  %3043 = vmatprep.subr.mxu0 0.0
  %3044 = vmatpush1.msra.mxu0 0.0
  %3045 = vmatprep.subr.mxu0 0.0
  %3046 = vmatpush1.msra.mxu0 0.0
  %3047 = vmatprep.subr.mxu0 0.0
  %3048 = vmatpush1.msra.mxu0 0.0
  %3049 = vmatprep.subr.mxu0 0.0
  %3050 = vmatpush1.msra.mxu0 0.0
  %3051 = vmatprep.subr.mxu0 0.0
  %3052 = vmatpush1.msra.mxu0 0.0
  %3053 = vmatprep.subr.mxu0 0.0
  %3054 = vmatpush1.msra.mxu0 0.0
  %3055 = vmatprep.subr.mxu0 0.0
  %3056 = vmatpush1.msra.mxu0 0.0
  %3057 = vmatprep.subr.mxu0 0.0
  %3058 = vmatpush1.msra.mxu0 0.0
  %3059 = vmatprep.subr.mxu0 0.0
  %3060 = vmatpush1.msra.mxu0 0.0
  %3061 = vmatprep.subr.mxu0 0.0
  %3062 = vmatpush1.msra.mxu0 0.0
  %3063 = vmatprep.subr.mxu0 0.0
  %3064 = vmatpush1.msra.mxu0 0.0
  %3065 = vmatprep.subr.mxu0 0.0
  %3066 = vmatpush1.msra.mxu0 0.0
  %3067 = vmatprep.subr.mxu0 0.0
  %3068 = vmatpush1.msra.mxu0 0.0
  %3069 = vmatprep.subr.mxu0 0.0
  %3070 = vmatpush1.msra.mxu0 0.0
  %3071 = vmatprep.subr.mxu0 0.0
  %3072 = vmatpush1.msra.mxu0 0.0
  %3073 = vmatprep.subr.mxu0 0.0
  %3074 = vmatpush1.msra.mxu0 0.0
  %3075 = vmatprep.subr.mxu0 0.0
  %3076 = vmatpush1.msra.mxu0 0.0
  %3077 = vmatprep.subr.mxu0 0.0
  %3078 = vmatpush1.msra.mxu0 0.0
  %3079 = vmatprep.mubr.f32.mxu0 0.0
  %3080 = vmatmul.mubr.f32.gmra.mrb[0].mxu0 %v3013
  %v3081 = vpop.f32.mrb[0].mxu0
  %v3082 = vadd.f32 %v3011, %v3081
  %v3083 = vpop.f32.mrb[0].mxu0
  %3084 = vdwg.mxu0
  %v3085 = vmax.f32 %v3082, 0.0
  %v3086 = vlaneseq
  %v3087 = vshrl.u32 %v3086, 7
  %v3088 = vsub.s32 1, %v3087
  %v3089 = vrot.slane %v2999, %v3088
  %v3090 = vmul.f32 %v3085, %v3089
  %vm3091 = vcmask 257024
  %v3092 = vsel %vm3091, %v3090, 0.0
  %3093 = vadd.xlane.f32.xlu0 %v3092
  %v3094 = vpop.xlane.xlu0 %3093
  %vm3095 = vcmask 256002
  %v3096 = vsel %vm3095, %v2999, 0.0
  %3097 = vadd.xlane.f32.xlu0 %v3096
  %v3098 = vpop.xlane.xlu0 %3097
  %v3099 = vlaneseq
  %v3100 = vshrl.u32 %v3099, 7
  %v3101 = vsub.s32 2, %v3100
  %v3102 = vrot.slane %v3098, %v3101
  %v3103 = vadd.f32 %v3094, %v3102
  %vm3104 = vcmask 3072
  %3105 = vst.msk [vmem:[%s3] sm:$0xf] %vm3104, %v3103
  // Predicated region
  $region14: #{rnn_forward.1} parent=0 // pred_check
    _
  $region15: #{rnn_forward.1} parent=0 // pred_check_branch
    %3107 = sbr.rel (0) target = $region17
  $region16: #{rnn_forward.1} parent=0 // pred_region
    _
  $region17: #{rnn_forward.1} parent=0 // pred_fallthru
    _
  // Predicated region
  $region18: #{rnn_forward.1} parent=0 // pred_check
    _
  $region19: #{rnn_forward.1} parent=0 // pred_check_branch
    %3109 = sbr.rel (0) target = $region21
  $region20: #{rnn_forward.1} parent=0 // pred_region
    _
  $region21: #{rnn_forward.1} parent=0 // pred_fallthru
    _

</llo_original>
